<compile_context>
chip_gen: v7x
topology: tpu7x:2x2x1
jax: 0.10.0
libtpu: 0.0.40
codegen_flags: <defaults>
</compile_context>

<pallas_src>
import numpy as np
import jax
import jax.numpy as jnp
from jax.experimental import pallas as pl
from jax.experimental.pallas import tpu as pltpu

# ----------------------------- problem sizes --------------------------------
N_BATCH = 2
N_IN    = 60                      # must be > 58 (conv out channels = nIn - 58)
K_CONV  = N_IN - 29 * 2           # = 2
N_OUT   = N_IN + K_CONV           # = 62 (what BNPReLU(nOut) expects)
H_IN = W_IN = 16
H_OUT = W_OUT = 32
P_IN  = H_IN * W_IN               # 256
P_OUT = H_OUT * W_OUT             # 1024
EPS   = 1e-3


# ----------------------- bilinear interpolation matrix ----------------------
def bilinear_matrix(out_size: int, in_size: int) -> np.ndarray:
    """1-D bilinear resize matrix, PyTorch align_corners=False semantics."""
    w = np.zeros((out_size, in_size), dtype=np.float32)
    scale = in_size / out_size
    for d in range(out_size):
        src = scale * (d + 0.5) - 0.5
        src = max(src, 0.0)                       # PyTorch clamps negative src to 0
        i0 = min(int(np.floor(src)), in_size - 1)
        i1 = min(i0 + 1, in_size - 1)
        lam = src - i0
        w[d, i0] += 1.0 - lam
        w[d, i1] += lam
    return w


# Module-level constant: transposed separable bilinear matrix (Pin, Pout).
# Weights are multiples of 0.25 -> exact in bf16.
_WY = bilinear_matrix(H_OUT, H_IN)
_WX = bilinear_matrix(W_OUT, W_IN)
_WSPT_NP = np.ascontiguousarray(np.kron(_WY, _WX).T.astype(np.float32))  # (P_IN, P_OUT)


# ------------------------------- Pallas kernel -------------------------------
def _block1_kernel(x_ref, wcat_ref, bcat_ref, wspt_ref,
                   gamma_ref, beta_ref, alpha_ref, o_ref):
    """resize + 1x1 conv + concat (fused channel mix) + BN(batch stats) + PReLU.

    x_ref     : (N, nIn, Pin)    f32   flattened NCHW input
    wcat_ref  : (nOut, nIn)      f32   [I_nIn ; conv_w]  fused channel-mix weight
    bcat_ref  : (nOut, 1)        f32   [0 ; conv_bias]
    wspt_ref  : (Pin, Pout)      bf16  separable bilinear matrix, transposed
    gamma/beta/alpha_ref : (nOut, 1) f32
    o_ref     : (N, nOut, Pout)  f32   output (also stages pre-BN activations)
    """
    wcat = wcat_ref[...]                                   # (nOut, nIn)
    bcat = bcat_ref[...]                                   # (nOut, 1)
    wspt = wspt_ref[...]                                   # (Pin, Pout) bf16

    n_batch = x_ref.shape[0]
    p_out   = o_ref.shape[2]

    # Per-sample: fused channel mix (tiny matmul) then lane-dense resize matmul.
    # (conv and resize are both linear and commute; bias is added after.)
    for n in range(n_batch):                               # static unroll (N small)
        xc = jnp.dot(wcat, x_ref[n],                       # (nOut, Pin) f32
                     preferred_element_type=jnp.float32)
        cat_n = jnp.dot(xc.astype(jnp.bfloat16), wspt,     # (nOut, Pout) f32 acc
                        preferred_element_type=jnp.float32) + bcat
        o_ref[n] = cat_n                                   # aligned full-block store

    # BatchNorm (training mode): batch statistics over (N, H, W) per channel,
    # single pass via sum / sum-of-squares.  Channels live on sublanes.
    cat = o_ref[...]                                       # (N, nOut, Pout)
    inv_cnt = 1.0 / (n_batch * p_out)
    s  = jnp.sum(jnp.sum(cat, axis=2, keepdims=True), axis=0, keepdims=True)
    sq = jnp.sum(jnp.sum(cat * cat, axis=2, keepdims=True), axis=0, keepdims=True)
    mean = s * inv_cnt                                     # (1, nOut, 1)
    var  = sq * inv_cnt - mean * mean                      # biased variance

    scale = gamma_ref[...] * jax.lax.rsqrt(var + EPS)      # (1, nOut, 1)
    shift = beta_ref[...] - mean * scale                   # (1, nOut, 1)
    y = cat * scale + shift

    # PReLU (per-channel slope).
    o_ref[...] = jnp.where(y >= 0.0, y, alpha_ref[...] * y)


# ------------------------------- host wrapper --------------------------------
@jax.jit
def downsampling_block1(x_nchw, conv_w, conv_b, gamma, beta, alpha):
    """x_nchw: (N, nIn, Hin, Win) f32.  Returns (N, nOut, 32, 32) f32 (NCHW)."""
    n, c, h, w = x_nchw.shape
    assert (c, h, w) == (N_IN, H_IN, W_IN)

    # Free reshape: NCHW -> (N, C, Hin*Win).  No transpose needed in this layout.
    x_flat = x_nchw.reshape(n, N_IN, P_IN)

    wspt = jnp.asarray(_WSPT_NP, dtype=jnp.bfloat16)                     # (Pin, Pout)
    wcat = jnp.concatenate([jnp.eye(N_IN, dtype=jnp.float32), conv_w], axis=0)   # (nOut, nIn)
    bcat = jnp.concatenate([jnp.zeros((N_IN,), jnp.float32), conv_b]).reshape(N_OUT, 1)
    gamma2 = gamma.reshape(N_OUT, 1)
    beta2  = beta.reshape(N_OUT, 1)
    alpha2 = alpha.reshape(N_OUT, 1)

    out = pl.pallas_call(
        _block1_kernel,
        out_shape=jax.ShapeDtypeStruct((n, N_OUT, P_OUT), jnp.float32),
        grid=(1,),
        in_specs=[
            pl.BlockSpec((n, N_IN, P_IN), lambda i: (0, 0, 0)),
            pl.BlockSpec((N_OUT, N_IN),   lambda i: (0, 0)),
            pl.BlockSpec((N_OUT, 1),      lambda i: (0, 0)),
            pl.BlockSpec((P_IN, P_OUT),   lambda i: (0, 0)),
            pl.BlockSpec((N_OUT, 1),      lambda i: (0, 0)),
            pl.BlockSpec((N_OUT, 1),      lambda i: (0, 0)),
            pl.BlockSpec((N_OUT, 1),      lambda i: (0, 0)),
        ],
        out_specs=pl.BlockSpec((n, N_OUT, P_OUT), lambda i: (0, 0, 0)),
        compiler_params=pltpu.CompilerParams(
            dimension_semantics=("arbitrary",)),
    )(x_flat, wcat, bcat, wspt, gamma2, beta2, alpha2)

    # Free reshape back to NCHW.
    return out.reshape(n, N_OUT, H_OUT, W_OUT)


# --------------------------- pure-JAX reference ------------------------------
def ref_forward(x_nchw, conv_w, conv_b, gamma, beta, alpha):
    """Follows the original op order (resize -> conv -> cat -> BN -> PReLU) in f32."""
    n = x_nchw.shape[0]
    xf = x_nchw.reshape(n, N_IN, P_IN)
    wsp = jnp.asarray(_WSPT_NP.T)                          # (Pout, Pin) f32
    hi = jax.lax.Precision.HIGHEST
    o0 = jnp.einsum('ncq,pq->ncp', xf, wsp, precision=hi)                  # (n, nIn, Pout)
    o1 = jnp.einsum('kc,ncp->nkp', conv_w, o0, precision=hi) \
        + conv_b.reshape(1, K_CONV, 1)                                     # (n, K, Pout)
    cat = jnp.concatenate([o0, o1], axis=1)                                # (n, nOut, Pout)
    mean = cat.mean(axis=(0, 2), keepdims=True)
    var = ((cat - mean) ** 2).mean(axis=(0, 2), keepdims=True)             # biased
    y = (cat - mean) * jax.lax.rsqrt(var + EPS) * gamma.reshape(1, -1, 1) \
        + beta.reshape(1, -1, 1)
    y = jnp.where(y >= 0.0, y, alpha.reshape(1, -1, 1) * y)
    return y.reshape(n, N_OUT, H_OUT, W_OUT)


# ------------------------------------ main ------------------------------------
if __name__ == "__main__":
    key = jax.random.PRNGKey(0)
    k1, k2, k3, k4, k5 = jax.random.split(key, 5)

    # Deterministic synthetic parameters (shapes from the module's __init__).
    x      = jax.random.normal(k1, (N_BATCH, N_IN, H_IN, W_IN), jnp.float32)
    conv_w = 0.1 * jax.random.normal(k2, (K_CONV, N_IN), jnp.float32)   # Conv2d weight (out,in,1,1) squeezed
    conv_b = 0.1 * jax.random.normal(k3, (K_CONV,), jnp.float32)
    gamma  = 1.0 + 0.1 * jax.random.normal(k4, (N_OUT,), jnp.float32)   # BN weight
    beta   = 0.1 * jax.random.normal(k5, (N_OUT,), jnp.float32)         # BN bias
    alpha  = jnp.full((N_OUT,), 0.25, jnp.float32)                      # PReLU default init
    # TODO(synk): BatchNorm running_mean/var buffer updates (training-mode side effect)
    # are not materialized; only the forward output is reproduced.

    out = jax.block_until_ready(
        downsampling_block1(x, conv_w, conv_b, gamma, beta, alpha))
    assert out.shape == (N_BATCH, N_OUT, H_OUT, W_OUT), out.shape

    ref = jax.block_until_ready(ref_forward(x, conv_w, conv_b, gamma, beta, alpha))
    np.testing.assert_allclose(np.asarray(out), np.asarray(ref), rtol=1e-2, atol=1e-2)

    print("KERNEL_OK")
</pallas_src>

<mosaic_0001>
module attributes {stable_mosaic.version = 11 : i64} {
  func.func @_block1_kernel(%arg0: i32, %arg1: memref<2x60x256xf32, #tpu.memory_space<vmem>>, %arg2: memref<62x60xf32, #tpu.memory_space<vmem>>, %arg3: memref<62x1xf32, #tpu.memory_space<vmem>>, %arg4: memref<256x1024xbf16, #tpu.memory_space<vmem>>, %arg5: memref<62x1xf32, #tpu.memory_space<vmem>>, %arg6: memref<62x1xf32, #tpu.memory_space<vmem>>, %arg7: memref<62x1xf32, #tpu.memory_space<vmem>>, %arg8: memref<2x62x1024xf32, #tpu.memory_space<vmem>>) attributes {dimension_semantics = [#tpu.dimension_semantics<arbitrary>], iteration_bounds = array<i64: 1>, scalar_prefetch = 0 : i64, scratch_operands = 0 : i64, tpu.core_type = #tpu.core_type<tc>, window_params = [{pipeline_mode = #tpu.pipeline_mode<synchronous>, transform_indices = @transform_0, window_bounds = array<i64: 2, 60, 256>}, {pipeline_mode = #tpu.pipeline_mode<synchronous>, transform_indices = @transform_1, window_bounds = array<i64: 62, 60>}, {pipeline_mode = #tpu.pipeline_mode<synchronous>, transform_indices = @transform_2, window_bounds = array<i64: 62, 1>}, {pipeline_mode = #tpu.pipeline_mode<synchronous>, transform_indices = @transform_3, window_bounds = array<i64: 256, 1024>}, {pipeline_mode = #tpu.pipeline_mode<synchronous>, transform_indices = @transform_4, window_bounds = array<i64: 62, 1>}, {pipeline_mode = #tpu.pipeline_mode<synchronous>, transform_indices = @transform_5, window_bounds = array<i64: 62, 1>}, {pipeline_mode = #tpu.pipeline_mode<synchronous>, transform_indices = @transform_6, window_bounds = array<i64: 62, 1>}, {pipeline_mode = #tpu.pipeline_mode<synchronous>, transform_indices = @transform_7, window_bounds = array<i64: 2, 62, 1024>}]} {
    %c0 = arith.constant 0 : index
    %c0_0 = arith.constant 0 : index
    %0 = vector.load %arg2[%c0, %c0_0] : memref<62x60xf32, #tpu.memory_space<vmem>>, vector<62x60xf32>
    %c0_1 = arith.constant 0 : index
    %c0_2 = arith.constant 0 : index
    %1 = vector.load %arg3[%c0_1, %c0_2] : memref<62x1xf32, #tpu.memory_space<vmem>>, vector<62x1xf32>
    %c0_3 = arith.constant 0 : index
    %c0_4 = arith.constant 0 : index
    %2 = vector.load %arg4[%c0_3, %c0_4] : memref<256x1024xbf16, #tpu.memory_space<vmem>>, vector<256x1024xbf16>
    %c0_5 = arith.constant 0 : index
    %c0_6 = arith.constant 0 : index
    %c0_7 = arith.constant 0 : index
    %3 = vector.load %arg1[%c0_5, %c0_6, %c0_7] : memref<2x60x256xf32, #tpu.memory_space<vmem>>, vector<1x60x256xf32>
    %4 = vector.shape_cast %3 : vector<1x60x256xf32> to vector<60x256xf32>
    %cst = arith.constant dense<0.000000e+00> : vector<62x256xf32>
    %5 = tpu.matmul %0, %4, %cst {dimension_numbers = #tpu.dot_dimension_numbers<[1], [0], [0], [1], [0, 0, 1, 1], [], []>} : vector<62x60xf32>, vector<60x256xf32>, vector<62x256xf32> -> vector<62x256xf32>
    %6 = arith.truncf %5 : vector<62x256xf32> to vector<62x256xbf16>
    %cst_8 = arith.constant dense<0.000000e+00> : vector<62x1024xf32>
    %7 = tpu.matmul %6, %2, %cst_8 {dimension_numbers = #tpu.dot_dimension_numbers<[1], [0], [0], [1], [0, 0, 1, 1], [], []>} : vector<62x256xbf16>, vector<256x1024xbf16>, vector<62x1024xf32> -> vector<62x1024xf32>
    %8 = vector.broadcast %1 : vector<62x1xf32> to vector<62x1024xf32>
    %9 = arith.addf %7, %8 : vector<62x1024xf32>
    %c0_9 = arith.constant 0 : index
    %c0_10 = arith.constant 0 : index
    %c0_11 = arith.constant 0 : index
    %10 = vector.load %arg8[%c0_9, %c0_10, %c0_11] : memref<2x62x1024xf32, #tpu.memory_space<vmem>>, vector<1x62x1024xf32>
    %11 = vector.shape_cast %10 : vector<1x62x1024xf32> to vector<62x1024xf32>
    %12 = vector.shape_cast %9 : vector<62x1024xf32> to vector<1x62x1024xf32>
    tpu.vector_store %arg8[%c0_9, %c0_10, %c0_11], %12 {strides = array<i32>} : memref<2x62x1024xf32, #tpu.memory_space<vmem>>, vector<1x62x1024xf32>,
    %c1 = arith.constant 1 : index
    %c0_12 = arith.constant 0 : index
    %c0_13 = arith.constant 0 : index
    %13 = vector.load %arg1[%c1, %c0_12, %c0_13] : memref<2x60x256xf32, #tpu.memory_space<vmem>>, vector<1x60x256xf32>
    %14 = vector.shape_cast %13 : vector<1x60x256xf32> to vector<60x256xf32>
    %cst_14 = arith.constant dense<0.000000e+00> : vector<62x256xf32>
    %15 = tpu.matmul %0, %14, %cst_14 {dimension_numbers = #tpu.dot_dimension_numbers<[1], [0], [0], [1], [0, 0, 1, 1], [], []>} : vector<62x60xf32>, vector<60x256xf32>, vector<62x256xf32> -> vector<62x256xf32>
    %16 = arith.truncf %15 : vector<62x256xf32> to vector<62x256xbf16>
    %cst_15 = arith.constant dense<0.000000e+00> : vector<62x1024xf32>
    %17 = tpu.matmul %16, %2, %cst_15 {dimension_numbers = #tpu.dot_dimension_numbers<[1], [0], [0], [1], [0, 0, 1, 1], [], []>} : vector<62x256xbf16>, vector<256x1024xbf16>, vector<62x1024xf32> -> vector<62x1024xf32>
    %18 = vector.broadcast %1 : vector<62x1xf32> to vector<62x1024xf32>
    %19 = arith.addf %17, %18 : vector<62x1024xf32>
    %c1_16 = arith.constant 1 : index
    %c0_17 = arith.constant 0 : index
    %c0_18 = arith.constant 0 : index
    %20 = vector.load %arg8[%c1_16, %c0_17, %c0_18] : memref<2x62x1024xf32, #tpu.memory_space<vmem>>, vector<1x62x1024xf32>
    %21 = vector.shape_cast %20 : vector<1x62x1024xf32> to vector<62x1024xf32>
    %22 = vector.shape_cast %19 : vector<62x1024xf32> to vector<1x62x1024xf32>
    tpu.vector_store %arg8[%c1_16, %c0_17, %c0_18], %22 {strides = array<i32>} : memref<2x62x1024xf32, #tpu.memory_space<vmem>>, vector<1x62x1024xf32>,
    %c0_19 = arith.constant 0 : index
    %c0_20 = arith.constant 0 : index
    %c0_21 = arith.constant 0 : index
    %23 = vector.load %arg8[%c0_19, %c0_20, %c0_21] : memref<2x62x1024xf32, #tpu.memory_space<vmem>>, vector<2x62x1024xf32>
    %cst_22 = arith.constant dense<0.000000e+00> : vector<2x62xf32>
    %24 = vector.multi_reduction <add>, %23, %cst_22 [2] : vector<2x62x1024xf32> to vector<2x62xf32>
    %25 = vector.shape_cast %24 : vector<2x62xf32> to vector<2x62x1xf32>
    %cst_23 = arith.constant dense<0.000000e+00> : vector<62x1xf32>
    %26 = vector.multi_reduction <add>, %25, %cst_23 [0] : vector<2x62x1xf32> to vector<62x1xf32>
    %27 = vector.shape_cast %26 : vector<62x1xf32> to vector<1x62x1xf32>
    %28 = arith.mulf %23, %23 : vector<2x62x1024xf32>
    %cst_24 = arith.constant dense<0.000000e+00> : vector<2x62xf32>
    %29 = vector.multi_reduction <add>, %28, %cst_24 [2] : vector<2x62x1024xf32> to vector<2x62xf32>
    %30 = vector.shape_cast %29 : vector<2x62xf32> to vector<2x62x1xf32>
    %cst_25 = arith.constant dense<0.000000e+00> : vector<62x1xf32>
    %31 = vector.multi_reduction <add>, %30, %cst_25 [0] : vector<2x62x1xf32> to vector<62x1xf32>
    %32 = vector.shape_cast %31 : vector<62x1xf32> to vector<1x62x1xf32>
    %cst_26 = arith.constant 4.8828125E-4 : f32
    %33 = vector.broadcast %cst_26 : f32 to vector<1x62x1xf32>
    %34 = arith.mulf %27, %33 : vector<1x62x1xf32>
    %cst_27 = arith.constant 4.8828125E-4 : f32
    %35 = vector.broadcast %cst_27 : f32 to vector<1x62x1xf32>
    %36 = arith.mulf %32, %35 : vector<1x62x1xf32>
    %37 = arith.mulf %34, %34 : vector<1x62x1xf32>
    %38 = arith.subf %36, %37 : vector<1x62x1xf32>
    %c0_28 = arith.constant 0 : index
    %c0_29 = arith.constant 0 : index
    %39 = vector.load %arg5[%c0_28, %c0_29] : memref<62x1xf32, #tpu.memory_space<vmem>>, vector<62x1xf32>
    %cst_30 = arith.constant 1.000000e-03 : f32
    %40 = vector.broadcast %cst_30 : f32 to vector<1x62x1xf32>
    %41 = arith.addf %38, %40 : vector<1x62x1xf32>
    %42 = math.rsqrt %41 : vector<1x62x1xf32>
    %43 = vector.shape_cast %39 : vector<62x1xf32> to vector<1x62x1xf32>
    %44 = arith.mulf %43, %42 : vector<1x62x1xf32>
    %c0_31 = arith.constant 0 : index
    %c0_32 = arith.constant 0 : index
    %45 = vector.load %arg6[%c0_31, %c0_32] : memref<62x1xf32, #tpu.memory_space<vmem>>, vector<62x1xf32>
    %46 = arith.mulf %34, %44 : vector<1x62x1xf32>
    %47 = vector.shape_cast %45 : vector<62x1xf32> to vector<1x62x1xf32>
    %48 = arith.subf %47, %46 : vector<1x62x1xf32>
    %49 = vector.broadcast %44 : vector<1x62x1xf32> to vector<2x62x1024xf32>
    %50 = arith.mulf %23, %49 : vector<2x62x1024xf32>
    %51 = vector.broadcast %48 : vector<1x62x1xf32> to vector<2x62x1024xf32>
    %52 = arith.addf %50, %51 : vector<2x62x1024xf32>
    %cst_33 = arith.constant 0.000000e+00 : f32
    %53 = vector.broadcast %cst_33 : f32 to vector<2x62x1024xf32>
    %54 = arith.cmpf oge, %52, %53 : vector<2x62x1024xf32>
    %c0_34 = arith.constant 0 : index
    %c0_35 = arith.constant 0 : index
    %55 = vector.load %arg7[%c0_34, %c0_35] : memref<62x1xf32, #tpu.memory_space<vmem>>, vector<62x1xf32>
    %56 = vector.shape_cast %55 : vector<62x1xf32> to vector<1x62x1xf32>
    %57 = vector.broadcast %56 : vector<1x62x1xf32> to vector<2x62x1024xf32>
    %58 = arith.mulf %57, %52 : vector<2x62x1024xf32>
    %59 = arith.select %54, %52, %58 : vector<2x62x1024xi1>, vector<2x62x1024xf32>
    %c0_36 = arith.constant 0 : index
    %c0_37 = arith.constant 0 : index
    %c0_38 = arith.constant 0 : index
    %60 = vector.load %arg8[%c0_36, %c0_37, %c0_38] : memref<2x62x1024xf32, #tpu.memory_space<vmem>>, vector<2x62x1024xf32>
    tpu.vector_store %arg8[%c0_36, %c0_37, %c0_38], %59 {strides = array<i32>} : memref<2x62x1024xf32, #tpu.memory_space<vmem>>, vector<2x62x1024xf32>,
    return
  }
  func.func @transform_0(%arg0: i32) -> (i32, i32, i32) {
    %c0_i32 = arith.constant 0 : i32
    %c0_i32_0 = arith.constant 0 : i32
    %c0_i32_1 = arith.constant 0 : i32
    %c0_i32_2 = arith.constant 0 : i32
    return %c0_i32, %c0_i32_0, %c0_i32_1 : i32, i32, i32
  }
  func.func @transform_1(%arg0: i32) -> (i32, i32) {
    %c0_i32 = arith.constant 0 : i32
    %c0_i32_0 = arith.constant 0 : i32
    %c0_i32_1 = arith.constant 0 : i32
    return %c0_i32, %c0_i32_0 : i32, i32
  }
  func.func @transform_2(%arg0: i32) -> (i32, i32) {
    %c0_i32 = arith.constant 0 : i32
    %c0_i32_0 = arith.constant 0 : i32
    %c0_i32_1 = arith.constant 0 : i32
    return %c0_i32, %c0_i32_0 : i32, i32
  }
  func.func @transform_3(%arg0: i32) -> (i32, i32) {
    %c0_i32 = arith.constant 0 : i32
    %c0_i32_0 = arith.constant 0 : i32
    %c0_i32_1 = arith.constant 0 : i32
    return %c0_i32, %c0_i32_0 : i32, i32
  }
  func.func @transform_4(%arg0: i32) -> (i32, i32) {
    %c0_i32 = arith.constant 0 : i32
    %c0_i32_0 = arith.constant 0 : i32
    %c0_i32_1 = arith.constant 0 : i32
    return %c0_i32, %c0_i32_0 : i32, i32
  }
  func.func @transform_5(%arg0: i32) -> (i32, i32) {
    %c0_i32 = arith.constant 0 : i32
    %c0_i32_0 = arith.constant 0 : i32
    %c0_i32_1 = arith.constant 0 : i32
    return %c0_i32, %c0_i32_0 : i32, i32
  }
  func.func @transform_6(%arg0: i32) -> (i32, i32) {
    %c0_i32 = arith.constant 0 : i32
    %c0_i32_0 = arith.constant 0 : i32
    %c0_i32_1 = arith.constant 0 : i32
    return %c0_i32, %c0_i32_0 : i32, i32
  }
  func.func @transform_7(%arg0: i32) -> (i32, i32, i32) {
    %c0_i32 = arith.constant 0 : i32
    %c0_i32_0 = arith.constant 0 : i32
    %c0_i32_1 = arith.constant 0 : i32
    %c0_i32_2 = arith.constant 0 : i32
    return %c0_i32, %c0_i32_0, %c0_i32_1 : i32, i32, i32
  }
}

</mosaic_0001>

<llo_original>
// kernel: downsampling_block1.1
$region0: #{downsampling_block1.1}
  #allocation0 [shape = 'u32[]', space=smem, size = 0x4, offset = 0x4, fixed_abs, tag = 'smem constant byte address 0x4 - core index']
  #allocation1 [shape = 'u32[144,128]{1,0:T(1,128)}', space=vmem, size = 0x12000, scoped, tag = 'internal scratch']
  %s0 = inlined_call_operand.vmem [shape: f32[2,60,256], index: 0, kind: input, shape index: {}]
  %s1 = inlined_call_operand.vmem [shape: f32[62,60], index: 1, kind: input, shape index: {}]
  %s2 = inlined_call_operand.vmem [shape: f32[62,1], index: 2, kind: input, shape index: {}]
  %s3 = inlined_call_operand.vmem [shape: bf16[256,1024], index: 3, kind: input, shape index: {}]
  %s4 = inlined_call_operand.vmem [shape: f32[62,1], index: 4, kind: input, shape index: {}]
  %s5 = inlined_call_operand.vmem [shape: f32[62,1], index: 5, kind: input, shape index: {}]
  %s6 = inlined_call_operand.vmem [shape: f32[62,1], index: 6, kind: input, shape index: {}]
  %s7 = inlined_call_operand.vmem [shape: f32[2,62,1024], index: 7, kind: output, shape index: {}]
  %s8 = sld [smem:[#allocation0]]
  $region38: #{downsampling_block1.1} parent=0
    _
  %s10 = ssub.s32 1, %s8
  %s11 = scalar_select 0, %s10, %s8
  // Predicated region
  $region2: #{downsampling_block1.1} parent=0 // pred_check
    _
  $region3: #{downsampling_block1.1} parent=0 // pred_check_branch
    %13 = sbr.rel (0) target = $region5
  $region4: #{downsampling_block1.1} parent=0 // pred_region
    _
  $region5: #{downsampling_block1.1} parent=0 // pred_fallthru
    _
  // Predicated region
  $region6: #{downsampling_block1.1} parent=0 // pred_check
    _
  $region7: #{downsampling_block1.1} parent=0 // pred_check_branch
    %15 = sbr.rel (0) target = $region9
  $region8: #{downsampling_block1.1} parent=0 // pred_region
    _
  $region9: #{downsampling_block1.1} parent=0 // pred_fallthru
    _
  // Predicated region
  $region10: #{downsampling_block1.1} parent=0 // pred_check
    _
  $region11: #{downsampling_block1.1} parent=0 // pred_check_branch
    %17 = sbr.rel (0) target = $region13
  $region12: #{downsampling_block1.1} parent=0 // pred_region
    _
  $region13: #{downsampling_block1.1} parent=0 // pred_fallthru
    _
  // Predicated region
  $region14: #{downsampling_block1.1} parent=0 // pred_check
    _
  $region15: #{downsampling_block1.1} parent=0 // pred_check_branch
    %19 = sbr.rel (0) target = $region17
  $region16: #{downsampling_block1.1} parent=0 // pred_region
    _
  $region17: #{downsampling_block1.1} parent=0 // pred_fallthru
    _
  // Predicated region
  $region18: #{downsampling_block1.1} parent=0 // pred_check
    _
  $region19: #{downsampling_block1.1} parent=0 // pred_check_branch
    %21 = sbr.rel (0) target = $region21
  $region20: #{downsampling_block1.1} parent=0 // pred_region
    _
  $region21: #{downsampling_block1.1} parent=0 // pred_fallthru
    _
  // Predicated region
  $region22: #{downsampling_block1.1} parent=0 // pred_check
    _
  $region23: #{downsampling_block1.1} parent=0 // pred_check_branch
    %23 = sbr.rel (0) target = $region25
  $region24: #{downsampling_block1.1} parent=0 // pred_region
    _
  $region25: #{downsampling_block1.1} parent=0 // pred_fallthru
    _
  // Predicated region
  $region26: #{downsampling_block1.1} parent=0 // pred_check
    _
  $region27: #{downsampling_block1.1} parent=0 // pred_check_branch
    %25 = sbr.rel (0) target = $region29
  $region28: #{downsampling_block1.1} parent=0 // pred_region
    _
  $region29: #{downsampling_block1.1} parent=0 // pred_fallthru
    _
  %v26 = vld [vmem:[%s1] sm:$0xff]
  %v27 = vld [vmem:[%s1 + $0x8] sm:$0xff]
  %v28 = vld [vmem:[%s1 + $0x10] sm:$0xff]
  %v29 = vld [vmem:[%s1 + $0x18] sm:$0xff]
  %v30 = vld [vmem:[%s1 + $0x20] sm:$0xff]
  %v31 = vld [vmem:[%s1 + $0x28] sm:$0xff]
  %v32 = vld [vmem:[%s1 + $0x30] sm:$0xff]
  %v33 = vld [vmem:[%s1 + $0x38] sm:$0x3f]
  %v34 = vld [vmem:[%s2] sm:$0xff]
  %v35 = vld [vmem:[%s2 + $0x8] sm:$0xff]
  %v36 = vld [vmem:[%s2 + $0x10] sm:$0xff]
  %v37 = vld [vmem:[%s2 + $0x18] sm:$0xff]
  %v38 = vld [vmem:[%s2 + $0x20] sm:$0xff]
  %v39 = vld [vmem:[%s2 + $0x28] sm:$0xff]
  %v40 = vld [vmem:[%s2 + $0x30] sm:$0xff]
  %v41 = vld [vmem:[%s2 + $0x38] sm:$0x3f]
  %v42 = vld [vmem:[%s3] sm:$0xff]
  %v43 = vld [vmem:[%s3 + $0x8] sm:$0xff]
  %v44 = vld [vmem:[%s3 + $0x10] sm:$0xff]
  %v45 = vld [vmem:[%s3 + $0x18] sm:$0xff]
  %v46 = vld [vmem:[%s3 + $0x20] sm:$0xff]
  %v47 = vld [vmem:[%s3 + $0x28] sm:$0xff]
  %v48 = vld [vmem:[%s3 + $0x30] sm:$0xff]
  %v49 = vld [vmem:[%s3 + $0x38] sm:$0xff]
  %v50 = vld [vmem:[%s3 + $0x40] sm:$0xff]
  %v51 = vld [vmem:[%s3 + $0x48] sm:$0xff]
  %v52 = vld [vmem:[%s3 + $0x50] sm:$0xff]
  %v53 = vld [vmem:[%s3 + $0x58] sm:$0xff]
  %v54 = vld [vmem:[%s3 + $0x60] sm:$0xff]
  %v55 = vld [vmem:[%s3 + $0x68] sm:$0xff]
  %v56 = vld [vmem:[%s3 + $0x70] sm:$0xff]
  %v57 = vld [vmem:[%s3 + $0x78] sm:$0xff]
  %v58 = vld [vmem:[%s3 + $0x80] sm:$0xff]
  %v59 = vld [vmem:[%s3 + $0x88] sm:$0xff]
  %v60 = vld [vmem:[%s3 + $0x90] sm:$0xff]
  %v61 = vld [vmem:[%s3 + $0x98] sm:$0xff]
  %v62 = vld [vmem:[%s3 + $0xa0] sm:$0xff]
  %v63 = vld [vmem:[%s3 + $0xa8] sm:$0xff]
  %v64 = vld [vmem:[%s3 + $0xb0] sm:$0xff]
  %v65 = vld [vmem:[%s3 + $0xb8] sm:$0xff]
  %v66 = vld [vmem:[%s3 + $0xc0] sm:$0xff]
  %v67 = vld [vmem:[%s3 + $0xc8] sm:$0xff]
  %v68 = vld [vmem:[%s3 + $0xd0] sm:$0xff]
  %v69 = vld [vmem:[%s3 + $0xd8] sm:$0xff]
  %v70 = vld [vmem:[%s3 + $0xe0] sm:$0xff]
  %v71 = vld [vmem:[%s3 + $0xe8] sm:$0xff]
  %v72 = vld [vmem:[%s3 + $0xf0] sm:$0xff]
  %v73 = vld [vmem:[%s3 + $0xf8] sm:$0xff]
  %v74 = vld [vmem:[%s3 + $0x100] sm:$0xff]
  %v75 = vld [vmem:[%s3 + $0x108] sm:$0xff]
  %v76 = vld [vmem:[%s3 + $0x110] sm:$0xff]
  %v77 = vld [vmem:[%s3 + $0x118] sm:$0xff]
  %v78 = vld [vmem:[%s3 + $0x120] sm:$0xff]
  %v79 = vld [vmem:[%s3 + $0x128] sm:$0xff]
  %v80 = vld [vmem:[%s3 + $0x130] sm:$0xff]
  %v81 = vld [vmem:[%s3 + $0x138] sm:$0xff]
  %v82 = vld [vmem:[%s3 + $0x140] sm:$0xff]
  %v83 = vld [vmem:[%s3 + $0x148] sm:$0xff]
  %v84 = vld [vmem:[%s3 + $0x150] sm:$0xff]
  %v85 = vld [vmem:[%s3 + $0x158] sm:$0xff]
  %v86 = vld [vmem:[%s3 + $0x160] sm:$0xff]
  %v87 = vld [vmem:[%s3 + $0x168] sm:$0xff]
  %v88 = vld [vmem:[%s3 + $0x170] sm:$0xff]
  %v89 = vld [vmem:[%s3 + $0x178] sm:$0xff]
  %v90 = vld [vmem:[%s3 + $0x180] sm:$0xff]
  %v91 = vld [vmem:[%s3 + $0x188] sm:$0xff]
  %v92 = vld [vmem:[%s3 + $0x190] sm:$0xff]
  %v93 = vld [vmem:[%s3 + $0x198] sm:$0xff]
  %v94 = vld [vmem:[%s3 + $0x1a0] sm:$0xff]
  %v95 = vld [vmem:[%s3 + $0x1a8] sm:$0xff]
  %v96 = vld [vmem:[%s3 + $0x1b0] sm:$0xff]
  %v97 = vld [vmem:[%s3 + $0x1b8] sm:$0xff]
  %v98 = vld [vmem:[%s3 + $0x1c0] sm:$0xff]
  %v99 = vld [vmem:[%s3 + $0x1c8] sm:$0xff]
  %v100 = vld [vmem:[%s3 + $0x1d0] sm:$0xff]
  %v101 = vld [vmem:[%s3 + $0x1d8] sm:$0xff]
  %v102 = vld [vmem:[%s3 + $0x1e0] sm:$0xff]
  %v103 = vld [vmem:[%s3 + $0x1e8] sm:$0xff]
  %v104 = vld [vmem:[%s3 + $0x1f0] sm:$0xff]
  %v105 = vld [vmem:[%s3 + $0x1f8] sm:$0xff]
  %v106 = vld [vmem:[%s3 + $0x200] sm:$0xff]
  %v107 = vld [vmem:[%s3 + $0x208] sm:$0xff]
  %v108 = vld [vmem:[%s3 + $0x210] sm:$0xff]
  %v109 = vld [vmem:[%s3 + $0x218] sm:$0xff]
  %v110 = vld [vmem:[%s3 + $0x220] sm:$0xff]
  %v111 = vld [vmem:[%s3 + $0x228] sm:$0xff]
  %v112 = vld [vmem:[%s3 + $0x230] sm:$0xff]
  %v113 = vld [vmem:[%s3 + $0x238] sm:$0xff]
  %v114 = vld [vmem:[%s3 + $0x240] sm:$0xff]
  %v115 = vld [vmem:[%s3 + $0x248] sm:$0xff]
  %v116 = vld [vmem:[%s3 + $0x250] sm:$0xff]
  %v117 = vld [vmem:[%s3 + $0x258] sm:$0xff]
  %v118 = vld [vmem:[%s3 + $0x260] sm:$0xff]
  %v119 = vld [vmem:[%s3 + $0x268] sm:$0xff]
  %v120 = vld [vmem:[%s3 + $0x270] sm:$0xff]
  %v121 = vld [vmem:[%s3 + $0x278] sm:$0xff]
  %v122 = vld [vmem:[%s3 + $0x280] sm:$0xff]
  %v123 = vld [vmem:[%s3 + $0x288] sm:$0xff]
  %v124 = vld [vmem:[%s3 + $0x290] sm:$0xff]
  %v125 = vld [vmem:[%s3 + $0x298] sm:$0xff]
  %v126 = vld [vmem:[%s3 + $0x2a0] sm:$0xff]
  %v127 = vld [vmem:[%s3 + $0x2a8] sm:$0xff]
  %v128 = vld [vmem:[%s3 + $0x2b0] sm:$0xff]
  %v129 = vld [vmem:[%s3 + $0x2b8] sm:$0xff]
  %v130 = vld [vmem:[%s3 + $0x2c0] sm:$0xff]
  %v131 = vld [vmem:[%s3 + $0x2c8] sm:$0xff]
  %v132 = vld [vmem:[%s3 + $0x2d0] sm:$0xff]
  %v133 = vld [vmem:[%s3 + $0x2d8] sm:$0xff]
  %v134 = vld [vmem:[%s3 + $0x2e0] sm:$0xff]
  %v135 = vld [vmem:[%s3 + $0x2e8] sm:$0xff]
  %v136 = vld [vmem:[%s3 + $0x2f0] sm:$0xff]
  %v137 = vld [vmem:[%s3 + $0x2f8] sm:$0xff]
  %v138 = vld [vmem:[%s3 + $0x300] sm:$0xff]
  %v139 = vld [vmem:[%s3 + $0x308] sm:$0xff]
  %v140 = vld [vmem:[%s3 + $0x310] sm:$0xff]
  %v141 = vld [vmem:[%s3 + $0x318] sm:$0xff]
  %v142 = vld [vmem:[%s3 + $0x320] sm:$0xff]
  %v143 = vld [vmem:[%s3 + $0x328] sm:$0xff]
  %v144 = vld [vmem:[%s3 + $0x330] sm:$0xff]
  %v145 = vld [vmem:[%s3 + $0x338] sm:$0xff]
  %v146 = vld [vmem:[%s3 + $0x340] sm:$0xff]
  %v147 = vld [vmem:[%s3 + $0x348] sm:$0xff]
  %v148 = vld [vmem:[%s3 + $0x350] sm:$0xff]
  %v149 = vld [vmem:[%s3 + $0x358] sm:$0xff]
  %v150 = vld [vmem:[%s3 + $0x360] sm:$0xff]
  %v151 = vld [vmem:[%s3 + $0x368] sm:$0xff]
  %v152 = vld [vmem:[%s3 + $0x370] sm:$0xff]
  %v153 = vld [vmem:[%s3 + $0x378] sm:$0xff]
  %v154 = vld [vmem:[%s3 + $0x380] sm:$0xff]
  %v155 = vld [vmem:[%s3 + $0x388] sm:$0xff]
  %v156 = vld [vmem:[%s3 + $0x390] sm:$0xff]
  %v157 = vld [vmem:[%s3 + $0x398] sm:$0xff]
  %v158 = vld [vmem:[%s3 + $0x3a0] sm:$0xff]
  %v159 = vld [vmem:[%s3 + $0x3a8] sm:$0xff]
  %v160 = vld [vmem:[%s3 + $0x3b0] sm:$0xff]
  %v161 = vld [vmem:[%s3 + $0x3b8] sm:$0xff]
  %v162 = vld [vmem:[%s3 + $0x3c0] sm:$0xff]
  %v163 = vld [vmem:[%s3 + $0x3c8] sm:$0xff]
  %v164 = vld [vmem:[%s3 + $0x3d0] sm:$0xff]
  %v165 = vld [vmem:[%s3 + $0x3d8] sm:$0xff]
  %v166 = vld [vmem:[%s3 + $0x3e0] sm:$0xff]
  %v167 = vld [vmem:[%s3 + $0x3e8] sm:$0xff]
  %v168 = vld [vmem:[%s3 + $0x3f0] sm:$0xff]
  %v169 = vld [vmem:[%s3 + $0x3f8] sm:$0xff]
  %v170 = vld [vmem:[%s0] sm:$0xff]
  %v171 = vld [vmem:[%s0 + $0x8] sm:$0xff]
  %v172 = vld [vmem:[%s0 + $0x10] sm:$0xff]
  %v173 = vld [vmem:[%s0 + $0x18] sm:$0xff]
  %v174 = vld [vmem:[%s0 + $0x20] sm:$0xff]
  %v175 = vld [vmem:[%s0 + $0x28] sm:$0xff]
  %v176 = vld [vmem:[%s0 + $0x30] sm:$0xff]
  %v177 = vld [vmem:[%s0 + $0x38] sm:$0xff]
  %v178 = vld [vmem:[%s0 + $0x40] sm:$0xff]
  %v179 = vld [vmem:[%s0 + $0x48] sm:$0xff]
  %v180 = vld [vmem:[%s0 + $0x50] sm:$0xff]
  %v181 = vld [vmem:[%s0 + $0x58] sm:$0xff]
  %v182 = vld [vmem:[%s0 + $0x60] sm:$0xff]
  %v183 = vld [vmem:[%s0 + $0x68] sm:$0xff]
  %v184 = vld [vmem:[%s0 + $0x70] sm:$0xf]
  %v185 = vld [vmem:[%s0 + $0x78] sm:$0xf]
  %vm186 = vcmask 490496
  %v188 = vsel %vm186, %v26, 0
  %v191 = vsel %vm186, %v27, 0
  %v194 = vsel %vm186, %v28, 0
  %v197 = vsel %vm186, %v29, 0
  %v200 = vsel %vm186, %v30, 0
  %v203 = vsel %vm186, %v31, 0
  %v206 = vsel %vm186, %v32, 0
  %v209 = vsel %vm186, %v33, 0
  %vm211 = vcmask 1043456
  %v213 = vsel %vm211, %v184, 0
  %v216 = vsel %vm211, %v185, 0
  %218 = vmatprep.subr.mxu0 %v171
  %219 = vmatpush1.msra.mxu0 %v170
  %220 = vmatprep.subr.mxu0 %v173
  %221 = vmatpush1.msra.mxu0 %v172
  %222 = vmatprep.subr.mxu0 %v175
  %223 = vmatpush1.msra.mxu0 %v174
  %224 = vmatprep.subr.mxu0 %v177
  %225 = vmatpush1.msra.mxu0 %v176
  %226 = vmatprep.subr.mxu0 %v179
  %227 = vmatpush1.msra.mxu0 %v178
  %228 = vmatprep.subr.mxu0 %v181
  %229 = vmatpush1.msra.mxu0 %v180
  %230 = vmatprep.subr.mxu0 %v183
  %231 = vmatpush1.msra.mxu0 %v182
  %232 = vmatprep.subr.mxu0 %v216
  %233 = vmatpush1.msra.mxu0 %v213
  %234 = vmatprep.subr.mxu0 0.0
  %235 = vmatpush1.msra.mxu0 0.0
  %236 = vmatprep.subr.mxu0 0.0
  %237 = vmatpush1.msra.mxu0 0.0
  %238 = vmatprep.subr.mxu0 0.0
  %239 = vmatpush1.msra.mxu0 0.0
  %240 = vmatprep.subr.mxu0 0.0
  %241 = vmatpush1.msra.mxu0 0.0
  %242 = vmatprep.subr.mxu0 0.0
  %243 = vmatpush1.msra.mxu0 0.0
  %244 = vmatprep.subr.mxu0 0.0
  %245 = vmatpush1.msra.mxu0 0.0
  %246 = vmatprep.subr.mxu0 0.0
  %247 = vmatpush1.msra.mxu0 0.0
  %248 = vmatprep.subr.mxu0 0.0
  %249 = vmatpush1.msra.mxu0 0.0
  %250 = vmatprep.subr.mxu0 0.0
  %251 = vmatpush1.msra.mxu0 0.0
  %252 = vmatprep.subr.mxu0 0.0
  %253 = vmatpush1.msra.mxu0 0.0
  %254 = vmatprep.subr.mxu0 0.0
  %255 = vmatpush1.msra.mxu0 0.0
  %256 = vmatprep.subr.mxu0 0.0
  %257 = vmatpush1.msra.mxu0 0.0
  %258 = vmatprep.subr.mxu0 0.0
  %259 = vmatpush1.msra.mxu0 0.0
  %260 = vmatprep.subr.mxu0 0.0
  %261 = vmatpush1.msra.mxu0 0.0
  %262 = vmatprep.subr.mxu0 0.0
  %263 = vmatpush1.msra.mxu0 0.0
  %264 = vmatprep.subr.mxu0 0.0
  %265 = vmatpush1.msra.mxu0 0.0
  %266 = vmatprep.subr.mxu0 0.0
  %267 = vmatpush1.msra.mxu0 0.0
  %268 = vmatprep.subr.mxu0 0.0
  %269 = vmatpush1.msra.mxu0 0.0
  %270 = vmatprep.subr.mxu0 0.0
  %271 = vmatpush1.msra.mxu0 0.0
  %272 = vmatprep.subr.mxu0 0.0
  %273 = vmatpush1.msra.mxu0 0.0
  %274 = vmatprep.subr.mxu0 0.0
  %275 = vmatpush1.msra.mxu0 0.0
  %276 = vmatprep.subr.mxu0 0.0
  %277 = vmatpush1.msra.mxu0 0.0
  %278 = vmatprep.subr.mxu0 0.0
  %279 = vmatpush1.msra.mxu0 0.0
  %280 = vmatprep.subr.mxu0 0.0
  %281 = vmatpush1.msra.mxu0 0.0
  %282 = vmatprep.mubr.f32.mxu0 0.0
  %283 = vmatmul.mubr.f32.gmra.mrb[0].mxu0 %v188
  %v284 = vpop.f32.mrb[0].mxu0
  %v285 = vadd.f32 0.0, %v284
  %v286 = vpop.f32.mrb[0].mxu0
  %v287 = vadd.f32 0.0, %v286
  %288 = vmatprep.mubr.f32.mxu0 0.0
  %289 = vmatmul.mubr.f32.gmra.mrb[0].mxu0 %v191
  %v290 = vpop.f32.mrb[0].mxu0
  %v291 = vadd.f32 0.0, %v290
  %v292 = vpop.f32.mrb[0].mxu0
  %v293 = vadd.f32 0.0, %v292
  %294 = vmatprep.mubr.f32.mxu0 0.0
  %295 = vmatmul.mubr.f32.gmra.mrb[0].mxu0 %v194
  %v296 = vpop.f32.mrb[0].mxu0
  %v297 = vadd.f32 0.0, %v296
  %v298 = vpop.f32.mrb[0].mxu0
  %v299 = vadd.f32 0.0, %v298
  %300 = vmatprep.mubr.f32.mxu0 0.0
  %301 = vmatmul.mubr.f32.gmra.mrb[0].mxu0 %v197
  %v302 = vpop.f32.mrb[0].mxu0
  %v303 = vadd.f32 0.0, %v302
  %v304 = vpop.f32.mrb[0].mxu0
  %v305 = vadd.f32 0.0, %v304
  %306 = vmatprep.mubr.f32.mxu0 0.0
  %307 = vmatmul.mubr.f32.gmra.mrb[0].mxu0 %v200
  %v308 = vpop.f32.mrb[0].mxu0
  %v309 = vadd.f32 0.0, %v308
  %v310 = vpop.f32.mrb[0].mxu0
  %v311 = vadd.f32 0.0, %v310
  %312 = vmatprep.mubr.f32.mxu0 0.0
  %313 = vmatmul.mubr.f32.gmra.mrb[0].mxu0 %v203
  %v314 = vpop.f32.mrb[0].mxu0
  %v315 = vadd.f32 0.0, %v314
  %v316 = vpop.f32.mrb[0].mxu0
  %v317 = vadd.f32 0.0, %v316
  %318 = vmatprep.mubr.f32.mxu0 0.0
  %319 = vmatmul.mubr.f32.gmra.mrb[0].mxu0 %v206
  %v320 = vpop.f32.mrb[0].mxu0
  %v321 = vadd.f32 0.0, %v320
  %v322 = vpop.f32.mrb[0].mxu0
  %v323 = vadd.f32 0.0, %v322
  %324 = vmatprep.mubr.f32.mxu0 0.0
  %325 = vmatmul.mubr.f32.gmra.mrb[0].mxu0 %v209
  %v326 = vpop.f32.mrb[0].mxu0
  %v327 = vadd.f32 0.0, %v326
  %v328 = vpop.f32.mrb[0].mxu0
  %v329 = vadd.f32 0.0, %v328
  %330 = vdwg.mxu0
  %v331 = vpack.c.bf16 %v291, %v285
  %v332 = vpack.c.bf16 %v293, %v287
  %v333 = vpack.c.bf16 %v303, %v297
  %v334 = vpack.c.bf16 %v305, %v299
  %v335 = vpack.c.bf16 %v315, %v309
  %v336 = vpack.c.bf16 %v317, %v311
  %v337 = vpack.c.bf16 %v327, %v321
  %v338 = vpack.c.bf16 %v329, %v323
  %340 = vset.pattern.permute.xlu0 0
  %341 = vperm.xlu0 %340, %v34
  %v342 = vpop.permute.xlu0 %341
  %345 = vset.pattern.permute.xlu0 0
  %346 = vperm.xlu0 %345, %v35
  %v347 = vpop.permute.xlu0 %346
  %350 = vset.pattern.permute.xlu0 0
  %351 = vperm.xlu0 %350, %v36
  %v352 = vpop.permute.xlu0 %351
  %355 = vset.pattern.permute.xlu0 0
  %356 = vperm.xlu0 %355, %v37
  %v357 = vpop.permute.xlu0 %356
  %360 = vset.pattern.permute.xlu0 0
  %361 = vperm.xlu0 %360, %v38
  %v362 = vpop.permute.xlu0 %361
  %365 = vset.pattern.permute.xlu0 0
  %366 = vperm.xlu0 %365, %v39
  %v367 = vpop.permute.xlu0 %366
  %370 = vset.pattern.permute.xlu0 0
  %371 = vperm.xlu0 %370, %v40
  %v372 = vpop.permute.xlu0 %371
  %375 = vset.pattern.permute.xlu0 0
  %376 = vperm.xlu0 %375, %v41
  %v377 = vpop.permute.xlu0 %376
  %v507 = vunpack.c.l.b16 %v42
  %v508 = vunpack.c.h.b16 %v42
  %v509 = vunpack.c.l.b16 %v43
  %v510 = vunpack.c.h.b16 %v43
  %v511 = vunpack.c.l.b16 %v44
  %v512 = vunpack.c.h.b16 %v44
  %v513 = vunpack.c.l.b16 %v45
  %v514 = vunpack.c.h.b16 %v45
  %v515 = vunpack.c.l.b16 %v46
  %v516 = vunpack.c.h.b16 %v46
  %v517 = vunpack.c.l.b16 %v47
  %v518 = vunpack.c.h.b16 %v47
  %v519 = vunpack.c.l.b16 %v48
  %v520 = vunpack.c.h.b16 %v48
  %v521 = vunpack.c.l.b16 %v49
  %v522 = vunpack.c.h.b16 %v49
  %v523 = vunpack.c.l.b16 %v50
  %v524 = vunpack.c.h.b16 %v50
  %v525 = vunpack.c.l.b16 %v51
  %v526 = vunpack.c.h.b16 %v51
  %v527 = vunpack.c.l.b16 %v52
  %v528 = vunpack.c.h.b16 %v52
  %v529 = vunpack.c.l.b16 %v53
  %v530 = vunpack.c.h.b16 %v53
  %v531 = vunpack.c.l.b16 %v54
  %v532 = vunpack.c.h.b16 %v54
  %v533 = vunpack.c.l.b16 %v55
  %v534 = vunpack.c.h.b16 %v55
  %v535 = vunpack.c.l.b16 %v56
  %v536 = vunpack.c.h.b16 %v56
  %v537 = vunpack.c.l.b16 %v57
  %v538 = vunpack.c.h.b16 %v57
  %v539 = vunpack.c.l.b16 %v58
  %v540 = vunpack.c.h.b16 %v58
  %v541 = vunpack.c.l.b16 %v59
  %v542 = vunpack.c.h.b16 %v59
  %v543 = vunpack.c.l.b16 %v60
  %v544 = vunpack.c.h.b16 %v60
  %v545 = vunpack.c.l.b16 %v61
  %v546 = vunpack.c.h.b16 %v61
  %v547 = vunpack.c.l.b16 %v62
  %v548 = vunpack.c.h.b16 %v62
  %v549 = vunpack.c.l.b16 %v63
  %v550 = vunpack.c.h.b16 %v63
  %v551 = vunpack.c.l.b16 %v64
  %v552 = vunpack.c.h.b16 %v64
  %v553 = vunpack.c.l.b16 %v65
  %v554 = vunpack.c.h.b16 %v65
  %v555 = vunpack.c.l.b16 %v66
  %v556 = vunpack.c.h.b16 %v66
  %v557 = vunpack.c.l.b16 %v67
  %v558 = vunpack.c.h.b16 %v67
  %v559 = vunpack.c.l.b16 %v68
  %v560 = vunpack.c.h.b16 %v68
  %v561 = vunpack.c.l.b16 %v69
  %v562 = vunpack.c.h.b16 %v69
  %v563 = vunpack.c.l.b16 %v70
  %v564 = vunpack.c.h.b16 %v70
  %v565 = vunpack.c.l.b16 %v71
  %v566 = vunpack.c.h.b16 %v71
  %v567 = vunpack.c.l.b16 %v72
  %v568 = vunpack.c.h.b16 %v72
  %v569 = vunpack.c.l.b16 %v73
  %v570 = vunpack.c.h.b16 %v73
  %v571 = vunpack.c.l.b16 %v74
  %v572 = vunpack.c.h.b16 %v74
  %v573 = vunpack.c.l.b16 %v75
  %v574 = vunpack.c.h.b16 %v75
  %v575 = vunpack.c.l.b16 %v76
  %v576 = vunpack.c.h.b16 %v76
  %v577 = vunpack.c.l.b16 %v77
  %v578 = vunpack.c.h.b16 %v77
  %v579 = vunpack.c.l.b16 %v78
  %v580 = vunpack.c.h.b16 %v78
  %v581 = vunpack.c.l.b16 %v79
  %v582 = vunpack.c.h.b16 %v79
  %v583 = vunpack.c.l.b16 %v80
  %v584 = vunpack.c.h.b16 %v80
  %v585 = vunpack.c.l.b16 %v81
  %v586 = vunpack.c.h.b16 %v81
  %v587 = vunpack.c.l.b16 %v82
  %v588 = vunpack.c.h.b16 %v82
  %v589 = vunpack.c.l.b16 %v83
  %v590 = vunpack.c.h.b16 %v83
  %v591 = vunpack.c.l.b16 %v84
  %v592 = vunpack.c.h.b16 %v84
  %v593 = vunpack.c.l.b16 %v85
  %v594 = vunpack.c.h.b16 %v85
  %v595 = vunpack.c.l.b16 %v86
  %v596 = vunpack.c.h.b16 %v86
  %v597 = vunpack.c.l.b16 %v87
  %v598 = vunpack.c.h.b16 %v87
  %v599 = vunpack.c.l.b16 %v88
  %v600 = vunpack.c.h.b16 %v88
  %v601 = vunpack.c.l.b16 %v89
  %v602 = vunpack.c.h.b16 %v89
  %v603 = vunpack.c.l.b16 %v90
  %v604 = vunpack.c.h.b16 %v90
  %v605 = vunpack.c.l.b16 %v91
  %v606 = vunpack.c.h.b16 %v91
  %v607 = vunpack.c.l.b16 %v92
  %v608 = vunpack.c.h.b16 %v92
  %v609 = vunpack.c.l.b16 %v93
  %v610 = vunpack.c.h.b16 %v93
  %v611 = vunpack.c.l.b16 %v94
  %v612 = vunpack.c.h.b16 %v94
  %v613 = vunpack.c.l.b16 %v95
  %v614 = vunpack.c.h.b16 %v95
  %v615 = vunpack.c.l.b16 %v96
  %v616 = vunpack.c.h.b16 %v96
  %v617 = vunpack.c.l.b16 %v97
  %v618 = vunpack.c.h.b16 %v97
  %v619 = vunpack.c.l.b16 %v98
  %v620 = vunpack.c.h.b16 %v98
  %v621 = vunpack.c.l.b16 %v99
  %v622 = vunpack.c.h.b16 %v99
  %v623 = vunpack.c.l.b16 %v100
  %v624 = vunpack.c.h.b16 %v100
  %v625 = vunpack.c.l.b16 %v101
  %v626 = vunpack.c.h.b16 %v101
  %v627 = vunpack.c.l.b16 %v102
  %v628 = vunpack.c.h.b16 %v102
  %v629 = vunpack.c.l.b16 %v103
  %v630 = vunpack.c.h.b16 %v103
  %v631 = vunpack.c.l.b16 %v104
  %v632 = vunpack.c.h.b16 %v104
  %v633 = vunpack.c.l.b16 %v105
  %v634 = vunpack.c.h.b16 %v105
  %v635 = vunpack.c.l.b16 %v106
  %v636 = vunpack.c.h.b16 %v106
  %v637 = vunpack.c.l.b16 %v107
  %v638 = vunpack.c.h.b16 %v107
  %v639 = vunpack.c.l.b16 %v108
  %v640 = vunpack.c.h.b16 %v108
  %v641 = vunpack.c.l.b16 %v109
  %v642 = vunpack.c.h.b16 %v109
  %v643 = vunpack.c.l.b16 %v110
  %v644 = vunpack.c.h.b16 %v110
  %v645 = vunpack.c.l.b16 %v111
  %v646 = vunpack.c.h.b16 %v111
  %v647 = vunpack.c.l.b16 %v112
  %v648 = vunpack.c.h.b16 %v112
  %v649 = vunpack.c.l.b16 %v113
  %v650 = vunpack.c.h.b16 %v113
  %v651 = vunpack.c.l.b16 %v114
  %v652 = vunpack.c.h.b16 %v114
  %v653 = vunpack.c.l.b16 %v115
  %v654 = vunpack.c.h.b16 %v115
  %v655 = vunpack.c.l.b16 %v116
  %v656 = vunpack.c.h.b16 %v116
  %v657 = vunpack.c.l.b16 %v117
  %v658 = vunpack.c.h.b16 %v117
  %v659 = vunpack.c.l.b16 %v118
  %v660 = vunpack.c.h.b16 %v118
  %v661 = vunpack.c.l.b16 %v119
  %v662 = vunpack.c.h.b16 %v119
  %v663 = vunpack.c.l.b16 %v120
  %v664 = vunpack.c.h.b16 %v120
  %v665 = vunpack.c.l.b16 %v121
  %v666 = vunpack.c.h.b16 %v121
  %v667 = vunpack.c.l.b16 %v122
  %v668 = vunpack.c.h.b16 %v122
  %v669 = vunpack.c.l.b16 %v123
  %v670 = vunpack.c.h.b16 %v123
  %v671 = vunpack.c.l.b16 %v124
  %v672 = vunpack.c.h.b16 %v124
  %v673 = vunpack.c.l.b16 %v125
  %v674 = vunpack.c.h.b16 %v125
  %v675 = vunpack.c.l.b16 %v126
  %v676 = vunpack.c.h.b16 %v126
  %v677 = vunpack.c.l.b16 %v127
  %v678 = vunpack.c.h.b16 %v127
  %v679 = vunpack.c.l.b16 %v128
  %v680 = vunpack.c.h.b16 %v128
  %v681 = vunpack.c.l.b16 %v129
  %v682 = vunpack.c.h.b16 %v129
  %v683 = vunpack.c.l.b16 %v130
  %v684 = vunpack.c.h.b16 %v130
  %v685 = vunpack.c.l.b16 %v131
  %v686 = vunpack.c.h.b16 %v131
  %v687 = vunpack.c.l.b16 %v132
  %v688 = vunpack.c.h.b16 %v132
  %v689 = vunpack.c.l.b16 %v133
  %v690 = vunpack.c.h.b16 %v133
  %v691 = vunpack.c.l.b16 %v134
  %v692 = vunpack.c.h.b16 %v134
  %v693 = vunpack.c.l.b16 %v135
  %v694 = vunpack.c.h.b16 %v135
  %v695 = vunpack.c.l.b16 %v136
  %v696 = vunpack.c.h.b16 %v136
  %v697 = vunpack.c.l.b16 %v137
  %v698 = vunpack.c.h.b16 %v137
  %v699 = vunpack.c.l.b16 %v138
  %v700 = vunpack.c.h.b16 %v138
  %v701 = vunpack.c.l.b16 %v139
  %v702 = vunpack.c.h.b16 %v139
  %v703 = vunpack.c.l.b16 %v140
  %v704 = vunpack.c.h.b16 %v140
  %v705 = vunpack.c.l.b16 %v141
  %v706 = vunpack.c.h.b16 %v141
  %v707 = vunpack.c.l.b16 %v142
  %v708 = vunpack.c.h.b16 %v142
  %v709 = vunpack.c.l.b16 %v143
  %v710 = vunpack.c.h.b16 %v143
  %v711 = vunpack.c.l.b16 %v144
  %v712 = vunpack.c.h.b16 %v144
  %v713 = vunpack.c.l.b16 %v145
  %v714 = vunpack.c.h.b16 %v145
  %v715 = vunpack.c.l.b16 %v146
  %v716 = vunpack.c.h.b16 %v146
  %v717 = vunpack.c.l.b16 %v147
  %v718 = vunpack.c.h.b16 %v147
  %v719 = vunpack.c.l.b16 %v148
  %v720 = vunpack.c.h.b16 %v148
  %v721 = vunpack.c.l.b16 %v149
  %v722 = vunpack.c.h.b16 %v149
  %v723 = vunpack.c.l.b16 %v150
  %v724 = vunpack.c.h.b16 %v150
  %v725 = vunpack.c.l.b16 %v151
  %v726 = vunpack.c.h.b16 %v151
  %v727 = vunpack.c.l.b16 %v152
  %v728 = vunpack.c.h.b16 %v152
  %v729 = vunpack.c.l.b16 %v153
  %v730 = vunpack.c.h.b16 %v153
  %v731 = vunpack.c.l.b16 %v154
  %v732 = vunpack.c.h.b16 %v154
  %v733 = vunpack.c.l.b16 %v155
  %v734 = vunpack.c.h.b16 %v155
  %v735 = vunpack.c.l.b16 %v156
  %v736 = vunpack.c.h.b16 %v156
  %v737 = vunpack.c.l.b16 %v157
  %v738 = vunpack.c.h.b16 %v157
  %v739 = vunpack.c.l.b16 %v158
  %v740 = vunpack.c.h.b16 %v158
  %v741 = vunpack.c.l.b16 %v159
  %v742 = vunpack.c.h.b16 %v159
  %v743 = vunpack.c.l.b16 %v160
  %v744 = vunpack.c.h.b16 %v160
  %v745 = vunpack.c.l.b16 %v161
  %v746 = vunpack.c.h.b16 %v161
  %v747 = vunpack.c.l.b16 %v162
  %v748 = vunpack.c.h.b16 %v162
  %v749 = vunpack.c.l.b16 %v163
  %v750 = vunpack.c.h.b16 %v163
  %v751 = vunpack.c.l.b16 %v164
  %v752 = vunpack.c.h.b16 %v164
  %v753 = vunpack.c.l.b16 %v165
  %v754 = vunpack.c.h.b16 %v165
  %v755 = vunpack.c.l.b16 %v166
  %v756 = vunpack.c.h.b16 %v166
  %v757 = vunpack.c.l.b16 %v167
  %v758 = vunpack.c.h.b16 %v167
  %v759 = vunpack.c.l.b16 %v168
  %v760 = vunpack.c.h.b16 %v168
  %v761 = vunpack.c.l.b16 %v169
  %v762 = vunpack.c.h.b16 %v169
  %v763 = vpack.c.b16 %v515, %v507
  %v764 = vpack.c.b16 %v516, %v508
  %v765 = vpack.c.b16 %v517, %v509
  %v766 = vpack.c.b16 %v518, %v510
  %v767 = vpack.c.b16 %v519, %v511
  %v768 = vpack.c.b16 %v520, %v512
  %v769 = vpack.c.b16 %v521, %v513
  %v770 = vpack.c.b16 %v522, %v514
  %v771 = vpack.c.b16 %v531, %v523
  %v772 = vpack.c.b16 %v532, %v524
  %v773 = vpack.c.b16 %v533, %v525
  %v774 = vpack.c.b16 %v534, %v526
  %v775 = vpack.c.b16 %v535, %v527
  %v776 = vpack.c.b16 %v536, %v528
  %v777 = vpack.c.b16 %v537, %v529
  %v778 = vpack.c.b16 %v538, %v530
  %v779 = vpack.c.b16 %v547, %v539
  %v780 = vpack.c.b16 %v548, %v540
  %v781 = vpack.c.b16 %v549, %v541
  %v782 = vpack.c.b16 %v550, %v542
  %v783 = vpack.c.b16 %v551, %v543
  %v784 = vpack.c.b16 %v552, %v544
  %v785 = vpack.c.b16 %v553, %v545
  %v786 = vpack.c.b16 %v554, %v546
  %v787 = vpack.c.b16 %v563, %v555
  %v788 = vpack.c.b16 %v564, %v556
  %v789 = vpack.c.b16 %v565, %v557
  %v790 = vpack.c.b16 %v566, %v558
  %v791 = vpack.c.b16 %v567, %v559
  %v792 = vpack.c.b16 %v568, %v560
  %v793 = vpack.c.b16 %v569, %v561
  %v794 = vpack.c.b16 %v570, %v562
  %v795 = vpack.c.b16 %v579, %v571
  %v796 = vpack.c.b16 %v580, %v572
  %v797 = vpack.c.b16 %v581, %v573
  %v798 = vpack.c.b16 %v582, %v574
  %v799 = vpack.c.b16 %v583, %v575
  %v800 = vpack.c.b16 %v584, %v576
  %v801 = vpack.c.b16 %v585, %v577
  %v802 = vpack.c.b16 %v586, %v578
  %v803 = vpack.c.b16 %v595, %v587
  %v804 = vpack.c.b16 %v596, %v588
  %v805 = vpack.c.b16 %v597, %v589
  %v806 = vpack.c.b16 %v598, %v590
  %v807 = vpack.c.b16 %v599, %v591
  %v808 = vpack.c.b16 %v600, %v592
  %v809 = vpack.c.b16 %v601, %v593
  %v810 = vpack.c.b16 %v602, %v594
  %v811 = vpack.c.b16 %v611, %v603
  %v812 = vpack.c.b16 %v612, %v604
  %v813 = vpack.c.b16 %v613, %v605
  %v814 = vpack.c.b16 %v614, %v606
  %v815 = vpack.c.b16 %v615, %v607
  %v816 = vpack.c.b16 %v616, %v608
  %v817 = vpack.c.b16 %v617, %v609
  %v818 = vpack.c.b16 %v618, %v610
  %v819 = vpack.c.b16 %v627, %v619
  %v820 = vpack.c.b16 %v628, %v620
  %v821 = vpack.c.b16 %v629, %v621
  %v822 = vpack.c.b16 %v630, %v622
  %v823 = vpack.c.b16 %v631, %v623
  %v824 = vpack.c.b16 %v632, %v624
  %v825 = vpack.c.b16 %v633, %v625
  %v826 = vpack.c.b16 %v634, %v626
  %v827 = vpack.c.b16 %v643, %v635
  %v828 = vpack.c.b16 %v644, %v636
  %v829 = vpack.c.b16 %v645, %v637
  %v830 = vpack.c.b16 %v646, %v638
  %v831 = vpack.c.b16 %v647, %v639
  %v832 = vpack.c.b16 %v648, %v640
  %v833 = vpack.c.b16 %v649, %v641
  %v834 = vpack.c.b16 %v650, %v642
  %v835 = vpack.c.b16 %v659, %v651
  %v836 = vpack.c.b16 %v660, %v652
  %v837 = vpack.c.b16 %v661, %v653
  %v838 = vpack.c.b16 %v662, %v654
  %v839 = vpack.c.b16 %v663, %v655
  %v840 = vpack.c.b16 %v664, %v656
  %v841 = vpack.c.b16 %v665, %v657
  %v842 = vpack.c.b16 %v666, %v658
  %v843 = vpack.c.b16 %v675, %v667
  %v844 = vpack.c.b16 %v676, %v668
  %v845 = vpack.c.b16 %v677, %v669
  %v846 = vpack.c.b16 %v678, %v670
  %v847 = vpack.c.b16 %v679, %v671
  %v848 = vpack.c.b16 %v680, %v672
  %v849 = vpack.c.b16 %v681, %v673
  %v850 = vpack.c.b16 %v682, %v674
  %v851 = vpack.c.b16 %v691, %v683
  %v852 = vpack.c.b16 %v692, %v684
  %v853 = vpack.c.b16 %v693, %v685
  %v854 = vpack.c.b16 %v694, %v686
  %v855 = vpack.c.b16 %v695, %v687
  %v856 = vpack.c.b16 %v696, %v688
  %v857 = vpack.c.b16 %v697, %v689
  %v858 = vpack.c.b16 %v698, %v690
  %v859 = vpack.c.b16 %v707, %v699
  %v860 = vpack.c.b16 %v708, %v700
  %v861 = vpack.c.b16 %v709, %v701
  %v862 = vpack.c.b16 %v710, %v702
  %v863 = vpack.c.b16 %v711, %v703
  %v864 = vpack.c.b16 %v712, %v704
  %v865 = vpack.c.b16 %v713, %v705
  %v866 = vpack.c.b16 %v714, %v706
  %v867 = vpack.c.b16 %v723, %v715
  %v868 = vpack.c.b16 %v724, %v716
  %v869 = vpack.c.b16 %v725, %v717
  %v870 = vpack.c.b16 %v726, %v718
  %v871 = vpack.c.b16 %v727, %v719
  %v872 = vpack.c.b16 %v728, %v720
  %v873 = vpack.c.b16 %v729, %v721
  %v874 = vpack.c.b16 %v730, %v722
  %v875 = vpack.c.b16 %v739, %v731
  %v876 = vpack.c.b16 %v740, %v732
  %v877 = vpack.c.b16 %v741, %v733
  %v878 = vpack.c.b16 %v742, %v734
  %v879 = vpack.c.b16 %v743, %v735
  %v880 = vpack.c.b16 %v744, %v736
  %v881 = vpack.c.b16 %v745, %v737
  %v882 = vpack.c.b16 %v746, %v738
  %v883 = vpack.c.b16 %v755, %v747
  %v884 = vpack.c.b16 %v756, %v748
  %v885 = vpack.c.b16 %v757, %v749
  %v886 = vpack.c.b16 %v758, %v750
  %v887 = vpack.c.b16 %v759, %v751
  %v888 = vpack.c.b16 %v760, %v752
  %v889 = vpack.c.b16 %v761, %v753
  %v890 = vpack.c.b16 %v762, %v754
  %1019 = vmatprep.subr.bf16.mxu0 %v764
  %1020 = vmatpush1.bf16.msra.mxu0 %v763
  %1021 = vmatprep.subr.bf16.mxu0 %v772
  %1022 = vmatpush1.bf16.msra.mxu0 %v771
  %1023 = vmatprep.subr.bf16.mxu0 %v780
  %1024 = vmatpush1.bf16.msra.mxu0 %v779
  %1025 = vmatprep.subr.bf16.mxu0 %v788
  %1026 = vmatpush1.bf16.msra.mxu0 %v787
  %1027 = vmatprep.subr.bf16.mxu0 %v796
  %1028 = vmatpush1.bf16.msra.mxu0 %v795
  %1029 = vmatprep.subr.bf16.mxu0 %v804
  %1030 = vmatpush1.bf16.msra.mxu0 %v803
  %1031 = vmatprep.subr.bf16.mxu0 %v812
  %1032 = vmatpush1.bf16.msra.mxu0 %v811
  %1033 = vmatprep.subr.bf16.mxu0 %v820
  %1034 = vmatpush1.bf16.msra.mxu0 %v819
  %1035 = vmatprep.subr.bf16.mxu0 %v828
  %1036 = vmatpush1.bf16.msra.mxu0 %v827
  %1037 = vmatprep.subr.bf16.mxu0 %v836
  %1038 = vmatpush1.bf16.msra.mxu0 %v835
  %1039 = vmatprep.subr.bf16.mxu0 %v844
  %1040 = vmatpush1.bf16.msra.mxu0 %v843
  %1041 = vmatprep.subr.bf16.mxu0 %v852
  %1042 = vmatpush1.bf16.msra.mxu0 %v851
  %1043 = vmatprep.subr.bf16.mxu0 %v860
  %1044 = vmatpush1.bf16.msra.mxu0 %v859
  %1045 = vmatprep.subr.bf16.mxu0 %v868
  %1046 = vmatpush1.bf16.msra.mxu0 %v867
  %1047 = vmatprep.subr.bf16.mxu0 %v876
  %1048 = vmatpush1.bf16.msra.mxu0 %v875
  %1049 = vmatprep.subr.bf16.mxu0 %v884
  %1050 = vmatpush1.bf16.msra.mxu0 %v883
  %1051 = vmatprep.mubr.bf16.mxu0 %v332
  %1052 = vmatmul.mubr.bf16.gmra.mrb[0].mxu0 %v331
  %v1053 = vpop.f32.mrb[0].mxu0
  %v1054 = vadd.f32 %v342, %v1053
  %v1055 = vpop.f32.mrb[0].mxu0
  %v1056 = vadd.f32 %v342, %v1055
  %v1057 = vpop.f32.mrb[0].mxu0
  %v1058 = vadd.f32 %v347, %v1057
  %v1059 = vpop.f32.mrb[0].mxu0
  %v1060 = vadd.f32 %v347, %v1059
  %1061 = vmatprep.mubr.bf16.mxu0 %v334
  %1062 = vmatmul.mubr.bf16.gmra.mrb[0].mxu0 %v333
  %v1063 = vpop.f32.mrb[0].mxu0
  %v1064 = vadd.f32 %v352, %v1063
  %v1065 = vpop.f32.mrb[0].mxu0
  %v1066 = vadd.f32 %v352, %v1065
  %v1067 = vpop.f32.mrb[0].mxu0
  %v1068 = vadd.f32 %v357, %v1067
  %v1069 = vpop.f32.mrb[0].mxu0
  %v1070 = vadd.f32 %v357, %v1069
  %1071 = vmatprep.mubr.bf16.mxu0 %v336
  %1072 = vmatmul.mubr.bf16.gmra.mrb[0].mxu0 %v335
  %v1073 = vpop.f32.mrb[0].mxu0
  %v1074 = vadd.f32 %v362, %v1073
  %v1075 = vpop.f32.mrb[0].mxu0
  %v1076 = vadd.f32 %v362, %v1075
  %v1077 = vpop.f32.mrb[0].mxu0
  %v1078 = vadd.f32 %v367, %v1077
  %v1079 = vpop.f32.mrb[0].mxu0
  %v1080 = vadd.f32 %v367, %v1079
  %1081 = vmatprep.mubr.bf16.mxu0 %v338
  %1082 = vmatmul.mubr.bf16.gmra.mrb[0].mxu0 %v337
  %v1083 = vpop.f32.mrb[0].mxu0
  %v1084 = vadd.f32 %v372, %v1083
  %v1085 = vpop.f32.mrb[0].mxu0
  %v1086 = vadd.f32 %v372, %v1085
  %v1087 = vpop.f32.mrb[0].mxu0
  %v1088 = vadd.f32 %v377, %v1087
  %v1089 = vpop.f32.mrb[0].mxu0
  %v1090 = vadd.f32 %v377, %v1089
  %1091 = vdwg.mxu0
  %1092 = vmatprep.subr.bf16.mxu0 %v766
  %1093 = vmatpush1.bf16.msra.mxu0 %v765
  %1094 = vmatprep.subr.bf16.mxu0 %v774
  %1095 = vmatpush1.bf16.msra.mxu0 %v773
  %1096 = vmatprep.subr.bf16.mxu0 %v782
  %1097 = vmatpush1.bf16.msra.mxu0 %v781
  %1098 = vmatprep.subr.bf16.mxu0 %v790
  %1099 = vmatpush1.bf16.msra.mxu0 %v789
  %1100 = vmatprep.subr.bf16.mxu0 %v798
  %1101 = vmatpush1.bf16.msra.mxu0 %v797
  %1102 = vmatprep.subr.bf16.mxu0 %v806
  %1103 = vmatpush1.bf16.msra.mxu0 %v805
  %1104 = vmatprep.subr.bf16.mxu0 %v814
  %1105 = vmatpush1.bf16.msra.mxu0 %v813
  %1106 = vmatprep.subr.bf16.mxu0 %v822
  %1107 = vmatpush1.bf16.msra.mxu0 %v821
  %1108 = vmatprep.subr.bf16.mxu0 %v830
  %1109 = vmatpush1.bf16.msra.mxu0 %v829
  %1110 = vmatprep.subr.bf16.mxu0 %v838
  %1111 = vmatpush1.bf16.msra.mxu0 %v837
  %1112 = vmatprep.subr.bf16.mxu0 %v846
  %1113 = vmatpush1.bf16.msra.mxu0 %v845
  %1114 = vmatprep.subr.bf16.mxu0 %v854
  %1115 = vmatpush1.bf16.msra.mxu0 %v853
  %1116 = vmatprep.subr.bf16.mxu0 %v862
  %1117 = vmatpush1.bf16.msra.mxu0 %v861
  %1118 = vmatprep.subr.bf16.mxu0 %v870
  %1119 = vmatpush1.bf16.msra.mxu0 %v869
  %1120 = vmatprep.subr.bf16.mxu0 %v878
  %1121 = vmatpush1.bf16.msra.mxu0 %v877
  %1122 = vmatprep.subr.bf16.mxu0 %v886
  %1123 = vmatpush1.bf16.msra.mxu0 %v885
  %1124 = vmatprep.mubr.bf16.mxu0 %v332
  %1125 = vmatmul.mubr.bf16.gmra.mrb[0].mxu0 %v331
  %v1126 = vpop.f32.mrb[0].mxu0
  %v1127 = vadd.f32 %v342, %v1126
  %v1128 = vpop.f32.mrb[0].mxu0
  %v1129 = vadd.f32 %v342, %v1128
  %v1130 = vpop.f32.mrb[0].mxu0
  %v1131 = vadd.f32 %v347, %v1130
  %v1132 = vpop.f32.mrb[0].mxu0
  %v1133 = vadd.f32 %v347, %v1132
  %1134 = vmatprep.mubr.bf16.mxu0 %v334
  %1135 = vmatmul.mubr.bf16.gmra.mrb[0].mxu0 %v333
  %v1136 = vpop.f32.mrb[0].mxu0
  %v1137 = vadd.f32 %v352, %v1136
  %v1138 = vpop.f32.mrb[0].mxu0
  %v1139 = vadd.f32 %v352, %v1138
  %v1140 = vpop.f32.mrb[0].mxu0
  %v1141 = vadd.f32 %v357, %v1140
  %v1142 = vpop.f32.mrb[0].mxu0
  %v1143 = vadd.f32 %v357, %v1142
  %1144 = vmatprep.mubr.bf16.mxu0 %v336
  %1145 = vmatmul.mubr.bf16.gmra.mrb[0].mxu0 %v335
  %v1146 = vpop.f32.mrb[0].mxu0
  %v1147 = vadd.f32 %v362, %v1146
  %v1148 = vpop.f32.mrb[0].mxu0
  %v1149 = vadd.f32 %v362, %v1148
  %v1150 = vpop.f32.mrb[0].mxu0
  %v1151 = vadd.f32 %v367, %v1150
  %v1152 = vpop.f32.mrb[0].mxu0
  %v1153 = vadd.f32 %v367, %v1152
  %1154 = vmatprep.mubr.bf16.mxu0 %v338
  %1155 = vmatmul.mubr.bf16.gmra.mrb[0].mxu0 %v337
  %v1156 = vpop.f32.mrb[0].mxu0
  %v1157 = vadd.f32 %v372, %v1156
  %v1158 = vpop.f32.mrb[0].mxu0
  %v1159 = vadd.f32 %v372, %v1158
  %v1160 = vpop.f32.mrb[0].mxu0
  %v1161 = vadd.f32 %v377, %v1160
  %v1162 = vpop.f32.mrb[0].mxu0
  %v1163 = vadd.f32 %v377, %v1162
  %1164 = vdwg.mxu0
  %1165 = vmatprep.subr.bf16.mxu0 %v768
  %1166 = vmatpush1.bf16.msra.mxu0 %v767
  %1167 = vmatprep.subr.bf16.mxu0 %v776
  %1168 = vmatpush1.bf16.msra.mxu0 %v775
  %1169 = vmatprep.subr.bf16.mxu0 %v784
  %1170 = vmatpush1.bf16.msra.mxu0 %v783
  %1171 = vmatprep.subr.bf16.mxu0 %v792
  %1172 = vmatpush1.bf16.msra.mxu0 %v791
  %1173 = vmatprep.subr.bf16.mxu0 %v800
  %1174 = vmatpush1.bf16.msra.mxu0 %v799
  %1175 = vmatprep.subr.bf16.mxu0 %v808
  %1176 = vmatpush1.bf16.msra.mxu0 %v807
  %1177 = vmatprep.subr.bf16.mxu0 %v816
  %1178 = vmatpush1.bf16.msra.mxu0 %v815
  %1179 = vmatprep.subr.bf16.mxu0 %v824
  %1180 = vmatpush1.bf16.msra.mxu0 %v823
  %1181 = vmatprep.subr.bf16.mxu0 %v832
  %1182 = vmatpush1.bf16.msra.mxu0 %v831
  %1183 = vmatprep.subr.bf16.mxu0 %v840
  %1184 = vmatpush1.bf16.msra.mxu0 %v839
  %1185 = vmatprep.subr.bf16.mxu0 %v848
  %1186 = vmatpush1.bf16.msra.mxu0 %v847
  %1187 = vmatprep.subr.bf16.mxu0 %v856
  %1188 = vmatpush1.bf16.msra.mxu0 %v855
  %1189 = vmatprep.subr.bf16.mxu0 %v864
  %1190 = vmatpush1.bf16.msra.mxu0 %v863
  %1191 = vmatprep.subr.bf16.mxu0 %v872
  %1192 = vmatpush1.bf16.msra.mxu0 %v871
  %1193 = vmatprep.subr.bf16.mxu0 %v880
  %1194 = vmatpush1.bf16.msra.mxu0 %v879
  %1195 = vmatprep.subr.bf16.mxu0 %v888
  %1196 = vmatpush1.bf16.msra.mxu0 %v887
  %1197 = vmatprep.mubr.bf16.mxu0 %v332
  %1198 = vmatmul.mubr.bf16.gmra.mrb[0].mxu0 %v331
  %v1199 = vpop.f32.mrb[0].mxu0
  %v1200 = vadd.f32 %v342, %v1199
  %v1201 = vpop.f32.mrb[0].mxu0
  %v1202 = vadd.f32 %v342, %v1201
  %v1203 = vpop.f32.mrb[0].mxu0
  %v1204 = vadd.f32 %v347, %v1203
  %v1205 = vpop.f32.mrb[0].mxu0
  %v1206 = vadd.f32 %v347, %v1205
  %1207 = vmatprep.mubr.bf16.mxu0 %v334
  %1208 = vmatmul.mubr.bf16.gmra.mrb[0].mxu0 %v333
  %v1209 = vpop.f32.mrb[0].mxu0
  %v1210 = vadd.f32 %v352, %v1209
  %v1211 = vpop.f32.mrb[0].mxu0
  %v1212 = vadd.f32 %v352, %v1211
  %v1213 = vpop.f32.mrb[0].mxu0
  %v1214 = vadd.f32 %v357, %v1213
  %v1215 = vpop.f32.mrb[0].mxu0
  %v1216 = vadd.f32 %v357, %v1215
  %1217 = vmatprep.mubr.bf16.mxu0 %v336
  %1218 = vmatmul.mubr.bf16.gmra.mrb[0].mxu0 %v335
  %v1219 = vpop.f32.mrb[0].mxu0
  %v1220 = vadd.f32 %v362, %v1219
  %v1221 = vpop.f32.mrb[0].mxu0
  %v1222 = vadd.f32 %v362, %v1221
  %v1223 = vpop.f32.mrb[0].mxu0
  %v1224 = vadd.f32 %v367, %v1223
  %v1225 = vpop.f32.mrb[0].mxu0
  %v1226 = vadd.f32 %v367, %v1225
  %1227 = vmatprep.mubr.bf16.mxu0 %v338
  %1228 = vmatmul.mubr.bf16.gmra.mrb[0].mxu0 %v337
  %v1229 = vpop.f32.mrb[0].mxu0
  %v1230 = vadd.f32 %v372, %v1229
  %v1231 = vpop.f32.mrb[0].mxu0
  %v1232 = vadd.f32 %v372, %v1231
  %v1233 = vpop.f32.mrb[0].mxu0
  %v1234 = vadd.f32 %v377, %v1233
  %v1235 = vpop.f32.mrb[0].mxu0
  %v1236 = vadd.f32 %v377, %v1235
  %1237 = vdwg.mxu0
  %1238 = vmatprep.subr.bf16.mxu0 %v770
  %1239 = vmatpush1.bf16.msra.mxu0 %v769
  %1240 = vmatprep.subr.bf16.mxu0 %v778
  %1241 = vmatpush1.bf16.msra.mxu0 %v777
  %1242 = vmatprep.subr.bf16.mxu0 %v786
  %1243 = vmatpush1.bf16.msra.mxu0 %v785
  %1244 = vmatprep.subr.bf16.mxu0 %v794
  %1245 = vmatpush1.bf16.msra.mxu0 %v793
  %1246 = vmatprep.subr.bf16.mxu0 %v802
  %1247 = vmatpush1.bf16.msra.mxu0 %v801
  %1248 = vmatprep.subr.bf16.mxu0 %v810
  %1249 = vmatpush1.bf16.msra.mxu0 %v809
  %1250 = vmatprep.subr.bf16.mxu0 %v818
  %1251 = vmatpush1.bf16.msra.mxu0 %v817
  %1252 = vmatprep.subr.bf16.mxu0 %v826
  %1253 = vmatpush1.bf16.msra.mxu0 %v825
  %1254 = vmatprep.subr.bf16.mxu0 %v834
  %1255 = vmatpush1.bf16.msra.mxu0 %v833
  %1256 = vmatprep.subr.bf16.mxu0 %v842
  %1257 = vmatpush1.bf16.msra.mxu0 %v841
  %1258 = vmatprep.subr.bf16.mxu0 %v850
  %1259 = vmatpush1.bf16.msra.mxu0 %v849
  %1260 = vmatprep.subr.bf16.mxu0 %v858
  %1261 = vmatpush1.bf16.msra.mxu0 %v857
  %1262 = vmatprep.subr.bf16.mxu0 %v866
  %1263 = vmatpush1.bf16.msra.mxu0 %v865
  %1264 = vmatprep.subr.bf16.mxu0 %v874
  %1265 = vmatpush1.bf16.msra.mxu0 %v873
  %1266 = vmatprep.subr.bf16.mxu0 %v882
  %1267 = vmatpush1.bf16.msra.mxu0 %v881
  %1268 = vmatprep.subr.bf16.mxu0 %v890
  %1269 = vmatpush1.bf16.msra.mxu0 %v889
  %1270 = vmatprep.mubr.bf16.mxu0 %v332
  %1271 = vmatmul.mubr.bf16.gmra.mrb[0].mxu0 %v331
  %v1272 = vpop.f32.mrb[0].mxu0
  %v1273 = vadd.f32 %v342, %v1272
  %v1274 = vpop.f32.mrb[0].mxu0
  %v1275 = vadd.f32 %v342, %v1274
  %v1276 = vpop.f32.mrb[0].mxu0
  %v1277 = vadd.f32 %v347, %v1276
  %v1278 = vpop.f32.mrb[0].mxu0
  %v1279 = vadd.f32 %v347, %v1278
  %1280 = vmatprep.mubr.bf16.mxu0 %v334
  %1281 = vmatmul.mubr.bf16.gmra.mrb[0].mxu0 %v333
  %v1282 = vpop.f32.mrb[0].mxu0
  %v1283 = vadd.f32 %v352, %v1282
  %v1284 = vpop.f32.mrb[0].mxu0
  %v1285 = vadd.f32 %v352, %v1284
  %v1286 = vpop.f32.mrb[0].mxu0
  %v1287 = vadd.f32 %v357, %v1286
  %v1288 = vpop.f32.mrb[0].mxu0
  %v1289 = vadd.f32 %v357, %v1288
  %1290 = vmatprep.mubr.bf16.mxu0 %v336
  %1291 = vmatmul.mubr.bf16.gmra.mrb[0].mxu0 %v335
  %v1292 = vpop.f32.mrb[0].mxu0
  %v1293 = vadd.f32 %v362, %v1292
  %v1294 = vpop.f32.mrb[0].mxu0
  %v1295 = vadd.f32 %v362, %v1294
  %v1296 = vpop.f32.mrb[0].mxu0
  %v1297 = vadd.f32 %v367, %v1296
  %v1298 = vpop.f32.mrb[0].mxu0
  %v1299 = vadd.f32 %v367, %v1298
  %1300 = vmatprep.mubr.bf16.mxu0 %v338
  %1301 = vmatmul.mubr.bf16.gmra.mrb[0].mxu0 %v337
  %v1302 = vpop.f32.mrb[0].mxu0
  %v1303 = vadd.f32 %v372, %v1302
  %v1304 = vpop.f32.mrb[0].mxu0
  %v1305 = vadd.f32 %v372, %v1304
  %v1306 = vpop.f32.mrb[0].mxu0
  %v1307 = vadd.f32 %v377, %v1306
  %v1308 = vpop.f32.mrb[0].mxu0
  %v1309 = vadd.f32 %v377, %v1308
  %1310 = vdwg.mxu0
  %1311 = vst [vmem:[%s7] sm:$0xff] %v1054
  %1312 = vst [vmem:[%s7 + $0x8] sm:$0xff] %v1056
  %1313 = vst [vmem:[%s7 + $0x10] sm:$0xff] %v1127
  %1314 = vst [vmem:[%s7 + $0x18] sm:$0xff] %v1129
  %1315 = vst [vmem:[%s7 + $0x20] sm:$0xff] %v1200
  %1316 = vst [vmem:[%s7 + $0x28] sm:$0xff] %v1202
  %1317 = vst [vmem:[%s7 + $0x30] sm:$0xff] %v1273
  %1318 = vst [vmem:[%s7 + $0x38] sm:$0xff] %v1275
  %1319 = vst [vmem:[%s7 + $0x40] sm:$0xff] %v1058
  %1320 = vst [vmem:[%s7 + $0x48] sm:$0xff] %v1060
  %1321 = vst [vmem:[%s7 + $0x50] sm:$0xff] %v1131
  %1322 = vst [vmem:[%s7 + $0x58] sm:$0xff] %v1133
  %1323 = vst [vmem:[%s7 + $0x60] sm:$0xff] %v1204
  %1324 = vst [vmem:[%s7 + $0x68] sm:$0xff] %v1206
  %1325 = vst [vmem:[%s7 + $0x70] sm:$0xff] %v1277
  %1326 = vst [vmem:[%s7 + $0x78] sm:$0xff] %v1279
  %1327 = vst [vmem:[%s7 + $0x80] sm:$0xff] %v1064
  %1328 = vst [vmem:[%s7 + $0x88] sm:$0xff] %v1066
  %1329 = vst [vmem:[%s7 + $0x90] sm:$0xff] %v1137
  %1330 = vst [vmem:[%s7 + $0x98] sm:$0xff] %v1139
  %1331 = vst [vmem:[%s7 + $0xa0] sm:$0xff] %v1210
  %1332 = vst [vmem:[%s7 + $0xa8] sm:$0xff] %v1212
  %1333 = vst [vmem:[%s7 + $0xb0] sm:$0xff] %v1283
  %1334 = vst [vmem:[%s7 + $0xb8] sm:$0xff] %v1285
  %1335 = vst [vmem:[%s7 + $0xc0] sm:$0xff] %v1068
  %1336 = vst [vmem:[%s7 + $0xc8] sm:$0xff] %v1070
  %1337 = vst [vmem:[%s7 + $0xd0] sm:$0xff] %v1141
  %1338 = vst [vmem:[%s7 + $0xd8] sm:$0xff] %v1143
  %1339 = vst [vmem:[%s7 + $0xe0] sm:$0xff] %v1214
  %1340 = vst [vmem:[%s7 + $0xe8] sm:$0xff] %v1216
  %1341 = vst [vmem:[%s7 + $0xf0] sm:$0xff] %v1287
  %1342 = vst [vmem:[%s7 + $0xf8] sm:$0xff] %v1289
  %1343 = vst [vmem:[%s7 + $0x100] sm:$0xff] %v1074
  %1344 = vst [vmem:[%s7 + $0x108] sm:$0xff] %v1076
  %1345 = vst [vmem:[%s7 + $0x110] sm:$0xff] %v1147
  %1346 = vst [vmem:[%s7 + $0x118] sm:$0xff] %v1149
  %1347 = vst [vmem:[%s7 + $0x120] sm:$0xff] %v1220
  %1348 = vst [vmem:[%s7 + $0x128] sm:$0xff] %v1222
  %1349 = vst [vmem:[%s7 + $0x130] sm:$0xff] %v1293
  %1350 = vst [vmem:[%s7 + $0x138] sm:$0xff] %v1295
  %1351 = vst [vmem:[%s7 + $0x140] sm:$0xff] %v1078
  %1352 = vst [vmem:[%s7 + $0x148] sm:$0xff] %v1080
  %1353 = vst [vmem:[%s7 + $0x150] sm:$0xff] %v1151
  %1354 = vst [vmem:[%s7 + $0x158] sm:$0xff] %v1153
  %1355 = vst [vmem:[%s7 + $0x160] sm:$0xff] %v1224
  %1356 = vst [vmem:[%s7 + $0x168] sm:$0xff] %v1226
  %1357 = vst [vmem:[%s7 + $0x170] sm:$0xff] %v1297
  %1358 = vst [vmem:[%s7 + $0x178] sm:$0xff] %v1299
  %1359 = vst [vmem:[%s7 + $0x180] sm:$0xff] %v1084
  %1360 = vst [vmem:[%s7 + $0x188] sm:$0xff] %v1086
  %1361 = vst [vmem:[%s7 + $0x190] sm:$0xff] %v1157
  %1362 = vst [vmem:[%s7 + $0x198] sm:$0xff] %v1159
  %1363 = vst [vmem:[%s7 + $0x1a0] sm:$0xff] %v1230
  %1364 = vst [vmem:[%s7 + $0x1a8] sm:$0xff] %v1232
  %1365 = vst [vmem:[%s7 + $0x1b0] sm:$0xff] %v1303
  %1366 = vst [vmem:[%s7 + $0x1b8] sm:$0xff] %v1305
  %1367 = vst [vmem:[%s7 + $0x1c0] sm:$0x3f] %v1088
  %1368 = vst [vmem:[%s7 + $0x1c8] sm:$0x3f] %v1090
  %1369 = vst [vmem:[%s7 + $0x1d0] sm:$0x3f] %v1161
  %1370 = vst [vmem:[%s7 + $0x1d8] sm:$0x3f] %v1163
  %1371 = vst [vmem:[%s7 + $0x1e0] sm:$0x3f] %v1234
  %1372 = vst [vmem:[%s7 + $0x1e8] sm:$0x3f] %v1236
  %1373 = vst [vmem:[%s7 + $0x1f0] sm:$0x3f] %v1307
  %1374 = vst [vmem:[%s7 + $0x1f8] sm:$0x3f] %v1309
  %s1375 = scalar_lea.vmem %s0, 128
  %v1376 = vld [vmem:[%s1375] sm:$0xff]
  %v1377 = vld [vmem:[%s1375 + $0x8] sm:$0xff]
  %v1378 = vld [vmem:[%s1375 + $0x10] sm:$0xff]
  %v1379 = vld [vmem:[%s1375 + $0x18] sm:$0xff]
  %v1380 = vld [vmem:[%s1375 + $0x20] sm:$0xff]
  %v1381 = vld [vmem:[%s1375 + $0x28] sm:$0xff]
  %v1382 = vld [vmem:[%s1375 + $0x30] sm:$0xff]
  %v1383 = vld [vmem:[%s1375 + $0x38] sm:$0xff]
  %v1384 = vld [vmem:[%s1375 + $0x40] sm:$0xff]
  %v1385 = vld [vmem:[%s1375 + $0x48] sm:$0xff]
  %v1386 = vld [vmem:[%s1375 + $0x50] sm:$0xff]
  %v1387 = vld [vmem:[%s1375 + $0x58] sm:$0xff]
  %v1388 = vld [vmem:[%s1375 + $0x60] sm:$0xff]
  %v1389 = vld [vmem:[%s1375 + $0x68] sm:$0xff]
  %v1390 = vld [vmem:[%s1375 + $0x70] sm:$0xf]
  %v1391 = vld [vmem:[%s1375 + $0x78] sm:$0xf]
  %v1393 = vsel %vm211, %v1390, 0
  %v1396 = vsel %vm211, %v1391, 0
  %1398 = vmatprep.subr.mxu0 %v1377
  %1399 = vmatpush1.msra.mxu0 %v1376
  %1400 = vmatprep.subr.mxu0 %v1379
  %1401 = vmatpush1.msra.mxu0 %v1378
  %1402 = vmatprep.subr.mxu0 %v1381
  %1403 = vmatpush1.msra.mxu0 %v1380
  %1404 = vmatprep.subr.mxu0 %v1383
  %1405 = vmatpush1.msra.mxu0 %v1382
  %1406 = vmatprep.subr.mxu0 %v1385
  %1407 = vmatpush1.msra.mxu0 %v1384
  %1408 = vmatprep.subr.mxu0 %v1387
  %1409 = vmatpush1.msra.mxu0 %v1386
  %1410 = vmatprep.subr.mxu0 %v1389
  %1411 = vmatpush1.msra.mxu0 %v1388
  %1412 = vmatprep.subr.mxu0 %v1396
  %1413 = vmatpush1.msra.mxu0 %v1393
  %1414 = vmatprep.subr.mxu0 0.0
  %1415 = vmatpush1.msra.mxu0 0.0
  %1416 = vmatprep.subr.mxu0 0.0
  %1417 = vmatpush1.msra.mxu0 0.0
  %1418 = vmatprep.subr.mxu0 0.0
  %1419 = vmatpush1.msra.mxu0 0.0
  %1420 = vmatprep.subr.mxu0 0.0
  %1421 = vmatpush1.msra.mxu0 0.0
  %1422 = vmatprep.subr.mxu0 0.0
  %1423 = vmatpush1.msra.mxu0 0.0
  %1424 = vmatprep.subr.mxu0 0.0
  %1425 = vmatpush1.msra.mxu0 0.0
  %1426 = vmatprep.subr.mxu0 0.0
  %1427 = vmatpush1.msra.mxu0 0.0
  %1428 = vmatprep.subr.mxu0 0.0
  %1429 = vmatpush1.msra.mxu0 0.0
  %1430 = vmatprep.subr.mxu0 0.0
  %1431 = vmatpush1.msra.mxu0 0.0
  %1432 = vmatprep.subr.mxu0 0.0
  %1433 = vmatpush1.msra.mxu0 0.0
  %1434 = vmatprep.subr.mxu0 0.0
  %1435 = vmatpush1.msra.mxu0 0.0
  %1436 = vmatprep.subr.mxu0 0.0
  %1437 = vmatpush1.msra.mxu0 0.0
  %1438 = vmatprep.subr.mxu0 0.0
  %1439 = vmatpush1.msra.mxu0 0.0
  %1440 = vmatprep.subr.mxu0 0.0
  %1441 = vmatpush1.msra.mxu0 0.0
  %1442 = vmatprep.subr.mxu0 0.0
  %1443 = vmatpush1.msra.mxu0 0.0
  %1444 = vmatprep.subr.mxu0 0.0
  %1445 = vmatpush1.msra.mxu0 0.0
  %1446 = vmatprep.subr.mxu0 0.0
  %1447 = vmatpush1.msra.mxu0 0.0
  %1448 = vmatprep.subr.mxu0 0.0
  %1449 = vmatpush1.msra.mxu0 0.0
  %1450 = vmatprep.subr.mxu0 0.0
  %1451 = vmatpush1.msra.mxu0 0.0
  %1452 = vmatprep.subr.mxu0 0.0
  %1453 = vmatpush1.msra.mxu0 0.0
  %1454 = vmatprep.subr.mxu0 0.0
  %1455 = vmatpush1.msra.mxu0 0.0
  %1456 = vmatprep.subr.mxu0 0.0
  %1457 = vmatpush1.msra.mxu0 0.0
  %1458 = vmatprep.subr.mxu0 0.0
  %1459 = vmatpush1.msra.mxu0 0.0
  %1460 = vmatprep.subr.mxu0 0.0
  %1461 = vmatpush1.msra.mxu0 0.0
  %1462 = vmatprep.mubr.f32.mxu0 0.0
  %1463 = vmatmul.mubr.f32.gmra.mrb[0].mxu0 %v188
  %v1464 = vpop.f32.mrb[0].mxu0
  %v1465 = vadd.f32 0.0, %v1464
  %v1466 = vpop.f32.mrb[0].mxu0
  %v1467 = vadd.f32 0.0, %v1466
  %1468 = vmatprep.mubr.f32.mxu0 0.0
  %1469 = vmatmul.mubr.f32.gmra.mrb[0].mxu0 %v191
  %v1470 = vpop.f32.mrb[0].mxu0
  %v1471 = vadd.f32 0.0, %v1470
  %v1472 = vpop.f32.mrb[0].mxu0
  %v1473 = vadd.f32 0.0, %v1472
  %1474 = vmatprep.mubr.f32.mxu0 0.0
  %1475 = vmatmul.mubr.f32.gmra.mrb[0].mxu0 %v194
  %v1476 = vpop.f32.mrb[0].mxu0
  %v1477 = vadd.f32 0.0, %v1476
  %v1478 = vpop.f32.mrb[0].mxu0
  %v1479 = vadd.f32 0.0, %v1478
  %1480 = vmatprep.mubr.f32.mxu0 0.0
  %1481 = vmatmul.mubr.f32.gmra.mrb[0].mxu0 %v197
  %v1482 = vpop.f32.mrb[0].mxu0
  %v1483 = vadd.f32 0.0, %v1482
  %v1484 = vpop.f32.mrb[0].mxu0
  %v1485 = vadd.f32 0.0, %v1484
  %1486 = vmatprep.mubr.f32.mxu0 0.0
  %1487 = vmatmul.mubr.f32.gmra.mrb[0].mxu0 %v200
  %v1488 = vpop.f32.mrb[0].mxu0
  %v1489 = vadd.f32 0.0, %v1488
  %v1490 = vpop.f32.mrb[0].mxu0
  %v1491 = vadd.f32 0.0, %v1490
  %1492 = vmatprep.mubr.f32.mxu0 0.0
  %1493 = vmatmul.mubr.f32.gmra.mrb[0].mxu0 %v203
  %v1494 = vpop.f32.mrb[0].mxu0
  %v1495 = vadd.f32 0.0, %v1494
  %v1496 = vpop.f32.mrb[0].mxu0
  %v1497 = vadd.f32 0.0, %v1496
  %1498 = vmatprep.mubr.f32.mxu0 0.0
  %1499 = vmatmul.mubr.f32.gmra.mrb[0].mxu0 %v206
  %v1500 = vpop.f32.mrb[0].mxu0
  %v1501 = vadd.f32 0.0, %v1500
  %v1502 = vpop.f32.mrb[0].mxu0
  %v1503 = vadd.f32 0.0, %v1502
  %1504 = vmatprep.mubr.f32.mxu0 0.0
  %1505 = vmatmul.mubr.f32.gmra.mrb[0].mxu0 %v209
  %v1506 = vpop.f32.mrb[0].mxu0
  %v1507 = vadd.f32 0.0, %v1506
  %v1508 = vpop.f32.mrb[0].mxu0
  %v1509 = vadd.f32 0.0, %v1508
  %1510 = vdwg.mxu0
  %v1511 = vpack.c.bf16 %v1471, %v1465
  %v1512 = vpack.c.bf16 %v1473, %v1467
  %v1513 = vpack.c.bf16 %v1483, %v1477
  %v1514 = vpack.c.bf16 %v1485, %v1479
  %v1515 = vpack.c.bf16 %v1495, %v1489
  %v1516 = vpack.c.bf16 %v1497, %v1491
  %v1517 = vpack.c.bf16 %v1507, %v1501
  %v1518 = vpack.c.bf16 %v1509, %v1503
  %1519 = vmatprep.subr.bf16.mxu0 %v764
  %1520 = vmatpush1.bf16.msra.mxu0 %v763
  %1521 = vmatprep.subr.bf16.mxu0 %v772
  %1522 = vmatpush1.bf16.msra.mxu0 %v771
  %1523 = vmatprep.subr.bf16.mxu0 %v780
  %1524 = vmatpush1.bf16.msra.mxu0 %v779
  %1525 = vmatprep.subr.bf16.mxu0 %v788
  %1526 = vmatpush1.bf16.msra.mxu0 %v787
  %1527 = vmatprep.subr.bf16.mxu0 %v796
  %1528 = vmatpush1.bf16.msra.mxu0 %v795
  %1529 = vmatprep.subr.bf16.mxu0 %v804
  %1530 = vmatpush1.bf16.msra.mxu0 %v803
  %1531 = vmatprep.subr.bf16.mxu0 %v812
  %1532 = vmatpush1.bf16.msra.mxu0 %v811
  %1533 = vmatprep.subr.bf16.mxu0 %v820
  %1534 = vmatpush1.bf16.msra.mxu0 %v819
  %1535 = vmatprep.subr.bf16.mxu0 %v828
  %1536 = vmatpush1.bf16.msra.mxu0 %v827
  %1537 = vmatprep.subr.bf16.mxu0 %v836
  %1538 = vmatpush1.bf16.msra.mxu0 %v835
  %1539 = vmatprep.subr.bf16.mxu0 %v844
  %1540 = vmatpush1.bf16.msra.mxu0 %v843
  %1541 = vmatprep.subr.bf16.mxu0 %v852
  %1542 = vmatpush1.bf16.msra.mxu0 %v851
  %1543 = vmatprep.subr.bf16.mxu0 %v860
  %1544 = vmatpush1.bf16.msra.mxu0 %v859
  %1545 = vmatprep.subr.bf16.mxu0 %v868
  %1546 = vmatpush1.bf16.msra.mxu0 %v867
  %1547 = vmatprep.subr.bf16.mxu0 %v876
  %1548 = vmatpush1.bf16.msra.mxu0 %v875
  %1549 = vmatprep.subr.bf16.mxu0 %v884
  %1550 = vmatpush1.bf16.msra.mxu0 %v883
  %1551 = vmatprep.mubr.bf16.mxu0 %v1512
  %1552 = vmatmul.mubr.bf16.gmra.mrb[0].mxu0 %v1511
  %v1553 = vpop.f32.mrb[0].mxu0
  %v1554 = vadd.f32 %v342, %v1553
  %v1555 = vpop.f32.mrb[0].mxu0
  %v1556 = vadd.f32 %v342, %v1555
  %v1557 = vpop.f32.mrb[0].mxu0
  %v1558 = vadd.f32 %v347, %v1557
  %v1559 = vpop.f32.mrb[0].mxu0
  %v1560 = vadd.f32 %v347, %v1559
  %1561 = vmatprep.mubr.bf16.mxu0 %v1514
  %1562 = vmatmul.mubr.bf16.gmra.mrb[0].mxu0 %v1513
  %v1563 = vpop.f32.mrb[0].mxu0
  %v1564 = vadd.f32 %v352, %v1563
  %v1565 = vpop.f32.mrb[0].mxu0
  %v1566 = vadd.f32 %v352, %v1565
  %v1567 = vpop.f32.mrb[0].mxu0
  %v1568 = vadd.f32 %v357, %v1567
  %v1569 = vpop.f32.mrb[0].mxu0
  %v1570 = vadd.f32 %v357, %v1569
  %1571 = vmatprep.mubr.bf16.mxu0 %v1516
  %1572 = vmatmul.mubr.bf16.gmra.mrb[0].mxu0 %v1515
  %v1573 = vpop.f32.mrb[0].mxu0
  %v1574 = vadd.f32 %v362, %v1573
  %v1575 = vpop.f32.mrb[0].mxu0
  %v1576 = vadd.f32 %v362, %v1575
  %v1577 = vpop.f32.mrb[0].mxu0
  %v1578 = vadd.f32 %v367, %v1577
  %v1579 = vpop.f32.mrb[0].mxu0
  %v1580 = vadd.f32 %v367, %v1579
  %1581 = vmatprep.mubr.bf16.mxu0 %v1518
  %1582 = vmatmul.mubr.bf16.gmra.mrb[0].mxu0 %v1517
  %v1583 = vpop.f32.mrb[0].mxu0
  %v1584 = vadd.f32 %v372, %v1583
  %v1585 = vpop.f32.mrb[0].mxu0
  %v1586 = vadd.f32 %v372, %v1585
  %v1587 = vpop.f32.mrb[0].mxu0
  %v1588 = vadd.f32 %v377, %v1587
  %v1589 = vpop.f32.mrb[0].mxu0
  %v1590 = vadd.f32 %v377, %v1589
  %1591 = vdwg.mxu0
  %1592 = vmatprep.subr.bf16.mxu0 %v766
  %1593 = vmatpush1.bf16.msra.mxu0 %v765
  %1594 = vmatprep.subr.bf16.mxu0 %v774
  %1595 = vmatpush1.bf16.msra.mxu0 %v773
  %1596 = vmatprep.subr.bf16.mxu0 %v782
  %1597 = vmatpush1.bf16.msra.mxu0 %v781
  %1598 = vmatprep.subr.bf16.mxu0 %v790
  %1599 = vmatpush1.bf16.msra.mxu0 %v789
  %1600 = vmatprep.subr.bf16.mxu0 %v798
  %1601 = vmatpush1.bf16.msra.mxu0 %v797
  %1602 = vmatprep.subr.bf16.mxu0 %v806
  %1603 = vmatpush1.bf16.msra.mxu0 %v805
  %1604 = vmatprep.subr.bf16.mxu0 %v814
  %1605 = vmatpush1.bf16.msra.mxu0 %v813
  %1606 = vmatprep.subr.bf16.mxu0 %v822
  %1607 = vmatpush1.bf16.msra.mxu0 %v821
  %1608 = vmatprep.subr.bf16.mxu0 %v830
  %1609 = vmatpush1.bf16.msra.mxu0 %v829
  %1610 = vmatprep.subr.bf16.mxu0 %v838
  %1611 = vmatpush1.bf16.msra.mxu0 %v837
  %1612 = vmatprep.subr.bf16.mxu0 %v846
  %1613 = vmatpush1.bf16.msra.mxu0 %v845
  %1614 = vmatprep.subr.bf16.mxu0 %v854
  %1615 = vmatpush1.bf16.msra.mxu0 %v853
  %1616 = vmatprep.subr.bf16.mxu0 %v862
  %1617 = vmatpush1.bf16.msra.mxu0 %v861
  %1618 = vmatprep.subr.bf16.mxu0 %v870
  %1619 = vmatpush1.bf16.msra.mxu0 %v869
  %1620 = vmatprep.subr.bf16.mxu0 %v878
  %1621 = vmatpush1.bf16.msra.mxu0 %v877
  %1622 = vmatprep.subr.bf16.mxu0 %v886
  %1623 = vmatpush1.bf16.msra.mxu0 %v885
  %1624 = vmatprep.mubr.bf16.mxu0 %v1512
  %1625 = vmatmul.mubr.bf16.gmra.mrb[0].mxu0 %v1511
  %v1626 = vpop.f32.mrb[0].mxu0
  %v1627 = vadd.f32 %v342, %v1626
  %v1628 = vpop.f32.mrb[0].mxu0
  %v1629 = vadd.f32 %v342, %v1628
  %v1630 = vpop.f32.mrb[0].mxu0
  %v1631 = vadd.f32 %v347, %v1630
  %v1632 = vpop.f32.mrb[0].mxu0
  %v1633 = vadd.f32 %v347, %v1632
  %1634 = vmatprep.mubr.bf16.mxu0 %v1514
  %1635 = vmatmul.mubr.bf16.gmra.mrb[0].mxu0 %v1513
  %v1636 = vpop.f32.mrb[0].mxu0
  %v1637 = vadd.f32 %v352, %v1636
  %v1638 = vpop.f32.mrb[0].mxu0
  %v1639 = vadd.f32 %v352, %v1638
  %v1640 = vpop.f32.mrb[0].mxu0
  %v1641 = vadd.f32 %v357, %v1640
  %v1642 = vpop.f32.mrb[0].mxu0
  %v1643 = vadd.f32 %v357, %v1642
  %1644 = vmatprep.mubr.bf16.mxu0 %v1516
  %1645 = vmatmul.mubr.bf16.gmra.mrb[0].mxu0 %v1515
  %v1646 = vpop.f32.mrb[0].mxu0
  %v1647 = vadd.f32 %v362, %v1646
  %v1648 = vpop.f32.mrb[0].mxu0
  %v1649 = vadd.f32 %v362, %v1648
  %v1650 = vpop.f32.mrb[0].mxu0
  %v1651 = vadd.f32 %v367, %v1650
  %v1652 = vpop.f32.mrb[0].mxu0
  %v1653 = vadd.f32 %v367, %v1652
  %1654 = vmatprep.mubr.bf16.mxu0 %v1518
  %1655 = vmatmul.mubr.bf16.gmra.mrb[0].mxu0 %v1517
  %v1656 = vpop.f32.mrb[0].mxu0
  %v1657 = vadd.f32 %v372, %v1656
  %v1658 = vpop.f32.mrb[0].mxu0
  %v1659 = vadd.f32 %v372, %v1658
  %v1660 = vpop.f32.mrb[0].mxu0
  %v1661 = vadd.f32 %v377, %v1660
  %v1662 = vpop.f32.mrb[0].mxu0
  %v1663 = vadd.f32 %v377, %v1662
  %1664 = vdwg.mxu0
  %1665 = vmatprep.subr.bf16.mxu0 %v768
  %1666 = vmatpush1.bf16.msra.mxu0 %v767
  %1667 = vmatprep.subr.bf16.mxu0 %v776
  %1668 = vmatpush1.bf16.msra.mxu0 %v775
  %1669 = vmatprep.subr.bf16.mxu0 %v784
  %1670 = vmatpush1.bf16.msra.mxu0 %v783
  %1671 = vmatprep.subr.bf16.mxu0 %v792
  %1672 = vmatpush1.bf16.msra.mxu0 %v791
  %1673 = vmatprep.subr.bf16.mxu0 %v800
  %1674 = vmatpush1.bf16.msra.mxu0 %v799
  %1675 = vmatprep.subr.bf16.mxu0 %v808
  %1676 = vmatpush1.bf16.msra.mxu0 %v807
  %1677 = vmatprep.subr.bf16.mxu0 %v816
  %1678 = vmatpush1.bf16.msra.mxu0 %v815
  %1679 = vmatprep.subr.bf16.mxu0 %v824
  %1680 = vmatpush1.bf16.msra.mxu0 %v823
  %1681 = vmatprep.subr.bf16.mxu0 %v832
  %1682 = vmatpush1.bf16.msra.mxu0 %v831
  %1683 = vmatprep.subr.bf16.mxu0 %v840
  %1684 = vmatpush1.bf16.msra.mxu0 %v839
  %1685 = vmatprep.subr.bf16.mxu0 %v848
  %1686 = vmatpush1.bf16.msra.mxu0 %v847
  %1687 = vmatprep.subr.bf16.mxu0 %v856
  %1688 = vmatpush1.bf16.msra.mxu0 %v855
  %1689 = vmatprep.subr.bf16.mxu0 %v864
  %1690 = vmatpush1.bf16.msra.mxu0 %v863
  %1691 = vmatprep.subr.bf16.mxu0 %v872
  %1692 = vmatpush1.bf16.msra.mxu0 %v871
  %1693 = vmatprep.subr.bf16.mxu0 %v880
  %1694 = vmatpush1.bf16.msra.mxu0 %v879
  %1695 = vmatprep.subr.bf16.mxu0 %v888
  %1696 = vmatpush1.bf16.msra.mxu0 %v887
  %1697 = vmatprep.mubr.bf16.mxu0 %v1512
  %1698 = vmatmul.mubr.bf16.gmra.mrb[0].mxu0 %v1511
  %v1699 = vpop.f32.mrb[0].mxu0
  %v1700 = vadd.f32 %v342, %v1699
  %v1701 = vpop.f32.mrb[0].mxu0
  %v1702 = vadd.f32 %v342, %v1701
  %v1703 = vpop.f32.mrb[0].mxu0
  %v1704 = vadd.f32 %v347, %v1703
  %v1705 = vpop.f32.mrb[0].mxu0
  %v1706 = vadd.f32 %v347, %v1705
  %1707 = vmatprep.mubr.bf16.mxu0 %v1514
  %1708 = vmatmul.mubr.bf16.gmra.mrb[0].mxu0 %v1513
  %v1709 = vpop.f32.mrb[0].mxu0
  %v1710 = vadd.f32 %v352, %v1709
  %v1711 = vpop.f32.mrb[0].mxu0
  %v1712 = vadd.f32 %v352, %v1711
  %v1713 = vpop.f32.mrb[0].mxu0
  %v1714 = vadd.f32 %v357, %v1713
  %v1715 = vpop.f32.mrb[0].mxu0
  %v1716 = vadd.f32 %v357, %v1715
  %1717 = vmatprep.mubr.bf16.mxu0 %v1516
  %1718 = vmatmul.mubr.bf16.gmra.mrb[0].mxu0 %v1515
  %v1719 = vpop.f32.mrb[0].mxu0
  %v1720 = vadd.f32 %v362, %v1719
  %v1721 = vpop.f32.mrb[0].mxu0
  %v1722 = vadd.f32 %v362, %v1721
  %v1723 = vpop.f32.mrb[0].mxu0
  %v1724 = vadd.f32 %v367, %v1723
  %v1725 = vpop.f32.mrb[0].mxu0
  %v1726 = vadd.f32 %v367, %v1725
  %1727 = vmatprep.mubr.bf16.mxu0 %v1518
  %1728 = vmatmul.mubr.bf16.gmra.mrb[0].mxu0 %v1517
  %v1729 = vpop.f32.mrb[0].mxu0
  %v1730 = vadd.f32 %v372, %v1729
  %v1731 = vpop.f32.mrb[0].mxu0
  %v1732 = vadd.f32 %v372, %v1731
  %v1733 = vpop.f32.mrb[0].mxu0
  %v1734 = vadd.f32 %v377, %v1733
  %v1735 = vpop.f32.mrb[0].mxu0
  %v1736 = vadd.f32 %v377, %v1735
  %1737 = vdwg.mxu0
  %1738 = vmatprep.subr.bf16.mxu0 %v770
  %1739 = vmatpush1.bf16.msra.mxu0 %v769
  %1740 = vmatprep.subr.bf16.mxu0 %v778
  %1741 = vmatpush1.bf16.msra.mxu0 %v777
  %1742 = vmatprep.subr.bf16.mxu0 %v786
  %1743 = vmatpush1.bf16.msra.mxu0 %v785
  %1744 = vmatprep.subr.bf16.mxu0 %v794
  %1745 = vmatpush1.bf16.msra.mxu0 %v793
  %1746 = vmatprep.subr.bf16.mxu0 %v802
  %1747 = vmatpush1.bf16.msra.mxu0 %v801
  %1748 = vmatprep.subr.bf16.mxu0 %v810
  %1749 = vmatpush1.bf16.msra.mxu0 %v809
  %1750 = vmatprep.subr.bf16.mxu0 %v818
  %1751 = vmatpush1.bf16.msra.mxu0 %v817
  %1752 = vmatprep.subr.bf16.mxu0 %v826
  %1753 = vmatpush1.bf16.msra.mxu0 %v825
  %1754 = vmatprep.subr.bf16.mxu0 %v834
  %1755 = vmatpush1.bf16.msra.mxu0 %v833
  %1756 = vmatprep.subr.bf16.mxu0 %v842
  %1757 = vmatpush1.bf16.msra.mxu0 %v841
  %1758 = vmatprep.subr.bf16.mxu0 %v850
  %1759 = vmatpush1.bf16.msra.mxu0 %v849
  %1760 = vmatprep.subr.bf16.mxu0 %v858
  %1761 = vmatpush1.bf16.msra.mxu0 %v857
  %1762 = vmatprep.subr.bf16.mxu0 %v866
  %1763 = vmatpush1.bf16.msra.mxu0 %v865
  %1764 = vmatprep.subr.bf16.mxu0 %v874
  %1765 = vmatpush1.bf16.msra.mxu0 %v873
  %1766 = vmatprep.subr.bf16.mxu0 %v882
  %1767 = vmatpush1.bf16.msra.mxu0 %v881
  %1768 = vmatprep.subr.bf16.mxu0 %v890
  %1769 = vmatpush1.bf16.msra.mxu0 %v889
  %1770 = vmatprep.mubr.bf16.mxu0 %v1512
  %1771 = vmatmul.mubr.bf16.gmra.mrb[0].mxu0 %v1511
  %v1772 = vpop.f32.mrb[0].mxu0
  %v1773 = vadd.f32 %v342, %v1772
  %v1774 = vpop.f32.mrb[0].mxu0
  %v1775 = vadd.f32 %v342, %v1774
  %v1776 = vpop.f32.mrb[0].mxu0
  %v1777 = vadd.f32 %v347, %v1776
  %v1778 = vpop.f32.mrb[0].mxu0
  %v1779 = vadd.f32 %v347, %v1778
  %1780 = vmatprep.mubr.bf16.mxu0 %v1514
  %1781 = vmatmul.mubr.bf16.gmra.mrb[0].mxu0 %v1513
  %v1782 = vpop.f32.mrb[0].mxu0
  %v1783 = vadd.f32 %v352, %v1782
  %v1784 = vpop.f32.mrb[0].mxu0
  %v1785 = vadd.f32 %v352, %v1784
  %v1786 = vpop.f32.mrb[0].mxu0
  %v1787 = vadd.f32 %v357, %v1786
  %v1788 = vpop.f32.mrb[0].mxu0
  %v1789 = vadd.f32 %v357, %v1788
  %1790 = vmatprep.mubr.bf16.mxu0 %v1516
  %1791 = vmatmul.mubr.bf16.gmra.mrb[0].mxu0 %v1515
  %v1792 = vpop.f32.mrb[0].mxu0
  %v1793 = vadd.f32 %v362, %v1792
  %v1794 = vpop.f32.mrb[0].mxu0
  %v1795 = vadd.f32 %v362, %v1794
  %v1796 = vpop.f32.mrb[0].mxu0
  %v1797 = vadd.f32 %v367, %v1796
  %v1798 = vpop.f32.mrb[0].mxu0
  %v1799 = vadd.f32 %v367, %v1798
  %1800 = vmatprep.mubr.bf16.mxu0 %v1518
  %1801 = vmatmul.mubr.bf16.gmra.mrb[0].mxu0 %v1517
  %v1802 = vpop.f32.mrb[0].mxu0
  %v1803 = vadd.f32 %v372, %v1802
  %v1804 = vpop.f32.mrb[0].mxu0
  %v1805 = vadd.f32 %v372, %v1804
  %v1806 = vpop.f32.mrb[0].mxu0
  %v1807 = vadd.f32 %v377, %v1806
  %v1808 = vpop.f32.mrb[0].mxu0
  %v1809 = vadd.f32 %v377, %v1808
  %1810 = vdwg.mxu0
  %s1811 = scalar_lea.vmem %s7, 512
  %1812 = vst [vmem:[%s1811] sm:$0xff] %v1554
  %1813 = vst [vmem:[%s1811 + $0x8] sm:$0xff] %v1556
  %1814 = vst [vmem:[%s1811 + $0x10] sm:$0xff] %v1627
  %1815 = vst [vmem:[%s1811 + $0x18] sm:$0xff] %v1629
  %1816 = vst [vmem:[%s1811 + $0x20] sm:$0xff] %v1700
  %1817 = vst [vmem:[%s1811 + $0x28] sm:$0xff] %v1702
  %1818 = vst [vmem:[%s1811 + $0x30] sm:$0xff] %v1773
  %1819 = vst [vmem:[%s1811 + $0x38] sm:$0xff] %v1775
  %1820 = vst [vmem:[%s1811 + $0x40] sm:$0xff] %v1558
  %1821 = vst [vmem:[%s1811 + $0x48] sm:$0xff] %v1560
  %1822 = vst [vmem:[%s1811 + $0x50] sm:$0xff] %v1631
  %1823 = vst [vmem:[%s1811 + $0x58] sm:$0xff] %v1633
  %1824 = vst [vmem:[%s1811 + $0x60] sm:$0xff] %v1704
  %1825 = vst [vmem:[%s1811 + $0x68] sm:$0xff] %v1706
  %1826 = vst [vmem:[%s1811 + $0x70] sm:$0xff] %v1777
  %1827 = vst [vmem:[%s1811 + $0x78] sm:$0xff] %v1779
  %1828 = vst [vmem:[%s1811 + $0x80] sm:$0xff] %v1564
  %1829 = vst [vmem:[%s1811 + $0x88] sm:$0xff] %v1566
  %1830 = vst [vmem:[%s1811 + $0x90] sm:$0xff] %v1637
  %1831 = vst [vmem:[%s1811 + $0x98] sm:$0xff] %v1639
  %1832 = vst [vmem:[%s1811 + $0xa0] sm:$0xff] %v1710
  %1833 = vst [vmem:[%s1811 + $0xa8] sm:$0xff] %v1712
  %1834 = vst [vmem:[%s1811 + $0xb0] sm:$0xff] %v1783
  %1835 = vst [vmem:[%s1811 + $0xb8] sm:$0xff] %v1785
  %1836 = vst [vmem:[%s1811 + $0xc0] sm:$0xff] %v1568
  %1837 = vst [vmem:[%s1811 + $0xc8] sm:$0xff] %v1570
  %1838 = vst [vmem:[%s1811 + $0xd0] sm:$0xff] %v1641
  %1839 = vst [vmem:[%s1811 + $0xd8] sm:$0xff] %v1643
  %1840 = vst [vmem:[%s1811 + $0xe0] sm:$0xff] %v1714
  %1841 = vst [vmem:[%s1811 + $0xe8] sm:$0xff] %v1716
  %1842 = vst [vmem:[%s1811 + $0xf0] sm:$0xff] %v1787
  %1843 = vst [vmem:[%s1811 + $0xf8] sm:$0xff] %v1789
  %1844 = vst [vmem:[%s1811 + $0x100] sm:$0xff] %v1574
  %1845 = vst [vmem:[%s1811 + $0x108] sm:$0xff] %v1576
  %1846 = vst [vmem:[%s1811 + $0x110] sm:$0xff] %v1647
  %1847 = vst [vmem:[%s1811 + $0x118] sm:$0xff] %v1649
  %1848 = vst [vmem:[%s1811 + $0x120] sm:$0xff] %v1720
  %1849 = vst [vmem:[%s1811 + $0x128] sm:$0xff] %v1722
  %1850 = vst [vmem:[%s1811 + $0x130] sm:$0xff] %v1793
  %1851 = vst [vmem:[%s1811 + $0x138] sm:$0xff] %v1795
  %1852 = vst [vmem:[%s1811 + $0x140] sm:$0xff] %v1578
  %1853 = vst [vmem:[%s1811 + $0x148] sm:$0xff] %v1580
  %1854 = vst [vmem:[%s1811 + $0x150] sm:$0xff] %v1651
  %1855 = vst [vmem:[%s1811 + $0x158] sm:$0xff] %v1653
  %1856 = vst [vmem:[%s1811 + $0x160] sm:$0xff] %v1724
  %1857 = vst [vmem:[%s1811 + $0x168] sm:$0xff] %v1726
  %1858 = vst [vmem:[%s1811 + $0x170] sm:$0xff] %v1797
  %1859 = vst [vmem:[%s1811 + $0x178] sm:$0xff] %v1799
  %1860 = vst [vmem:[%s1811 + $0x180] sm:$0xff] %v1584
  %1861 = vst [vmem:[%s1811 + $0x188] sm:$0xff] %v1586
  %1862 = vst [vmem:[%s1811 + $0x190] sm:$0xff] %v1657
  %1863 = vst [vmem:[%s1811 + $0x198] sm:$0xff] %v1659
  %1864 = vst [vmem:[%s1811 + $0x1a0] sm:$0xff] %v1730
  %1865 = vst [vmem:[%s1811 + $0x1a8] sm:$0xff] %v1732
  %1866 = vst [vmem:[%s1811 + $0x1b0] sm:$0xff] %v1803
  %1867 = vst [vmem:[%s1811 + $0x1b8] sm:$0xff] %v1805
  %1868 = vst [vmem:[%s1811 + $0x1c0] sm:$0x3f] %v1588
  %1869 = vst [vmem:[%s1811 + $0x1c8] sm:$0x3f] %v1590
  %1870 = vst [vmem:[%s1811 + $0x1d0] sm:$0x3f] %v1661
  %1871 = vst [vmem:[%s1811 + $0x1d8] sm:$0x3f] %v1663
  %1872 = vst [vmem:[%s1811 + $0x1e0] sm:$0x3f] %v1734
  %1873 = vst [vmem:[%s1811 + $0x1e8] sm:$0x3f] %v1736
  %1874 = vst [vmem:[%s1811 + $0x1f0] sm:$0x3f] %v1807
  %1875 = vst [vmem:[%s1811 + $0x1f8] sm:$0x3f] %v1809
  %v1876 = vld [vmem:[%s7] sm:$0xff]
  %v1877 = vld [vmem:[%s7 + $0x8] sm:$0xff]
  %v1878 = vld [vmem:[%s7 + $0x10] sm:$0xff]
  %v1879 = vld [vmem:[%s7 + $0x18] sm:$0xff]
  %v1880 = vld [vmem:[%s7 + $0x20] sm:$0xff]
  %v1881 = vld [vmem:[%s7 + $0x28] sm:$0xff]
  %v1882 = vld [vmem:[%s7 + $0x30] sm:$0xff]
  %v1883 = vld [vmem:[%s7 + $0x38] sm:$0xff]
  %v1884 = vld [vmem:[%s7 + $0x40] sm:$0xff]
  %v1885 = vld [vmem:[%s7 + $0x48] sm:$0xff]
  %v1886 = vld [vmem:[%s7 + $0x50] sm:$0xff]
  %v1887 = vld [vmem:[%s7 + $0x58] sm:$0xff]
  %v1888 = vld [vmem:[%s7 + $0x60] sm:$0xff]
  %v1889 = vld [vmem:[%s7 + $0x68] sm:$0xff]
  %v1890 = vld [vmem:[%s7 + $0x70] sm:$0xff]
  %v1891 = vld [vmem:[%s7 + $0x78] sm:$0xff]
  %v1892 = vld [vmem:[%s7 + $0x80] sm:$0xff]
  %v1893 = vld [vmem:[%s7 + $0x88] sm:$0xff]
  %v1894 = vld [vmem:[%s7 + $0x90] sm:$0xff]
  %v1895 = vld [vmem:[%s7 + $0x98] sm:$0xff]
  %v1896 = vld [vmem:[%s7 + $0xa0] sm:$0xff]
  %v1897 = vld [vmem:[%s7 + $0xa8] sm:$0xff]
  %v1898 = vld [vmem:[%s7 + $0xb0] sm:$0xff]
  %v1899 = vld [vmem:[%s7 + $0xb8] sm:$0xff]
  %v1900 = vld [vmem:[%s7 + $0xc0] sm:$0xff]
  %v1901 = vld [vmem:[%s7 + $0xc8] sm:$0xff]
  %v1902 = vld [vmem:[%s7 + $0xd0] sm:$0xff]
  %v1903 = vld [vmem:[%s7 + $0xd8] sm:$0xff]
  %v1904 = vld [vmem:[%s7 + $0xe0] sm:$0xff]
  %v1905 = vld [vmem:[%s7 + $0xe8] sm:$0xff]
  %v1906 = vld [vmem:[%s7 + $0xf0] sm:$0xff]
  %v1907 = vld [vmem:[%s7 + $0xf8] sm:$0xff]
  %v1908 = vld [vmem:[%s7 + $0x100] sm:$0xff]
  %v1909 = vld [vmem:[%s7 + $0x108] sm:$0xff]
  %v1910 = vld [vmem:[%s7 + $0x110] sm:$0xff]
  %v1911 = vld [vmem:[%s7 + $0x118] sm:$0xff]
  %v1912 = vld [vmem:[%s7 + $0x120] sm:$0xff]
  %v1913 = vld [vmem:[%s7 + $0x128] sm:$0xff]
  %v1914 = vld [vmem:[%s7 + $0x130] sm:$0xff]
  %v1915 = vld [vmem:[%s7 + $0x138] sm:$0xff]
  %v1916 = vld [vmem:[%s7 + $0x140] sm:$0xff]
  %v1917 = vld [vmem:[%s7 + $0x148] sm:$0xff]
  %v1918 = vld [vmem:[%s7 + $0x150] sm:$0xff]
  %v1919 = vld [vmem:[%s7 + $0x158] sm:$0xff]
  %v1920 = vld [vmem:[%s7 + $0x160] sm:$0xff]
  %v1921 = vld [vmem:[%s7 + $0x168] sm:$0xff]
  %v1922 = vld [vmem:[%s7 + $0x170] sm:$0xff]
  %v1923 = vld [vmem:[%s7 + $0x178] sm:$0xff]
  %v1924 = vld [vmem:[%s7 + $0x180] sm:$0xff]
  %v1925 = vld [vmem:[%s7 + $0x188] sm:$0xff]
  %v1926 = vld [vmem:[%s7 + $0x190] sm:$0xff]
  %v1927 = vld [vmem:[%s7 + $0x198] sm:$0xff]
  %v1928 = vld [vmem:[%s7 + $0x1a0] sm:$0xff]
  %v1929 = vld [vmem:[%s7 + $0x1a8] sm:$0xff]
  %v1930 = vld [vmem:[%s7 + $0x1b0] sm:$0xff]
  %v1931 = vld [vmem:[%s7 + $0x1b8] sm:$0xff]
  %v1932 = vld [vmem:[%s7 + $0x1c0] sm:$0x3f]
  %v1933 = vld [vmem:[%s7 + $0x1c8] sm:$0x3f]
  %v1934 = vld [vmem:[%s7 + $0x1d0] sm:$0x3f]
  %v1935 = vld [vmem:[%s7 + $0x1d8] sm:$0x3f]
  %v1936 = vld [vmem:[%s7 + $0x1e0] sm:$0x3f]
  %v1937 = vld [vmem:[%s7 + $0x1e8] sm:$0x3f]
  %v1938 = vld [vmem:[%s7 + $0x1f0] sm:$0x3f]
  %v1939 = vld [vmem:[%s7 + $0x1f8] sm:$0x3f]
  %v1940 = vld [vmem:[%s7 + $0x200] sm:$0xff]
  %v1941 = vld [vmem:[%s7 + $0x208] sm:$0xff]
  %v1942 = vld [vmem:[%s7 + $0x210] sm:$0xff]
  %v1943 = vld [vmem:[%s7 + $0x218] sm:$0xff]
  %v1944 = vld [vmem:[%s7 + $0x220] sm:$0xff]
  %v1945 = vld [vmem:[%s7 + $0x228] sm:$0xff]
  %v1946 = vld [vmem:[%s7 + $0x230] sm:$0xff]
  %v1947 = vld [vmem:[%s7 + $0x238] sm:$0xff]
  %v1948 = vld [vmem:[%s7 + $0x240] sm:$0xff]
  %v1949 = vld [vmem:[%s7 + $0x248] sm:$0xff]
  %v1950 = vld [vmem:[%s7 + $0x250] sm:$0xff]
  %v1951 = vld [vmem:[%s7 + $0x258] sm:$0xff]
  %v1952 = vld [vmem:[%s7 + $0x260] sm:$0xff]
  %v1953 = vld [vmem:[%s7 + $0x268] sm:$0xff]
  %v1954 = vld [vmem:[%s7 + $0x270] sm:$0xff]
  %v1955 = vld [vmem:[%s7 + $0x278] sm:$0xff]
  %v1956 = vld [vmem:[%s7 + $0x280] sm:$0xff]
  %v1957 = vld [vmem:[%s7 + $0x288] sm:$0xff]
  %v1958 = vld [vmem:[%s7 + $0x290] sm:$0xff]
  %v1959 = vld [vmem:[%s7 + $0x298] sm:$0xff]
  %v1960 = vld [vmem:[%s7 + $0x2a0] sm:$0xff]
  %v1961 = vld [vmem:[%s7 + $0x2a8] sm:$0xff]
  %v1962 = vld [vmem:[%s7 + $0x2b0] sm:$0xff]
  %v1963 = vld [vmem:[%s7 + $0x2b8] sm:$0xff]
  %v1964 = vld [vmem:[%s7 + $0x2c0] sm:$0xff]
  %v1965 = vld [vmem:[%s7 + $0x2c8] sm:$0xff]
  %v1966 = vld [vmem:[%s7 + $0x2d0] sm:$0xff]
  %v1967 = vld [vmem:[%s7 + $0x2d8] sm:$0xff]
  %v1968 = vld [vmem:[%s7 + $0x2e0] sm:$0xff]
  %v1969 = vld [vmem:[%s7 + $0x2e8] sm:$0xff]
  %v1970 = vld [vmem:[%s7 + $0x2f0] sm:$0xff]
  %v1971 = vld [vmem:[%s7 + $0x2f8] sm:$0xff]
  %v1972 = vld [vmem:[%s7 + $0x300] sm:$0xff]
  %v1973 = vld [vmem:[%s7 + $0x308] sm:$0xff]
  %v1974 = vld [vmem:[%s7 + $0x310] sm:$0xff]
  %v1975 = vld [vmem:[%s7 + $0x318] sm:$0xff]
  %v1976 = vld [vmem:[%s7 + $0x320] sm:$0xff]
  %v1977 = vld [vmem:[%s7 + $0x328] sm:$0xff]
  %v1978 = vld [vmem:[%s7 + $0x330] sm:$0xff]
  %v1979 = vld [vmem:[%s7 + $0x338] sm:$0xff]
  %v1980 = vld [vmem:[%s7 + $0x340] sm:$0xff]
  %v1981 = vld [vmem:[%s7 + $0x348] sm:$0xff]
  %v1982 = vld [vmem:[%s7 + $0x350] sm:$0xff]
  %v1983 = vld [vmem:[%s7 + $0x358] sm:$0xff]
  %v1984 = vld [vmem:[%s7 + $0x360] sm:$0xff]
  %v1985 = vld [vmem:[%s7 + $0x368] sm:$0xff]
  %v1986 = vld [vmem:[%s7 + $0x370] sm:$0xff]
  %v1987 = vld [vmem:[%s7 + $0x378] sm:$0xff]
  %v1988 = vld [vmem:[%s7 + $0x380] sm:$0xff]
  %v1989 = vld [vmem:[%s7 + $0x388] sm:$0xff]
  %v1990 = vld [vmem:[%s7 + $0x390] sm:$0xff]
  %v1991 = vld [vmem:[%s7 + $0x398] sm:$0xff]
  %v1992 = vld [vmem:[%s7 + $0x3a0] sm:$0xff]
  %v1993 = vld [vmem:[%s7 + $0x3a8] sm:$0xff]
  %v1994 = vld [vmem:[%s7 + $0x3b0] sm:$0xff]
  %v1995 = vld [vmem:[%s7 + $0x3b8] sm:$0xff]
  %v1996 = vld [vmem:[%s7 + $0x3c0] sm:$0x3f]
  %v1997 = vld [vmem:[%s7 + $0x3c8] sm:$0x3f]
  %v1998 = vld [vmem:[%s7 + $0x3d0] sm:$0x3f]
  %v1999 = vld [vmem:[%s7 + $0x3d8] sm:$0x3f]
  %v2000 = vld [vmem:[%s7 + $0x3e0] sm:$0x3f]
  %v2001 = vld [vmem:[%s7 + $0x3e8] sm:$0x3f]
  %v2002 = vld [vmem:[%s7 + $0x3f0] sm:$0x3f]
  %v2003 = vld [vmem:[%s7 + $0x3f8] sm:$0x3f]
  %v2004 = vadd.f32 %v1876, %v1877
  %v2005 = vadd.f32 %v2004, %v1878
  %v2006 = vadd.f32 %v2005, %v1879
  %v2007 = vadd.f32 %v2006, %v1880
  %v2008 = vadd.f32 %v2007, %v1881
  %v2009 = vadd.f32 %v2008, %v1882
  %v2010 = vadd.f32 %v2009, %v1883
  %2011 = vadd.xlane.f32.xlu0 %v2010
  %v2012 = vpop.xlane.xlu0 %2011
  %v2013 = vadd.f32 %v1884, %v1885
  %v2014 = vadd.f32 %v2013, %v1886
  %v2015 = vadd.f32 %v2014, %v1887
  %v2016 = vadd.f32 %v2015, %v1888
  %v2017 = vadd.f32 %v2016, %v1889
  %v2018 = vadd.f32 %v2017, %v1890
  %v2019 = vadd.f32 %v2018, %v1891
  %2020 = vadd.xlane.f32.xlu0 %v2019
  %v2021 = vpop.xlane.xlu0 %2020
  %v2022 = vadd.f32 %v1892, %v1893
  %v2023 = vadd.f32 %v2022, %v1894
  %v2024 = vadd.f32 %v2023, %v1895
  %v2025 = vadd.f32 %v2024, %v1896
  %v2026 = vadd.f32 %v2025, %v1897
  %v2027 = vadd.f32 %v2026, %v1898
  %v2028 = vadd.f32 %v2027, %v1899
  %2029 = vadd.xlane.f32.xlu0 %v2028
  %v2030 = vpop.xlane.xlu0 %2029
  %v2031 = vadd.f32 %v1900, %v1901
  %v2032 = vadd.f32 %v2031, %v1902
  %v2033 = vadd.f32 %v2032, %v1903
  %v2034 = vadd.f32 %v2033, %v1904
  %v2035 = vadd.f32 %v2034, %v1905
  %v2036 = vadd.f32 %v2035, %v1906
  %v2037 = vadd.f32 %v2036, %v1907
  %2038 = vadd.xlane.f32.xlu0 %v2037
  %v2039 = vpop.xlane.xlu0 %2038
  %v2040 = vadd.f32 %v1908, %v1909
  %v2041 = vadd.f32 %v2040, %v1910
  %v2042 = vadd.f32 %v2041, %v1911
  %v2043 = vadd.f32 %v2042, %v1912
  %v2044 = vadd.f32 %v2043, %v1913
  %v2045 = vadd.f32 %v2044, %v1914
  %v2046 = vadd.f32 %v2045, %v1915
  %2047 = vadd.xlane.f32.xlu0 %v2046
  %v2048 = vpop.xlane.xlu0 %2047
  %v2049 = vadd.f32 %v1916, %v1917
  %v2050 = vadd.f32 %v2049, %v1918
  %v2051 = vadd.f32 %v2050, %v1919
  %v2052 = vadd.f32 %v2051, %v1920
  %v2053 = vadd.f32 %v2052, %v1921
  %v2054 = vadd.f32 %v2053, %v1922
  %v2055 = vadd.f32 %v2054, %v1923
  %2056 = vadd.xlane.f32.xlu0 %v2055
  %v2057 = vpop.xlane.xlu0 %2056
  %v2058 = vadd.f32 %v1924, %v1925
  %v2059 = vadd.f32 %v2058, %v1926
  %v2060 = vadd.f32 %v2059, %v1927
  %v2061 = vadd.f32 %v2060, %v1928
  %v2062 = vadd.f32 %v2061, %v1929
  %v2063 = vadd.f32 %v2062, %v1930
  %v2064 = vadd.f32 %v2063, %v1931
  %2065 = vadd.xlane.f32.xlu0 %v2064
  %v2066 = vpop.xlane.xlu0 %2065
  %vm2067 = vcmask 1045504
  %v2068 = vsel %vm2067, %v1932, 0.0
  %v2069 = vsel %vm2067, %v1933, 0.0
  %v2070 = vadd.f32 %v2068, %v2069
  %v2071 = vsel %vm2067, %v1934, 0.0
  %v2072 = vadd.f32 %v2070, %v2071
  %v2073 = vsel %vm2067, %v1935, 0.0
  %v2074 = vadd.f32 %v2072, %v2073
  %v2075 = vsel %vm2067, %v1936, 0.0
  %v2076 = vadd.f32 %v2074, %v2075
  %v2077 = vsel %vm2067, %v1937, 0.0
  %v2078 = vadd.f32 %v2076, %v2077
  %v2079 = vsel %vm2067, %v1938, 0.0
  %v2080 = vadd.f32 %v2078, %v2079
  %v2081 = vsel %vm2067, %v1939, 0.0
  %v2082 = vadd.f32 %v2080, %v2081
  %2083 = vadd.xlane.f32.xlu0 %v2082
  %v2084 = vpop.xlane.xlu0 %2083
  %v2085 = vadd.f32 %v1940, %v1941
  %v2086 = vadd.f32 %v2085, %v1942
  %v2087 = vadd.f32 %v2086, %v1943
  %v2088 = vadd.f32 %v2087, %v1944
  %v2089 = vadd.f32 %v2088, %v1945
  %v2090 = vadd.f32 %v2089, %v1946
  %v2091 = vadd.f32 %v2090, %v1947
  %2092 = vadd.xlane.f32.xlu0 %v2091
  %v2093 = vpop.xlane.xlu0 %2092
  %v2094 = vadd.f32 %v1948, %v1949
  %v2095 = vadd.f32 %v2094, %v1950
  %v2096 = vadd.f32 %v2095, %v1951
  %v2097 = vadd.f32 %v2096, %v1952
  %v2098 = vadd.f32 %v2097, %v1953
  %v2099 = vadd.f32 %v2098, %v1954
  %v2100 = vadd.f32 %v2099, %v1955
  %2101 = vadd.xlane.f32.xlu0 %v2100
  %v2102 = vpop.xlane.xlu0 %2101
  %v2103 = vadd.f32 %v1956, %v1957
  %v2104 = vadd.f32 %v2103, %v1958
  %v2105 = vadd.f32 %v2104, %v1959
  %v2106 = vadd.f32 %v2105, %v1960
  %v2107 = vadd.f32 %v2106, %v1961
  %v2108 = vadd.f32 %v2107, %v1962
  %v2109 = vadd.f32 %v2108, %v1963
  %2110 = vadd.xlane.f32.xlu0 %v2109
  %v2111 = vpop.xlane.xlu0 %2110
  %v2112 = vadd.f32 %v1964, %v1965
  %v2113 = vadd.f32 %v2112, %v1966
  %v2114 = vadd.f32 %v2113, %v1967
  %v2115 = vadd.f32 %v2114, %v1968
  %v2116 = vadd.f32 %v2115, %v1969
  %v2117 = vadd.f32 %v2116, %v1970
  %v2118 = vadd.f32 %v2117, %v1971
  %2119 = vadd.xlane.f32.xlu0 %v2118
  %v2120 = vpop.xlane.xlu0 %2119
  %v2121 = vadd.f32 %v1972, %v1973
  %v2122 = vadd.f32 %v2121, %v1974
  %v2123 = vadd.f32 %v2122, %v1975
  %v2124 = vadd.f32 %v2123, %v1976
  %v2125 = vadd.f32 %v2124, %v1977
  %v2126 = vadd.f32 %v2125, %v1978
  %v2127 = vadd.f32 %v2126, %v1979
  %2128 = vadd.xlane.f32.xlu0 %v2127
  %v2129 = vpop.xlane.xlu0 %2128
  %v2130 = vadd.f32 %v1980, %v1981
  %v2131 = vadd.f32 %v2130, %v1982
  %v2132 = vadd.f32 %v2131, %v1983
  %v2133 = vadd.f32 %v2132, %v1984
  %v2134 = vadd.f32 %v2133, %v1985
  %v2135 = vadd.f32 %v2134, %v1986
  %v2136 = vadd.f32 %v2135, %v1987
  %2137 = vadd.xlane.f32.xlu0 %v2136
  %v2138 = vpop.xlane.xlu0 %2137
  %v2139 = vadd.f32 %v1988, %v1989
  %v2140 = vadd.f32 %v2139, %v1990
  %v2141 = vadd.f32 %v2140, %v1991
  %v2142 = vadd.f32 %v2141, %v1992
  %v2143 = vadd.f32 %v2142, %v1993
  %v2144 = vadd.f32 %v2143, %v1994
  %v2145 = vadd.f32 %v2144, %v1995
  %2146 = vadd.xlane.f32.xlu0 %v2145
  %v2147 = vpop.xlane.xlu0 %2146
  %v2148 = vsel %vm2067, %v1996, 0.0
  %v2149 = vsel %vm2067, %v1997, 0.0
  %v2150 = vadd.f32 %v2148, %v2149
  %v2151 = vsel %vm2067, %v1998, 0.0
  %v2152 = vadd.f32 %v2150, %v2151
  %v2153 = vsel %vm2067, %v1999, 0.0
  %v2154 = vadd.f32 %v2152, %v2153
  %v2155 = vsel %vm2067, %v2000, 0.0
  %v2156 = vadd.f32 %v2154, %v2155
  %v2157 = vsel %vm2067, %v2001, 0.0
  %v2158 = vadd.f32 %v2156, %v2157
  %v2159 = vsel %vm2067, %v2002, 0.0
  %v2160 = vadd.f32 %v2158, %v2159
  %v2161 = vsel %vm2067, %v2003, 0.0
  %v2162 = vadd.f32 %v2160, %v2161
  %2163 = vadd.xlane.f32.xlu0 %v2162
  %v2164 = vpop.xlane.xlu0 %2163
  %v2165 = vadd.f32 %v2012, %v2093
  %v2166 = vadd.f32 %v2021, %v2102
  %v2167 = vadd.f32 %v2030, %v2111
  %v2168 = vadd.f32 %v2039, %v2120
  %v2169 = vadd.f32 %v2048, %v2129
  %v2170 = vadd.f32 %v2057, %v2138
  %v2171 = vadd.f32 %v2066, %v2147
  %v2172 = vsel %vm2067, %v2084, 0.0
  %v2173 = vsel %vm2067, %v2164, 0.0
  %v2174 = vadd.f32 %v2172, %v2173
  %v2175 = vmul.f32 %v1876, %v1876
  %v2176 = vmul.f32 %v1877, %v1877
  %v2177 = vmul.f32 %v1878, %v1878
  %v2178 = vmul.f32 %v1879, %v1879
  %v2179 = vmul.f32 %v1880, %v1880
  %v2180 = vmul.f32 %v1881, %v1881
  %v2181 = vmul.f32 %v1882, %v1882
  %v2182 = vmul.f32 %v1883, %v1883
  %v2183 = vmul.f32 %v1884, %v1884
  %v2184 = vmul.f32 %v1885, %v1885
  %v2185 = vmul.f32 %v1886, %v1886
  %v2186 = vmul.f32 %v1887, %v1887
  %v2187 = vmul.f32 %v1888, %v1888
  %v2188 = vmul.f32 %v1889, %v1889
  %v2189 = vmul.f32 %v1890, %v1890
  %v2190 = vmul.f32 %v1891, %v1891
  %v2191 = vmul.f32 %v1892, %v1892
  %v2192 = vmul.f32 %v1893, %v1893
  %v2193 = vmul.f32 %v1894, %v1894
  %v2194 = vmul.f32 %v1895, %v1895
  %v2195 = vmul.f32 %v1896, %v1896
  %v2196 = vmul.f32 %v1897, %v1897
  %v2197 = vmul.f32 %v1898, %v1898
  %v2198 = vmul.f32 %v1899, %v1899
  %v2199 = vmul.f32 %v1900, %v1900
  %v2200 = vmul.f32 %v1901, %v1901
  %v2201 = vmul.f32 %v1902, %v1902
  %v2202 = vmul.f32 %v1903, %v1903
  %v2203 = vmul.f32 %v1904, %v1904
  %v2204 = vmul.f32 %v1905, %v1905
  %v2205 = vmul.f32 %v1906, %v1906
  %v2206 = vmul.f32 %v1907, %v1907
  %v2207 = vmul.f32 %v1908, %v1908
  %v2208 = vmul.f32 %v1909, %v1909
  %v2209 = vmul.f32 %v1910, %v1910
  %v2210 = vmul.f32 %v1911, %v1911
  %v2211 = vmul.f32 %v1912, %v1912
  %v2212 = vmul.f32 %v1913, %v1913
  %v2213 = vmul.f32 %v1914, %v1914
  %v2214 = vmul.f32 %v1915, %v1915
  %v2215 = vmul.f32 %v1916, %v1916
  %v2216 = vmul.f32 %v1917, %v1917
  %v2217 = vmul.f32 %v1918, %v1918
  %v2218 = vmul.f32 %v1919, %v1919
  %v2219 = vmul.f32 %v1920, %v1920
  %v2220 = vmul.f32 %v1921, %v1921
  %v2221 = vmul.f32 %v1922, %v1922
  %v2222 = vmul.f32 %v1923, %v1923
  %v2223 = vmul.f32 %v1924, %v1924
  %v2224 = vmul.f32 %v1925, %v1925
  %v2225 = vmul.f32 %v1926, %v1926
  %v2226 = vmul.f32 %v1927, %v1927
  %v2227 = vmul.f32 %v1928, %v1928
  %v2228 = vmul.f32 %v1929, %v1929
  %v2229 = vmul.f32 %v1930, %v1930
  %v2230 = vmul.f32 %v1931, %v1931
  %v2231 = vmul.f32 %v1932, %v1932
  %v2232 = vmul.f32 %v1933, %v1933
  %v2233 = vmul.f32 %v1934, %v1934
  %v2234 = vmul.f32 %v1935, %v1935
  %v2235 = vmul.f32 %v1936, %v1936
  %v2236 = vmul.f32 %v1937, %v1937
  %v2237 = vmul.f32 %v1938, %v1938
  %v2238 = vmul.f32 %v1939, %v1939
  %v2239 = vmul.f32 %v1940, %v1940
  %v2240 = vmul.f32 %v1941, %v1941
  %v2241 = vmul.f32 %v1942, %v1942
  %v2242 = vmul.f32 %v1943, %v1943
  %v2243 = vmul.f32 %v1944, %v1944
  %v2244 = vmul.f32 %v1945, %v1945
  %v2245 = vmul.f32 %v1946, %v1946
  %v2246 = vmul.f32 %v1947, %v1947
  %v2247 = vmul.f32 %v1948, %v1948
  %v2248 = vmul.f32 %v1949, %v1949
  %v2249 = vmul.f32 %v1950, %v1950
  %v2250 = vmul.f32 %v1951, %v1951
  %v2251 = vmul.f32 %v1952, %v1952
  %v2252 = vmul.f32 %v1953, %v1953
  %v2253 = vmul.f32 %v1954, %v1954
  %v2254 = vmul.f32 %v1955, %v1955
  %v2255 = vmul.f32 %v1956, %v1956
  %v2256 = vmul.f32 %v1957, %v1957
  %v2257 = vmul.f32 %v1958, %v1958
  %v2258 = vmul.f32 %v1959, %v1959
  %v2259 = vmul.f32 %v1960, %v1960
  %v2260 = vmul.f32 %v1961, %v1961
  %v2261 = vmul.f32 %v1962, %v1962
  %v2262 = vmul.f32 %v1963, %v1963
  %v2263 = vmul.f32 %v1964, %v1964
  %v2264 = vmul.f32 %v1965, %v1965
  %v2265 = vmul.f32 %v1966, %v1966
  %v2266 = vmul.f32 %v1967, %v1967
  %v2267 = vmul.f32 %v1968, %v1968
  %v2268 = vmul.f32 %v1969, %v1969
  %v2269 = vmul.f32 %v1970, %v1970
  %v2270 = vmul.f32 %v1971, %v1971
  %v2271 = vmul.f32 %v1972, %v1972
  %v2272 = vmul.f32 %v1973, %v1973
  %v2273 = vmul.f32 %v1974, %v1974
  %v2274 = vmul.f32 %v1975, %v1975
  %v2275 = vmul.f32 %v1976, %v1976
  %v2276 = vmul.f32 %v1977, %v1977
  %v2277 = vmul.f32 %v1978, %v1978
  %v2278 = vmul.f32 %v1979, %v1979
  %v2279 = vmul.f32 %v1980, %v1980
  %v2280 = vmul.f32 %v1981, %v1981
  %v2281 = vmul.f32 %v1982, %v1982
  %v2282 = vmul.f32 %v1983, %v1983
  %v2283 = vmul.f32 %v1984, %v1984
  %v2284 = vmul.f32 %v1985, %v1985
  %v2285 = vmul.f32 %v1986, %v1986
  %v2286 = vmul.f32 %v1987, %v1987
  %v2287 = vmul.f32 %v1988, %v1988
  %v2288 = vmul.f32 %v1989, %v1989
  %v2289 = vmul.f32 %v1990, %v1990
  %v2290 = vmul.f32 %v1991, %v1991
  %v2291 = vmul.f32 %v1992, %v1992
  %v2292 = vmul.f32 %v1993, %v1993
  %v2293 = vmul.f32 %v1994, %v1994
  %v2294 = vmul.f32 %v1995, %v1995
  %v2295 = vmul.f32 %v1996, %v1996
  %v2296 = vmul.f32 %v1997, %v1997
  %v2297 = vmul.f32 %v1998, %v1998
  %v2298 = vmul.f32 %v1999, %v1999
  %v2299 = vmul.f32 %v2000, %v2000
  %v2300 = vmul.f32 %v2001, %v2001
  %v2301 = vmul.f32 %v2002, %v2002
  %v2302 = vmul.f32 %v2003, %v2003
  %v2303 = vadd.f32 %v2175, %v2176
  %v2304 = vadd.f32 %v2303, %v2177
  %v2305 = vadd.f32 %v2304, %v2178
  %v2306 = vadd.f32 %v2305, %v2179
  %v2307 = vadd.f32 %v2306, %v2180
  %v2308 = vadd.f32 %v2307, %v2181
  %v2309 = vadd.f32 %v2308, %v2182
  %2310 = vadd.xlane.f32.xlu0 %v2309
  %v2311 = vpop.xlane.xlu0 %2310
  %v2312 = vadd.f32 %v2183, %v2184
  %v2313 = vadd.f32 %v2312, %v2185
  %v2314 = vadd.f32 %v2313, %v2186
  %v2315 = vadd.f32 %v2314, %v2187
  %v2316 = vadd.f32 %v2315, %v2188
  %v2317 = vadd.f32 %v2316, %v2189
  %v2318 = vadd.f32 %v2317, %v2190
  %2319 = vadd.xlane.f32.xlu0 %v2318
  %v2320 = vpop.xlane.xlu0 %2319
  %v2321 = vadd.f32 %v2191, %v2192
  %v2322 = vadd.f32 %v2321, %v2193
  %v2323 = vadd.f32 %v2322, %v2194
  %v2324 = vadd.f32 %v2323, %v2195
  %v2325 = vadd.f32 %v2324, %v2196
  %v2326 = vadd.f32 %v2325, %v2197
  %v2327 = vadd.f32 %v2326, %v2198
  %2328 = vadd.xlane.f32.xlu0 %v2327
  %v2329 = vpop.xlane.xlu0 %2328
  %v2330 = vadd.f32 %v2199, %v2200
  %v2331 = vadd.f32 %v2330, %v2201
  %v2332 = vadd.f32 %v2331, %v2202
  %v2333 = vadd.f32 %v2332, %v2203
  %v2334 = vadd.f32 %v2333, %v2204
  %v2335 = vadd.f32 %v2334, %v2205
  %v2336 = vadd.f32 %v2335, %v2206
  %2337 = vadd.xlane.f32.xlu0 %v2336
  %v2338 = vpop.xlane.xlu0 %2337
  %v2339 = vadd.f32 %v2207, %v2208
  %v2340 = vadd.f32 %v2339, %v2209
  %v2341 = vadd.f32 %v2340, %v2210
  %v2342 = vadd.f32 %v2341, %v2211
  %v2343 = vadd.f32 %v2342, %v2212
  %v2344 = vadd.f32 %v2343, %v2213
  %v2345 = vadd.f32 %v2344, %v2214
  %2346 = vadd.xlane.f32.xlu0 %v2345
  %v2347 = vpop.xlane.xlu0 %2346
  %v2348 = vadd.f32 %v2215, %v2216
  %v2349 = vadd.f32 %v2348, %v2217
  %v2350 = vadd.f32 %v2349, %v2218
  %v2351 = vadd.f32 %v2350, %v2219
  %v2352 = vadd.f32 %v2351, %v2220
  %v2353 = vadd.f32 %v2352, %v2221
  %v2354 = vadd.f32 %v2353, %v2222
  %2355 = vadd.xlane.f32.xlu0 %v2354
  %v2356 = vpop.xlane.xlu0 %2355
  %v2357 = vadd.f32 %v2223, %v2224
  %v2358 = vadd.f32 %v2357, %v2225
  %v2359 = vadd.f32 %v2358, %v2226
  %v2360 = vadd.f32 %v2359, %v2227
  %v2361 = vadd.f32 %v2360, %v2228
  %v2362 = vadd.f32 %v2361, %v2229
  %v2363 = vadd.f32 %v2362, %v2230
  %2364 = vadd.xlane.f32.xlu0 %v2363
  %v2365 = vpop.xlane.xlu0 %2364
  %v2366 = vsel %vm2067, %v2231, 0.0
  %v2367 = vsel %vm2067, %v2232, 0.0
  %v2368 = vadd.f32 %v2366, %v2367
  %v2369 = vsel %vm2067, %v2233, 0.0
  %v2370 = vadd.f32 %v2368, %v2369
  %v2371 = vsel %vm2067, %v2234, 0.0
  %v2372 = vadd.f32 %v2370, %v2371
  %v2373 = vsel %vm2067, %v2235, 0.0
  %v2374 = vadd.f32 %v2372, %v2373
  %v2375 = vsel %vm2067, %v2236, 0.0
  %v2376 = vadd.f32 %v2374, %v2375
  %v2377 = vsel %vm2067, %v2237, 0.0
  %v2378 = vadd.f32 %v2376, %v2377
  %v2379 = vsel %vm2067, %v2238, 0.0
  %v2380 = vadd.f32 %v2378, %v2379
  %2381 = vadd.xlane.f32.xlu0 %v2380
  %v2382 = vpop.xlane.xlu0 %2381
  %v2383 = vadd.f32 %v2239, %v2240
  %v2384 = vadd.f32 %v2383, %v2241
  %v2385 = vadd.f32 %v2384, %v2242
  %v2386 = vadd.f32 %v2385, %v2243
  %v2387 = vadd.f32 %v2386, %v2244
  %v2388 = vadd.f32 %v2387, %v2245
  %v2389 = vadd.f32 %v2388, %v2246
  %2390 = vadd.xlane.f32.xlu0 %v2389
  %v2391 = vpop.xlane.xlu0 %2390
  %v2392 = vadd.f32 %v2247, %v2248
  %v2393 = vadd.f32 %v2392, %v2249
  %v2394 = vadd.f32 %v2393, %v2250
  %v2395 = vadd.f32 %v2394, %v2251
  %v2396 = vadd.f32 %v2395, %v2252
  %v2397 = vadd.f32 %v2396, %v2253
  %v2398 = vadd.f32 %v2397, %v2254
  %2399 = vadd.xlane.f32.xlu0 %v2398
  %v2400 = vpop.xlane.xlu0 %2399
  %v2401 = vadd.f32 %v2255, %v2256
  %v2402 = vadd.f32 %v2401, %v2257
  %v2403 = vadd.f32 %v2402, %v2258
  %v2404 = vadd.f32 %v2403, %v2259
  %v2405 = vadd.f32 %v2404, %v2260
  %v2406 = vadd.f32 %v2405, %v2261
  %v2407 = vadd.f32 %v2406, %v2262
  %2408 = vadd.xlane.f32.xlu0 %v2407
  %v2409 = vpop.xlane.xlu0 %2408
  %v2410 = vadd.f32 %v2263, %v2264
  %v2411 = vadd.f32 %v2410, %v2265
  %v2412 = vadd.f32 %v2411, %v2266
  %v2413 = vadd.f32 %v2412, %v2267
  %v2414 = vadd.f32 %v2413, %v2268
  %v2415 = vadd.f32 %v2414, %v2269
  %v2416 = vadd.f32 %v2415, %v2270
  %2417 = vadd.xlane.f32.xlu0 %v2416
  %v2418 = vpop.xlane.xlu0 %2417
  %v2419 = vadd.f32 %v2271, %v2272
  %v2420 = vadd.f32 %v2419, %v2273
  %v2421 = vadd.f32 %v2420, %v2274
  %v2422 = vadd.f32 %v2421, %v2275
  %v2423 = vadd.f32 %v2422, %v2276
  %v2424 = vadd.f32 %v2423, %v2277
  %v2425 = vadd.f32 %v2424, %v2278
  %2426 = vadd.xlane.f32.xlu0 %v2425
  %v2427 = vpop.xlane.xlu0 %2426
  %v2428 = vadd.f32 %v2279, %v2280
  %v2429 = vadd.f32 %v2428, %v2281
  %v2430 = vadd.f32 %v2429, %v2282
  %v2431 = vadd.f32 %v2430, %v2283
  %v2432 = vadd.f32 %v2431, %v2284
  %v2433 = vadd.f32 %v2432, %v2285
  %v2434 = vadd.f32 %v2433, %v2286
  %2435 = vadd.xlane.f32.xlu0 %v2434
  %v2436 = vpop.xlane.xlu0 %2435
  %v2437 = vadd.f32 %v2287, %v2288
  %v2438 = vadd.f32 %v2437, %v2289
  %v2439 = vadd.f32 %v2438, %v2290
  %v2440 = vadd.f32 %v2439, %v2291
  %v2441 = vadd.f32 %v2440, %v2292
  %v2442 = vadd.f32 %v2441, %v2293
  %v2443 = vadd.f32 %v2442, %v2294
  %2444 = vadd.xlane.f32.xlu0 %v2443
  %v2445 = vpop.xlane.xlu0 %2444
  %v2446 = vsel %vm2067, %v2295, 0.0
  %v2447 = vsel %vm2067, %v2296, 0.0
  %v2448 = vadd.f32 %v2446, %v2447
  %v2449 = vsel %vm2067, %v2297, 0.0
  %v2450 = vadd.f32 %v2448, %v2449
  %v2451 = vsel %vm2067, %v2298, 0.0
  %v2452 = vadd.f32 %v2450, %v2451
  %v2453 = vsel %vm2067, %v2299, 0.0
  %v2454 = vadd.f32 %v2452, %v2453
  %v2455 = vsel %vm2067, %v2300, 0.0
  %v2456 = vadd.f32 %v2454, %v2455
  %v2457 = vsel %vm2067, %v2301, 0.0
  %v2458 = vadd.f32 %v2456, %v2457
  %v2459 = vsel %vm2067, %v2302, 0.0
  %v2460 = vadd.f32 %v2458, %v2459
  %2461 = vadd.xlane.f32.xlu0 %v2460
  %v2462 = vpop.xlane.xlu0 %2461
  %v2463 = vadd.f32 %v2311, %v2391
  %v2464 = vadd.f32 %v2320, %v2400
  %v2465 = vadd.f32 %v2329, %v2409
  %v2466 = vadd.f32 %v2338, %v2418
  %v2467 = vadd.f32 %v2347, %v2427
  %v2468 = vadd.f32 %v2356, %v2436
  %v2469 = vadd.f32 %v2365, %v2445
  %v2470 = vsel %vm2067, %v2382, 0.0
  %v2471 = vsel %vm2067, %v2462, 0.0
  %v2472 = vadd.f32 %v2470, %v2471
  %v2473 = vmul.f32 %v2165, 0.00048828125
  %v2474 = vmul.f32 %v2166, 0.00048828125
  %v2475 = vmul.f32 %v2167, 0.00048828125
  %v2476 = vmul.f32 %v2168, 0.00048828125
  %v2477 = vmul.f32 %v2169, 0.00048828125
  %v2478 = vmul.f32 %v2170, 0.00048828125
  %v2479 = vmul.f32 %v2171, 0.00048828125
  %v2480 = vmul.f32 %v2174, 0.00048828125
  %v2481 = vmul.f32 %v2463, 0.00048828125
  %v2482 = vmul.f32 %v2464, 0.00048828125
  %v2483 = vmul.f32 %v2465, 0.00048828125
  %v2484 = vmul.f32 %v2466, 0.00048828125
  %v2485 = vmul.f32 %v2467, 0.00048828125
  %v2486 = vmul.f32 %v2468, 0.00048828125
  %v2487 = vmul.f32 %v2469, 0.00048828125
  %v2488 = vmul.f32 %v2472, 0.00048828125
  %v2489 = vmul.f32 %v2473, %v2473
  %v2490 = vmul.f32 %v2474, %v2474
  %v2491 = vmul.f32 %v2475, %v2475
  %v2492 = vmul.f32 %v2476, %v2476
  %v2493 = vmul.f32 %v2477, %v2477
  %v2494 = vmul.f32 %v2478, %v2478
  %v2495 = vmul.f32 %v2479, %v2479
  %v2496 = vmul.f32 %v2480, %v2480
  %v2497 = vsub.f32 %v2481, %v2489
  %v2498 = vsub.f32 %v2482, %v2490
  %v2499 = vsub.f32 %v2483, %v2491
  %v2500 = vsub.f32 %v2484, %v2492
  %v2501 = vsub.f32 %v2485, %v2493
  %v2502 = vsub.f32 %v2486, %v2494
  %v2503 = vsub.f32 %v2487, %v2495
  %v2504 = vsub.f32 %v2488, %v2496
  %v2505 = vld [vmem:[%s4] sm:$0xff]
  %v2506 = vld [vmem:[%s4 + $0x8] sm:$0xff]
  %v2507 = vld [vmem:[%s4 + $0x10] sm:$0xff]
  %v2508 = vld [vmem:[%s4 + $0x18] sm:$0xff]
  %v2509 = vld [vmem:[%s4 + $0x20] sm:$0xff]
  %v2510 = vld [vmem:[%s4 + $0x28] sm:$0xff]
  %v2511 = vld [vmem:[%s4 + $0x30] sm:$0xff]
  %v2512 = vld [vmem:[%s4 + $0x38] sm:$0x3f]
  %v2513 = vadd.f32 %v2497, 0.001
  %v2514 = vadd.f32 %v2498, 0.001
  %v2515 = vadd.f32 %v2499, 0.001
  %v2516 = vadd.f32 %v2500, 0.001
  %v2517 = vadd.f32 %v2501, 0.001
  %v2518 = vadd.f32 %v2502, 0.001
  %v2519 = vadd.f32 %v2503, 0.001
  %v2520 = vadd.f32 %v2504, 0.001
  %v2521 = vrsqrt.pop %v2513
  %v2522 = vrsqrt.pop %v2514
  %v2523 = vrsqrt.pop %v2515
  %v2524 = vrsqrt.pop %v2516
  %v2525 = vrsqrt.pop %v2517
  %v2526 = vrsqrt.pop %v2518
  %v2527 = vrsqrt.pop %v2519
  %v2528 = vrsqrt.pop %v2520
  %v2529 = vmul.f32 %v2505, %v2521
  %v2530 = vmul.f32 %v2506, %v2522
  %v2531 = vmul.f32 %v2507, %v2523
  %v2532 = vmul.f32 %v2508, %v2524
  %v2533 = vmul.f32 %v2509, %v2525
  %v2534 = vmul.f32 %v2510, %v2526
  %v2535 = vmul.f32 %v2511, %v2527
  %v2536 = vmul.f32 %v2512, %v2528
  %v2537 = vld [vmem:[%s5] sm:$0xff]
  %v2538 = vld [vmem:[%s5 + $0x8] sm:$0xff]
  %v2539 = vld [vmem:[%s5 + $0x10] sm:$0xff]
  %v2540 = vld [vmem:[%s5 + $0x18] sm:$0xff]
  %v2541 = vld [vmem:[%s5 + $0x20] sm:$0xff]
  %v2542 = vld [vmem:[%s5 + $0x28] sm:$0xff]
  %v2543 = vld [vmem:[%s5 + $0x30] sm:$0xff]
  %v2544 = vld [vmem:[%s5 + $0x38] sm:$0x3f]
  %v2545 = vmul.f32 %v2473, %v2529
  %v2546 = vmul.f32 %v2474, %v2530
  %v2547 = vmul.f32 %v2475, %v2531
  %v2548 = vmul.f32 %v2476, %v2532
  %v2549 = vmul.f32 %v2477, %v2533
  %v2550 = vmul.f32 %v2478, %v2534
  %v2551 = vmul.f32 %v2479, %v2535
  %v2552 = vmul.f32 %v2480, %v2536
  %v2553 = vsub.f32 %v2537, %v2545
  %v2554 = vsub.f32 %v2538, %v2546
  %v2555 = vsub.f32 %v2539, %v2547
  %v2556 = vsub.f32 %v2540, %v2548
  %v2557 = vsub.f32 %v2541, %v2549
  %v2558 = vsub.f32 %v2542, %v2550
  %v2559 = vsub.f32 %v2543, %v2551
  %v2560 = vsub.f32 %v2544, %v2552
  %2562 = vset.pattern.permute.xlu0 0
  %2563 = vperm.xlu0 %2562, %v2529
  %v2564 = vpop.permute.xlu0 %2563
  %2567 = vset.pattern.permute.xlu0 0
  %2568 = vperm.xlu0 %2567, %v2530
  %v2569 = vpop.permute.xlu0 %2568
  %2572 = vset.pattern.permute.xlu0 0
  %2573 = vperm.xlu0 %2572, %v2531
  %v2574 = vpop.permute.xlu0 %2573
  %2577 = vset.pattern.permute.xlu0 0
  %2578 = vperm.xlu0 %2577, %v2532
  %v2579 = vpop.permute.xlu0 %2578
  %2582 = vset.pattern.permute.xlu0 0
  %2583 = vperm.xlu0 %2582, %v2533
  %v2584 = vpop.permute.xlu0 %2583
  %2587 = vset.pattern.permute.xlu0 0
  %2588 = vperm.xlu0 %2587, %v2534
  %v2589 = vpop.permute.xlu0 %2588
  %2592 = vset.pattern.permute.xlu0 0
  %2593 = vperm.xlu0 %2592, %v2535
  %v2594 = vpop.permute.xlu0 %2593
  %2597 = vset.pattern.permute.xlu0 0
  %2598 = vperm.xlu0 %2597, %v2536
  %v2599 = vpop.permute.xlu0 %2598
  %v2601 = vmul.f32 %v1876, %v2564
  %v2602 = vmul.f32 %v1877, %v2564
  %v2603 = vmul.f32 %v1878, %v2564
  %v2604 = vmul.f32 %v1879, %v2564
  %v2605 = vmul.f32 %v1880, %v2564
  %v2606 = vmul.f32 %v1881, %v2564
  %v2607 = vmul.f32 %v1882, %v2564
  %v2608 = vmul.f32 %v1883, %v2564
  %v2609 = vmul.f32 %v1884, %v2569
  %v2610 = vmul.f32 %v1885, %v2569
  %v2611 = vmul.f32 %v1886, %v2569
  %v2612 = vmul.f32 %v1887, %v2569
  %v2613 = vmul.f32 %v1888, %v2569
  %v2614 = vmul.f32 %v1889, %v2569
  %v2615 = vmul.f32 %v1890, %v2569
  %v2616 = vmul.f32 %v1891, %v2569
  %v2617 = vmul.f32 %v1892, %v2574
  %v2618 = vmul.f32 %v1893, %v2574
  %v2619 = vmul.f32 %v1894, %v2574
  %v2620 = vmul.f32 %v1895, %v2574
  %v2621 = vmul.f32 %v1896, %v2574
  %v2622 = vmul.f32 %v1897, %v2574
  %v2623 = vmul.f32 %v1898, %v2574
  %v2624 = vmul.f32 %v1899, %v2574
  %v2625 = vmul.f32 %v1900, %v2579
  %v2626 = vmul.f32 %v1901, %v2579
  %v2627 = vmul.f32 %v1902, %v2579
  %v2628 = vmul.f32 %v1903, %v2579
  %v2629 = vmul.f32 %v1904, %v2579
  %v2630 = vmul.f32 %v1905, %v2579
  %v2631 = vmul.f32 %v1906, %v2579
  %v2632 = vmul.f32 %v1907, %v2579
  %v2633 = vmul.f32 %v1908, %v2584
  %v2634 = vmul.f32 %v1909, %v2584
  %v2635 = vmul.f32 %v1910, %v2584
  %v2636 = vmul.f32 %v1911, %v2584
  %v2637 = vmul.f32 %v1912, %v2584
  %v2638 = vmul.f32 %v1913, %v2584
  %v2639 = vmul.f32 %v1914, %v2584
  %v2640 = vmul.f32 %v1915, %v2584
  %v2641 = vmul.f32 %v1916, %v2589
  %v2642 = vmul.f32 %v1917, %v2589
  %v2643 = vmul.f32 %v1918, %v2589
  %v2644 = vmul.f32 %v1919, %v2589
  %v2645 = vmul.f32 %v1920, %v2589
  %v2646 = vmul.f32 %v1921, %v2589
  %v2647 = vmul.f32 %v1922, %v2589
  %v2648 = vmul.f32 %v1923, %v2589
  %v2649 = vmul.f32 %v1924, %v2594
  %v2650 = vmul.f32 %v1925, %v2594
  %v2651 = vmul.f32 %v1926, %v2594
  %v2652 = vmul.f32 %v1927, %v2594
  %v2653 = vmul.f32 %v1928, %v2594
  %v2654 = vmul.f32 %v1929, %v2594
  %v2655 = vmul.f32 %v1930, %v2594
  %v2656 = vmul.f32 %v1931, %v2594
  %v2657 = vmul.f32 %v1932, %v2599
  %v2658 = vmul.f32 %v1933, %v2599
  %v2659 = vmul.f32 %v1934, %v2599
  %v2660 = vmul.f32 %v1935, %v2599
  %v2661 = vmul.f32 %v1936, %v2599
  %v2662 = vmul.f32 %v1937, %v2599
  %v2663 = vmul.f32 %v1938, %v2599
  %v2664 = vmul.f32 %v1939, %v2599
  %v2665 = vmul.f32 %v1940, %v2564
  %v2666 = vmul.f32 %v1941, %v2564
  %v2667 = vmul.f32 %v1942, %v2564
  %v2668 = vmul.f32 %v1943, %v2564
  %v2669 = vmul.f32 %v1944, %v2564
  %v2670 = vmul.f32 %v1945, %v2564
  %v2671 = vmul.f32 %v1946, %v2564
  %v2672 = vmul.f32 %v1947, %v2564
  %v2673 = vmul.f32 %v1948, %v2569
  %v2674 = vmul.f32 %v1949, %v2569
  %v2675 = vmul.f32 %v1950, %v2569
  %v2676 = vmul.f32 %v1951, %v2569
  %v2677 = vmul.f32 %v1952, %v2569
  %v2678 = vmul.f32 %v1953, %v2569
  %v2679 = vmul.f32 %v1954, %v2569
  %v2680 = vmul.f32 %v1955, %v2569
  %v2681 = vmul.f32 %v1956, %v2574
  %v2682 = vmul.f32 %v1957, %v2574
  %v2683 = vmul.f32 %v1958, %v2574
  %v2684 = vmul.f32 %v1959, %v2574
  %v2685 = vmul.f32 %v1960, %v2574
  %v2686 = vmul.f32 %v1961, %v2574
  %v2687 = vmul.f32 %v1962, %v2574
  %v2688 = vmul.f32 %v1963, %v2574
  %v2689 = vmul.f32 %v1964, %v2579
  %v2690 = vmul.f32 %v1965, %v2579
  %v2691 = vmul.f32 %v1966, %v2579
  %v2692 = vmul.f32 %v1967, %v2579
  %v2693 = vmul.f32 %v1968, %v2579
  %v2694 = vmul.f32 %v1969, %v2579
  %v2695 = vmul.f32 %v1970, %v2579
  %v2696 = vmul.f32 %v1971, %v2579
  %v2697 = vmul.f32 %v1972, %v2584
  %v2698 = vmul.f32 %v1973, %v2584
  %v2699 = vmul.f32 %v1974, %v2584
  %v2700 = vmul.f32 %v1975, %v2584
  %v2701 = vmul.f32 %v1976, %v2584
  %v2702 = vmul.f32 %v1977, %v2584
  %v2703 = vmul.f32 %v1978, %v2584
  %v2704 = vmul.f32 %v1979, %v2584
  %v2705 = vmul.f32 %v1980, %v2589
  %v2706 = vmul.f32 %v1981, %v2589
  %v2707 = vmul.f32 %v1982, %v2589
  %v2708 = vmul.f32 %v1983, %v2589
  %v2709 = vmul.f32 %v1984, %v2589
  %v2710 = vmul.f32 %v1985, %v2589
  %v2711 = vmul.f32 %v1986, %v2589
  %v2712 = vmul.f32 %v1987, %v2589
  %v2713 = vmul.f32 %v1988, %v2594
  %v2714 = vmul.f32 %v1989, %v2594
  %v2715 = vmul.f32 %v1990, %v2594
  %v2716 = vmul.f32 %v1991, %v2594
  %v2717 = vmul.f32 %v1992, %v2594
  %v2718 = vmul.f32 %v1993, %v2594
  %v2719 = vmul.f32 %v1994, %v2594
  %v2720 = vmul.f32 %v1995, %v2594
  %v2721 = vmul.f32 %v1996, %v2599
  %v2722 = vmul.f32 %v1997, %v2599
  %v2723 = vmul.f32 %v1998, %v2599
  %v2724 = vmul.f32 %v1999, %v2599
  %v2725 = vmul.f32 %v2000, %v2599
  %v2726 = vmul.f32 %v2001, %v2599
  %v2727 = vmul.f32 %v2002, %v2599
  %v2728 = vmul.f32 %v2003, %v2599
  %2730 = vset.pattern.permute.xlu0 0
  %2731 = vperm.xlu0 %2730, %v2553
  %v2732 = vpop.permute.xlu0 %2731
  %2735 = vset.pattern.permute.xlu0 0
  %2736 = vperm.xlu0 %2735, %v2554
  %v2737 = vpop.permute.xlu0 %2736
  %2740 = vset.pattern.permute.xlu0 0
  %2741 = vperm.xlu0 %2740, %v2555
  %v2742 = vpop.permute.xlu0 %2741
  %2745 = vset.pattern.permute.xlu0 0
  %2746 = vperm.xlu0 %2745, %v2556
  %v2747 = vpop.permute.xlu0 %2746
  %2750 = vset.pattern.permute.xlu0 0
  %2751 = vperm.xlu0 %2750, %v2557
  %v2752 = vpop.permute.xlu0 %2751
  %2755 = vset.pattern.permute.xlu0 0
  %2756 = vperm.xlu0 %2755, %v2558
  %v2757 = vpop.permute.xlu0 %2756
  %2760 = vset.pattern.permute.xlu0 0
  %2761 = vperm.xlu0 %2760, %v2559
  %v2762 = vpop.permute.xlu0 %2761
  %2765 = vset.pattern.permute.xlu0 0
  %2766 = vperm.xlu0 %2765, %v2560
  %v2767 = vpop.permute.xlu0 %2766
  %v2769 = vadd.f32 %v2601, %v2732
  %v2770 = vadd.f32 %v2602, %v2732
  %v2771 = vadd.f32 %v2603, %v2732
  %v2772 = vadd.f32 %v2604, %v2732
  %v2773 = vadd.f32 %v2605, %v2732
  %v2774 = vadd.f32 %v2606, %v2732
  %v2775 = vadd.f32 %v2607, %v2732
  %v2776 = vadd.f32 %v2608, %v2732
  %v2777 = vadd.f32 %v2609, %v2737
  %v2778 = vadd.f32 %v2610, %v2737
  %v2779 = vadd.f32 %v2611, %v2737
  %v2780 = vadd.f32 %v2612, %v2737
  %v2781 = vadd.f32 %v2613, %v2737
  %v2782 = vadd.f32 %v2614, %v2737
  %v2783 = vadd.f32 %v2615, %v2737
  %v2784 = vadd.f32 %v2616, %v2737
  %v2785 = vadd.f32 %v2617, %v2742
  %v2786 = vadd.f32 %v2618, %v2742
  %v2787 = vadd.f32 %v2619, %v2742
  %v2788 = vadd.f32 %v2620, %v2742
  %v2789 = vadd.f32 %v2621, %v2742
  %v2790 = vadd.f32 %v2622, %v2742
  %v2791 = vadd.f32 %v2623, %v2742
  %v2792 = vadd.f32 %v2624, %v2742
  %v2793 = vadd.f32 %v2625, %v2747
  %v2794 = vadd.f32 %v2626, %v2747
  %v2795 = vadd.f32 %v2627, %v2747
  %v2796 = vadd.f32 %v2628, %v2747
  %v2797 = vadd.f32 %v2629, %v2747
  %v2798 = vadd.f32 %v2630, %v2747
  %v2799 = vadd.f32 %v2631, %v2747
  %v2800 = vadd.f32 %v2632, %v2747
  %v2801 = vadd.f32 %v2633, %v2752
  %v2802 = vadd.f32 %v2634, %v2752
  %v2803 = vadd.f32 %v2635, %v2752
  %v2804 = vadd.f32 %v2636, %v2752
  %v2805 = vadd.f32 %v2637, %v2752
  %v2806 = vadd.f32 %v2638, %v2752
  %v2807 = vadd.f32 %v2639, %v2752
  %v2808 = vadd.f32 %v2640, %v2752
  %v2809 = vadd.f32 %v2641, %v2757
  %v2810 = vadd.f32 %v2642, %v2757
  %v2811 = vadd.f32 %v2643, %v2757
  %v2812 = vadd.f32 %v2644, %v2757
  %v2813 = vadd.f32 %v2645, %v2757
  %v2814 = vadd.f32 %v2646, %v2757
  %v2815 = vadd.f32 %v2647, %v2757
  %v2816 = vadd.f32 %v2648, %v2757
  %v2817 = vadd.f32 %v2649, %v2762
  %v2818 = vadd.f32 %v2650, %v2762
  %v2819 = vadd.f32 %v2651, %v2762
  %v2820 = vadd.f32 %v2652, %v2762
  %v2821 = vadd.f32 %v2653, %v2762
  %v2822 = vadd.f32 %v2654, %v2762
  %v2823 = vadd.f32 %v2655, %v2762
  %v2824 = vadd.f32 %v2656, %v2762
  %v2825 = vadd.f32 %v2657, %v2767
  %v2826 = vadd.f32 %v2658, %v2767
  %v2827 = vadd.f32 %v2659, %v2767
  %v2828 = vadd.f32 %v2660, %v2767
  %v2829 = vadd.f32 %v2661, %v2767
  %v2830 = vadd.f32 %v2662, %v2767
  %v2831 = vadd.f32 %v2663, %v2767
  %v2832 = vadd.f32 %v2664, %v2767
  %v2833 = vadd.f32 %v2665, %v2732
  %v2834 = vadd.f32 %v2666, %v2732
  %v2835 = vadd.f32 %v2667, %v2732
  %v2836 = vadd.f32 %v2668, %v2732
  %v2837 = vadd.f32 %v2669, %v2732
  %v2838 = vadd.f32 %v2670, %v2732
  %v2839 = vadd.f32 %v2671, %v2732
  %v2840 = vadd.f32 %v2672, %v2732
  %v2841 = vadd.f32 %v2673, %v2737
  %v2842 = vadd.f32 %v2674, %v2737
  %v2843 = vadd.f32 %v2675, %v2737
  %v2844 = vadd.f32 %v2676, %v2737
  %v2845 = vadd.f32 %v2677, %v2737
  %v2846 = vadd.f32 %v2678, %v2737
  %v2847 = vadd.f32 %v2679, %v2737
  %v2848 = vadd.f32 %v2680, %v2737
  %v2849 = vadd.f32 %v2681, %v2742
  %v2850 = vadd.f32 %v2682, %v2742
  %v2851 = vadd.f32 %v2683, %v2742
  %v2852 = vadd.f32 %v2684, %v2742
  %v2853 = vadd.f32 %v2685, %v2742
  %v2854 = vadd.f32 %v2686, %v2742
  %v2855 = vadd.f32 %v2687, %v2742
  %v2856 = vadd.f32 %v2688, %v2742
  %v2857 = vadd.f32 %v2689, %v2747
  %v2858 = vadd.f32 %v2690, %v2747
  %v2859 = vadd.f32 %v2691, %v2747
  %v2860 = vadd.f32 %v2692, %v2747
  %v2861 = vadd.f32 %v2693, %v2747
  %v2862 = vadd.f32 %v2694, %v2747
  %v2863 = vadd.f32 %v2695, %v2747
  %v2864 = vadd.f32 %v2696, %v2747
  %v2865 = vadd.f32 %v2697, %v2752
  %v2866 = vadd.f32 %v2698, %v2752
  %v2867 = vadd.f32 %v2699, %v2752
  %v2868 = vadd.f32 %v2700, %v2752
  %v2869 = vadd.f32 %v2701, %v2752
  %v2870 = vadd.f32 %v2702, %v2752
  %v2871 = vadd.f32 %v2703, %v2752
  %v2872 = vadd.f32 %v2704, %v2752
  %v2873 = vadd.f32 %v2705, %v2757
  %v2874 = vadd.f32 %v2706, %v2757
  %v2875 = vadd.f32 %v2707, %v2757
  %v2876 = vadd.f32 %v2708, %v2757
  %v2877 = vadd.f32 %v2709, %v2757
  %v2878 = vadd.f32 %v2710, %v2757
  %v2879 = vadd.f32 %v2711, %v2757
  %v2880 = vadd.f32 %v2712, %v2757
  %v2881 = vadd.f32 %v2713, %v2762
  %v2882 = vadd.f32 %v2714, %v2762
  %v2883 = vadd.f32 %v2715, %v2762
  %v2884 = vadd.f32 %v2716, %v2762
  %v2885 = vadd.f32 %v2717, %v2762
  %v2886 = vadd.f32 %v2718, %v2762
  %v2887 = vadd.f32 %v2719, %v2762
  %v2888 = vadd.f32 %v2720, %v2762
  %v2889 = vadd.f32 %v2721, %v2767
  %v2890 = vadd.f32 %v2722, %v2767
  %v2891 = vadd.f32 %v2723, %v2767
  %v2892 = vadd.f32 %v2724, %v2767
  %v2893 = vadd.f32 %v2725, %v2767
  %v2894 = vadd.f32 %v2726, %v2767
  %v2895 = vadd.f32 %v2727, %v2767
  %v2896 = vadd.f32 %v2728, %v2767
  %vm2897 = vcmp.ge.f32.partialorder %v2769, 0.0
  %vm2898 = vcmp.ge.f32.partialorder %v2770, 0.0
  %vm2899 = vcmp.ge.f32.partialorder %v2771, 0.0
  %vm2900 = vcmp.ge.f32.partialorder %v2772, 0.0
  %vm2901 = vcmp.ge.f32.partialorder %v2773, 0.0
  %vm2902 = vcmp.ge.f32.partialorder %v2774, 0.0
  %vm2903 = vcmp.ge.f32.partialorder %v2775, 0.0
  %vm2904 = vcmp.ge.f32.partialorder %v2776, 0.0
  %vm2905 = vcmp.ge.f32.partialorder %v2777, 0.0
  %vm2906 = vcmp.ge.f32.partialorder %v2778, 0.0
  %vm2907 = vcmp.ge.f32.partialorder %v2779, 0.0
  %vm2908 = vcmp.ge.f32.partialorder %v2780, 0.0
  %vm2909 = vcmp.ge.f32.partialorder %v2781, 0.0
  %vm2910 = vcmp.ge.f32.partialorder %v2782, 0.0
  %vm2911 = vcmp.ge.f32.partialorder %v2783, 0.0
  %vm2912 = vcmp.ge.f32.partialorder %v2784, 0.0
  %vm2913 = vcmp.ge.f32.partialorder %v2785, 0.0
  %vm2914 = vcmp.ge.f32.partialorder %v2786, 0.0
  %vm2915 = vcmp.ge.f32.partialorder %v2787, 0.0
  %vm2916 = vcmp.ge.f32.partialorder %v2788, 0.0
  %vm2917 = vcmp.ge.f32.partialorder %v2789, 0.0
  %vm2918 = vcmp.ge.f32.partialorder %v2790, 0.0
  %vm2919 = vcmp.ge.f32.partialorder %v2791, 0.0
  %vm2920 = vcmp.ge.f32.partialorder %v2792, 0.0
  %vm2921 = vcmp.ge.f32.partialorder %v2793, 0.0
  %vm2922 = vcmp.ge.f32.partialorder %v2794, 0.0
  %vm2923 = vcmp.ge.f32.partialorder %v2795, 0.0
  %vm2924 = vcmp.ge.f32.partialorder %v2796, 0.0
  %vm2925 = vcmp.ge.f32.partialorder %v2797, 0.0
  %vm2926 = vcmp.ge.f32.partialorder %v2798, 0.0
  %vm2927 = vcmp.ge.f32.partialorder %v2799, 0.0
  %vm2928 = vcmp.ge.f32.partialorder %v2800, 0.0
  %vm2929 = vcmp.ge.f32.partialorder %v2801, 0.0
  %vm2930 = vcmp.ge.f32.partialorder %v2802, 0.0
  %vm2931 = vcmp.ge.f32.partialorder %v2803, 0.0
  %vm2932 = vcmp.ge.f32.partialorder %v2804, 0.0
  %vm2933 = vcmp.ge.f32.partialorder %v2805, 0.0
  %vm2934 = vcmp.ge.f32.partialorder %v2806, 0.0
  %vm2935 = vcmp.ge.f32.partialorder %v2807, 0.0
  %vm2936 = vcmp.ge.f32.partialorder %v2808, 0.0
  %vm2937 = vcmp.ge.f32.partialorder %v2809, 0.0
  %vm2938 = vcmp.ge.f32.partialorder %v2810, 0.0
  %vm2939 = vcmp.ge.f32.partialorder %v2811, 0.0
  %vm2940 = vcmp.ge.f32.partialorder %v2812, 0.0
  %vm2941 = vcmp.ge.f32.partialorder %v2813, 0.0
  %vm2942 = vcmp.ge.f32.partialorder %v2814, 0.0
  %vm2943 = vcmp.ge.f32.partialorder %v2815, 0.0
  %vm2944 = vcmp.ge.f32.partialorder %v2816, 0.0
  %vm2945 = vcmp.ge.f32.partialorder %v2817, 0.0
  %vm2946 = vcmp.ge.f32.partialorder %v2818, 0.0
  %vm2947 = vcmp.ge.f32.partialorder %v2819, 0.0
  %vm2948 = vcmp.ge.f32.partialorder %v2820, 0.0
  %vm2949 = vcmp.ge.f32.partialorder %v2821, 0.0
  %vm2950 = vcmp.ge.f32.partialorder %v2822, 0.0
  %vm2951 = vcmp.ge.f32.partialorder %v2823, 0.0
  %vm2952 = vcmp.ge.f32.partialorder %v2824, 0.0
  %vm2953 = vcmp.ge.f32.partialorder %v2825, 0.0
  %vm2954 = vcmp.ge.f32.partialorder %v2826, 0.0
  %vm2955 = vcmp.ge.f32.partialorder %v2827, 0.0
  %vm2956 = vcmp.ge.f32.partialorder %v2828, 0.0
  %vm2957 = vcmp.ge.f32.partialorder %v2829, 0.0
  %vm2958 = vcmp.ge.f32.partialorder %v2830, 0.0
  %vm2959 = vcmp.ge.f32.partialorder %v2831, 0.0
  %vm2960 = vcmp.ge.f32.partialorder %v2832, 0.0
  %vm2961 = vcmp.ge.f32.partialorder %v2833, 0.0
  %vm2962 = vcmp.ge.f32.partialorder %v2834, 0.0
  %vm2963 = vcmp.ge.f32.partialorder %v2835, 0.0
  %vm2964 = vcmp.ge.f32.partialorder %v2836, 0.0
  %vm2965 = vcmp.ge.f32.partialorder %v2837, 0.0
  %vm2966 = vcmp.ge.f32.partialorder %v2838, 0.0
  %vm2967 = vcmp.ge.f32.partialorder %v2839, 0.0
  %vm2968 = vcmp.ge.f32.partialorder %v2840, 0.0
  %vm2969 = vcmp.ge.f32.partialorder %v2841, 0.0
  %vm2970 = vcmp.ge.f32.partialorder %v2842, 0.0
  %vm2971 = vcmp.ge.f32.partialorder %v2843, 0.0
  %vm2972 = vcmp.ge.f32.partialorder %v2844, 0.0
  %vm2973 = vcmp.ge.f32.partialorder %v2845, 0.0
  %vm2974 = vcmp.ge.f32.partialorder %v2846, 0.0
  %vm2975 = vcmp.ge.f32.partialorder %v2847, 0.0
  %vm2976 = vcmp.ge.f32.partialorder %v2848, 0.0
  %vm2977 = vcmp.ge.f32.partialorder %v2849, 0.0
  %vm2978 = vcmp.ge.f32.partialorder %v2850, 0.0
  %vm2979 = vcmp.ge.f32.partialorder %v2851, 0.0
  %vm2980 = vcmp.ge.f32.partialorder %v2852, 0.0
  %vm2981 = vcmp.ge.f32.partialorder %v2853, 0.0
  %vm2982 = vcmp.ge.f32.partialorder %v2854, 0.0
  %vm2983 = vcmp.ge.f32.partialorder %v2855, 0.0
  %vm2984 = vcmp.ge.f32.partialorder %v2856, 0.0
  %vm2985 = vcmp.ge.f32.partialorder %v2857, 0.0
  %vm2986 = vcmp.ge.f32.partialorder %v2858, 0.0
  %vm2987 = vcmp.ge.f32.partialorder %v2859, 0.0
  %vm2988 = vcmp.ge.f32.partialorder %v2860, 0.0
  %vm2989 = vcmp.ge.f32.partialorder %v2861, 0.0
  %vm2990 = vcmp.ge.f32.partialorder %v2862, 0.0
  %vm2991 = vcmp.ge.f32.partialorder %v2863, 0.0
  %vm2992 = vcmp.ge.f32.partialorder %v2864, 0.0
  %vm2993 = vcmp.ge.f32.partialorder %v2865, 0.0
  %vm2994 = vcmp.ge.f32.partialorder %v2866, 0.0
  %vm2995 = vcmp.ge.f32.partialorder %v2867, 0.0
  %vm2996 = vcmp.ge.f32.partialorder %v2868, 0.0
  %vm2997 = vcmp.ge.f32.partialorder %v2869, 0.0
  %vm2998 = vcmp.ge.f32.partialorder %v2870, 0.0
  %vm2999 = vcmp.ge.f32.partialorder %v2871, 0.0
  %vm3000 = vcmp.ge.f32.partialorder %v2872, 0.0
  %vm3001 = vcmp.ge.f32.partialorder %v2873, 0.0
  %vm3002 = vcmp.ge.f32.partialorder %v2874, 0.0
  %vm3003 = vcmp.ge.f32.partialorder %v2875, 0.0
  %vm3004 = vcmp.ge.f32.partialorder %v2876, 0.0
  %vm3005 = vcmp.ge.f32.partialorder %v2877, 0.0
  %vm3006 = vcmp.ge.f32.partialorder %v2878, 0.0
  %vm3007 = vcmp.ge.f32.partialorder %v2879, 0.0
  %vm3008 = vcmp.ge.f32.partialorder %v2880, 0.0
  %vm3009 = vcmp.ge.f32.partialorder %v2881, 0.0
  %vm3010 = vcmp.ge.f32.partialorder %v2882, 0.0
  %vm3011 = vcmp.ge.f32.partialorder %v2883, 0.0
  %vm3012 = vcmp.ge.f32.partialorder %v2884, 0.0
  %vm3013 = vcmp.ge.f32.partialorder %v2885, 0.0
  %vm3014 = vcmp.ge.f32.partialorder %v2886, 0.0
  %vm3015 = vcmp.ge.f32.partialorder %v2887, 0.0
  %vm3016 = vcmp.ge.f32.partialorder %v2888, 0.0
  %vm3017 = vcmp.ge.f32.partialorder %v2889, 0.0
  %vm3018 = vcmp.ge.f32.partialorder %v2890, 0.0
  %vm3019 = vcmp.ge.f32.partialorder %v2891, 0.0
  %vm3020 = vcmp.ge.f32.partialorder %v2892, 0.0
  %vm3021 = vcmp.ge.f32.partialorder %v2893, 0.0
  %vm3022 = vcmp.ge.f32.partialorder %v2894, 0.0
  %vm3023 = vcmp.ge.f32.partialorder %v2895, 0.0
  %vm3024 = vcmp.ge.f32.partialorder %v2896, 0.0
  %v3025 = vld [vmem:[%s6] sm:$0xff]
  %v3026 = vld [vmem:[%s6 + $0x8] sm:$0xff]
  %v3027 = vld [vmem:[%s6 + $0x10] sm:$0xff]
  %v3028 = vld [vmem:[%s6 + $0x18] sm:$0xff]
  %v3029 = vld [vmem:[%s6 + $0x20] sm:$0xff]
  %v3030 = vld [vmem:[%s6 + $0x28] sm:$0xff]
  %v3031 = vld [vmem:[%s6 + $0x30] sm:$0xff]
  %v3032 = vld [vmem:[%s6 + $0x38] sm:$0x3f]
  %3034 = vset.pattern.permute.xlu0 0
  %3035 = vperm.xlu0 %3034, %v3025
  %v3036 = vpop.permute.xlu0 %3035
  %3039 = vset.pattern.permute.xlu0 0
  %3040 = vperm.xlu0 %3039, %v3026
  %v3041 = vpop.permute.xlu0 %3040
  %3044 = vset.pattern.permute.xlu0 0
  %3045 = vperm.xlu0 %3044, %v3027
  %v3046 = vpop.permute.xlu0 %3045
  %3049 = vset.pattern.permute.xlu0 0
  %3050 = vperm.xlu0 %3049, %v3028
  %v3051 = vpop.permute.xlu0 %3050
  %3054 = vset.pattern.permute.xlu0 0
  %3055 = vperm.xlu0 %3054, %v3029
  %v3056 = vpop.permute.xlu0 %3055
  %3059 = vset.pattern.permute.xlu0 0
  %3060 = vperm.xlu0 %3059, %v3030
  %v3061 = vpop.permute.xlu0 %3060
  %3064 = vset.pattern.permute.xlu0 0
  %3065 = vperm.xlu0 %3064, %v3031
  %v3066 = vpop.permute.xlu0 %3065
  %3069 = vset.pattern.permute.xlu0 0
  %3070 = vperm.xlu0 %3069, %v3032
  %v3071 = vpop.permute.xlu0 %3070
  %v3073 = vmul.f32 %v3036, %v2769
  %v3074 = vmul.f32 %v3036, %v2770
  %v3075 = vmul.f32 %v3036, %v2771
  %v3076 = vmul.f32 %v3036, %v2772
  %v3077 = vmul.f32 %v3036, %v2773
  %v3078 = vmul.f32 %v3036, %v2774
  %v3079 = vmul.f32 %v3036, %v2775
  %v3080 = vmul.f32 %v3036, %v2776
  %v3081 = vmul.f32 %v3041, %v2777
  %v3082 = vmul.f32 %v3041, %v2778
  %v3083 = vmul.f32 %v3041, %v2779
  %v3084 = vmul.f32 %v3041, %v2780
  %v3085 = vmul.f32 %v3041, %v2781
  %v3086 = vmul.f32 %v3041, %v2782
  %v3087 = vmul.f32 %v3041, %v2783
  %v3088 = vmul.f32 %v3041, %v2784
  %v3089 = vmul.f32 %v3046, %v2785
  %v3090 = vmul.f32 %v3046, %v2786
  %v3091 = vmul.f32 %v3046, %v2787
  %v3092 = vmul.f32 %v3046, %v2788
  %v3093 = vmul.f32 %v3046, %v2789
  %v3094 = vmul.f32 %v3046, %v2790
  %v3095 = vmul.f32 %v3046, %v2791
  %v3096 = vmul.f32 %v3046, %v2792
  %v3097 = vmul.f32 %v3051, %v2793
  %v3098 = vmul.f32 %v3051, %v2794
  %v3099 = vmul.f32 %v3051, %v2795
  %v3100 = vmul.f32 %v3051, %v2796
  %v3101 = vmul.f32 %v3051, %v2797
  %v3102 = vmul.f32 %v3051, %v2798
  %v3103 = vmul.f32 %v3051, %v2799
  %v3104 = vmul.f32 %v3051, %v2800
  %v3105 = vmul.f32 %v3056, %v2801
  %v3106 = vmul.f32 %v3056, %v2802
  %v3107 = vmul.f32 %v3056, %v2803
  %v3108 = vmul.f32 %v3056, %v2804
  %v3109 = vmul.f32 %v3056, %v2805
  %v3110 = vmul.f32 %v3056, %v2806
  %v3111 = vmul.f32 %v3056, %v2807
  %v3112 = vmul.f32 %v3056, %v2808
  %v3113 = vmul.f32 %v3061, %v2809
  %v3114 = vmul.f32 %v3061, %v2810
  %v3115 = vmul.f32 %v3061, %v2811
  %v3116 = vmul.f32 %v3061, %v2812
  %v3117 = vmul.f32 %v3061, %v2813
  %v3118 = vmul.f32 %v3061, %v2814
  %v3119 = vmul.f32 %v3061, %v2815
  %v3120 = vmul.f32 %v3061, %v2816
  %v3121 = vmul.f32 %v3066, %v2817
  %v3122 = vmul.f32 %v3066, %v2818
  %v3123 = vmul.f32 %v3066, %v2819
  %v3124 = vmul.f32 %v3066, %v2820
  %v3125 = vmul.f32 %v3066, %v2821
  %v3126 = vmul.f32 %v3066, %v2822
  %v3127 = vmul.f32 %v3066, %v2823
  %v3128 = vmul.f32 %v3066, %v2824
  %v3129 = vmul.f32 %v3071, %v2825
  %v3130 = vmul.f32 %v3071, %v2826
  %v3131 = vmul.f32 %v3071, %v2827
  %v3132 = vmul.f32 %v3071, %v2828
  %v3133 = vmul.f32 %v3071, %v2829
  %v3134 = vmul.f32 %v3071, %v2830
  %v3135 = vmul.f32 %v3071, %v2831
  %v3136 = vmul.f32 %v3071, %v2832
  %v3137 = vmul.f32 %v3036, %v2833
  %v3138 = vmul.f32 %v3036, %v2834
  %v3139 = vmul.f32 %v3036, %v2835
  %v3140 = vmul.f32 %v3036, %v2836
  %v3141 = vmul.f32 %v3036, %v2837
  %v3142 = vmul.f32 %v3036, %v2838
  %v3143 = vmul.f32 %v3036, %v2839
  %v3144 = vmul.f32 %v3036, %v2840
  %v3145 = vmul.f32 %v3041, %v2841
  %v3146 = vmul.f32 %v3041, %v2842
  %v3147 = vmul.f32 %v3041, %v2843
  %v3148 = vmul.f32 %v3041, %v2844
  %v3149 = vmul.f32 %v3041, %v2845
  %v3150 = vmul.f32 %v3041, %v2846
  %v3151 = vmul.f32 %v3041, %v2847
  %v3152 = vmul.f32 %v3041, %v2848
  %v3153 = vmul.f32 %v3046, %v2849
  %v3154 = vmul.f32 %v3046, %v2850
  %v3155 = vmul.f32 %v3046, %v2851
  %v3156 = vmul.f32 %v3046, %v2852
  %v3157 = vmul.f32 %v3046, %v2853
  %v3158 = vmul.f32 %v3046, %v2854
  %v3159 = vmul.f32 %v3046, %v2855
  %v3160 = vmul.f32 %v3046, %v2856
  %v3161 = vmul.f32 %v3051, %v2857
  %v3162 = vmul.f32 %v3051, %v2858
  %v3163 = vmul.f32 %v3051, %v2859
  %v3164 = vmul.f32 %v3051, %v2860
  %v3165 = vmul.f32 %v3051, %v2861
  %v3166 = vmul.f32 %v3051, %v2862
  %v3167 = vmul.f32 %v3051, %v2863
  %v3168 = vmul.f32 %v3051, %v2864
  %v3169 = vmul.f32 %v3056, %v2865
  %v3170 = vmul.f32 %v3056, %v2866
  %v3171 = vmul.f32 %v3056, %v2867
  %v3172 = vmul.f32 %v3056, %v2868
  %v3173 = vmul.f32 %v3056, %v2869
  %v3174 = vmul.f32 %v3056, %v2870
  %v3175 = vmul.f32 %v3056, %v2871
  %v3176 = vmul.f32 %v3056, %v2872
  %v3177 = vmul.f32 %v3061, %v2873
  %v3178 = vmul.f32 %v3061, %v2874
  %v3179 = vmul.f32 %v3061, %v2875
  %v3180 = vmul.f32 %v3061, %v2876
  %v3181 = vmul.f32 %v3061, %v2877
  %v3182 = vmul.f32 %v3061, %v2878
  %v3183 = vmul.f32 %v3061, %v2879
  %v3184 = vmul.f32 %v3061, %v2880
  %v3185 = vmul.f32 %v3066, %v2881
  %v3186 = vmul.f32 %v3066, %v2882
  %v3187 = vmul.f32 %v3066, %v2883
  %v3188 = vmul.f32 %v3066, %v2884
  %v3189 = vmul.f32 %v3066, %v2885
  %v3190 = vmul.f32 %v3066, %v2886
  %v3191 = vmul.f32 %v3066, %v2887
  %v3192 = vmul.f32 %v3066, %v2888
  %v3193 = vmul.f32 %v3071, %v2889
  %v3194 = vmul.f32 %v3071, %v2890
  %v3195 = vmul.f32 %v3071, %v2891
  %v3196 = vmul.f32 %v3071, %v2892
  %v3197 = vmul.f32 %v3071, %v2893
  %v3198 = vmul.f32 %v3071, %v2894
  %v3199 = vmul.f32 %v3071, %v2895
  %v3200 = vmul.f32 %v3071, %v2896
  %v3201 = vsel %vm2897, %v2769, %v3073
  %v3202 = vsel %vm2898, %v2770, %v3074
  %v3203 = vsel %vm2899, %v2771, %v3075
  %v3204 = vsel %vm2900, %v2772, %v3076
  %v3205 = vsel %vm2901, %v2773, %v3077
  %v3206 = vsel %vm2902, %v2774, %v3078
  %v3207 = vsel %vm2903, %v2775, %v3079
  %v3208 = vsel %vm2904, %v2776, %v3080
  %v3209 = vsel %vm2905, %v2777, %v3081
  %v3210 = vsel %vm2906, %v2778, %v3082
  %v3211 = vsel %vm2907, %v2779, %v3083
  %v3212 = vsel %vm2908, %v2780, %v3084
  %v3213 = vsel %vm2909, %v2781, %v3085
  %v3214 = vsel %vm2910, %v2782, %v3086
  %v3215 = vsel %vm2911, %v2783, %v3087
  %v3216 = vsel %vm2912, %v2784, %v3088
  %v3217 = vsel %vm2913, %v2785, %v3089
  %v3218 = vsel %vm2914, %v2786, %v3090
  %v3219 = vsel %vm2915, %v2787, %v3091
  %v3220 = vsel %vm2916, %v2788, %v3092
  %v3221 = vsel %vm2917, %v2789, %v3093
  %v3222 = vsel %vm2918, %v2790, %v3094
  %v3223 = vsel %vm2919, %v2791, %v3095
  %v3224 = vsel %vm2920, %v2792, %v3096
  %v3225 = vsel %vm2921, %v2793, %v3097
  %v3226 = vsel %vm2922, %v2794, %v3098
  %v3227 = vsel %vm2923, %v2795, %v3099
  %v3228 = vsel %vm2924, %v2796, %v3100
  %v3229 = vsel %vm2925, %v2797, %v3101
  %v3230 = vsel %vm2926, %v2798, %v3102
  %v3231 = vsel %vm2927, %v2799, %v3103
  %v3232 = vsel %vm2928, %v2800, %v3104
  %v3233 = vsel %vm2929, %v2801, %v3105
  %v3234 = vsel %vm2930, %v2802, %v3106
  %v3235 = vsel %vm2931, %v2803, %v3107
  %v3236 = vsel %vm2932, %v2804, %v3108
  %v3237 = vsel %vm2933, %v2805, %v3109
  %v3238 = vsel %vm2934, %v2806, %v3110
  %v3239 = vsel %vm2935, %v2807, %v3111
  %v3240 = vsel %vm2936, %v2808, %v3112
  %v3241 = vsel %vm2937, %v2809, %v3113
  %v3242 = vsel %vm2938, %v2810, %v3114
  %v3243 = vsel %vm2939, %v2811, %v3115
  %v3244 = vsel %vm2940, %v2812, %v3116
  %v3245 = vsel %vm2941, %v2813, %v3117
  %v3246 = vsel %vm2942, %v2814, %v3118
  %v3247 = vsel %vm2943, %v2815, %v3119
  %v3248 = vsel %vm2944, %v2816, %v3120
  %v3249 = vsel %vm2945, %v2817, %v3121
  %v3250 = vsel %vm2946, %v2818, %v3122
  %v3251 = vsel %vm2947, %v2819, %v3123
  %v3252 = vsel %vm2948, %v2820, %v3124
  %v3253 = vsel %vm2949, %v2821, %v3125
  %v3254 = vsel %vm2950, %v2822, %v3126
  %v3255 = vsel %vm2951, %v2823, %v3127
  %v3256 = vsel %vm2952, %v2824, %v3128
  %v3257 = vsel %vm2953, %v2825, %v3129
  %v3258 = vsel %vm2954, %v2826, %v3130
  %v3259 = vsel %vm2955, %v2827, %v3131
  %v3260 = vsel %vm2956, %v2828, %v3132
  %v3261 = vsel %vm2957, %v2829, %v3133
  %v3262 = vsel %vm2958, %v2830, %v3134
  %v3263 = vsel %vm2959, %v2831, %v3135
  %v3264 = vsel %vm2960, %v2832, %v3136
  %v3265 = vsel %vm2961, %v2833, %v3137
  %v3266 = vsel %vm2962, %v2834, %v3138
  %v3267 = vsel %vm2963, %v2835, %v3139
  %v3268 = vsel %vm2964, %v2836, %v3140
  %v3269 = vsel %vm2965, %v2837, %v3141
  %v3270 = vsel %vm2966, %v2838, %v3142
  %v3271 = vsel %vm2967, %v2839, %v3143
  %v3272 = vsel %vm2968, %v2840, %v3144
  %v3273 = vsel %vm2969, %v2841, %v3145
  %v3274 = vsel %vm2970, %v2842, %v3146
  %v3275 = vsel %vm2971, %v2843, %v3147
  %v3276 = vsel %vm2972, %v2844, %v3148
  %v3277 = vsel %vm2973, %v2845, %v3149
  %v3278 = vsel %vm2974, %v2846, %v3150
  %v3279 = vsel %vm2975, %v2847, %v3151
  %v3280 = vsel %vm2976, %v2848, %v3152
  %v3281 = vsel %vm2977, %v2849, %v3153
  %v3282 = vsel %vm2978, %v2850, %v3154
  %v3283 = vsel %vm2979, %v2851, %v3155
  %v3284 = vsel %vm2980, %v2852, %v3156
  %v3285 = vsel %vm2981, %v2853, %v3157
  %v3286 = vsel %vm2982, %v2854, %v3158
  %v3287 = vsel %vm2983, %v2855, %v3159
  %v3288 = vsel %vm2984, %v2856, %v3160
  %v3289 = vsel %vm2985, %v2857, %v3161
  %v3290 = vsel %vm2986, %v2858, %v3162
  %v3291 = vsel %vm2987, %v2859, %v3163
  %v3292 = vsel %vm2988, %v2860, %v3164
  %v3293 = vsel %vm2989, %v2861, %v3165
  %v3294 = vsel %vm2990, %v2862, %v3166
  %v3295 = vsel %vm2991, %v2863, %v3167
  %v3296 = vsel %vm2992, %v2864, %v3168
  %v3297 = vsel %vm2993, %v2865, %v3169
  %v3298 = vsel %vm2994, %v2866, %v3170
  %v3299 = vsel %vm2995, %v2867, %v3171
  %v3300 = vsel %vm2996, %v2868, %v3172
  %v3301 = vsel %vm2997, %v2869, %v3173
  %v3302 = vsel %vm2998, %v2870, %v3174
  %v3303 = vsel %vm2999, %v2871, %v3175
  %v3304 = vsel %vm3000, %v2872, %v3176
  %v3305 = vsel %vm3001, %v2873, %v3177
  %v3306 = vsel %vm3002, %v2874, %v3178
  %v3307 = vsel %vm3003, %v2875, %v3179
  %v3308 = vsel %vm3004, %v2876, %v3180
  %v3309 = vsel %vm3005, %v2877, %v3181
  %v3310 = vsel %vm3006, %v2878, %v3182
  %v3311 = vsel %vm3007, %v2879, %v3183
  %v3312 = vsel %vm3008, %v2880, %v3184
  %v3313 = vsel %vm3009, %v2881, %v3185
  %v3314 = vsel %vm3010, %v2882, %v3186
  %v3315 = vsel %vm3011, %v2883, %v3187
  %v3316 = vsel %vm3012, %v2884, %v3188
  %v3317 = vsel %vm3013, %v2885, %v3189
  %v3318 = vsel %vm3014, %v2886, %v3190
  %v3319 = vsel %vm3015, %v2887, %v3191
  %v3320 = vsel %vm3016, %v2888, %v3192
  %v3321 = vsel %vm3017, %v2889, %v3193
  %v3322 = vsel %vm3018, %v2890, %v3194
  %v3323 = vsel %vm3019, %v2891, %v3195
  %v3324 = vsel %vm3020, %v2892, %v3196
  %v3325 = vsel %vm3021, %v2893, %v3197
  %v3326 = vsel %vm3022, %v2894, %v3198
  %v3327 = vsel %vm3023, %v2895, %v3199
  %v3328 = vsel %vm3024, %v2896, %v3200
  %3329 = vst [vmem:[%s7] sm:$0xff] %v3201
  %3330 = vst [vmem:[%s7 + $0x8] sm:$0xff] %v3202
  %3331 = vst [vmem:[%s7 + $0x10] sm:$0xff] %v3203
  %3332 = vst [vmem:[%s7 + $0x18] sm:$0xff] %v3204
  %3333 = vst [vmem:[%s7 + $0x20] sm:$0xff] %v3205
  %3334 = vst [vmem:[%s7 + $0x28] sm:$0xff] %v3206
  %3335 = vst [vmem:[%s7 + $0x30] sm:$0xff] %v3207
  %3336 = vst [vmem:[%s7 + $0x38] sm:$0xff] %v3208
  %3337 = vst [vmem:[%s7 + $0x40] sm:$0xff] %v3209
  %3338 = vst [vmem:[%s7 + $0x48] sm:$0xff] %v3210
  %3339 = vst [vmem:[%s7 + $0x50] sm:$0xff] %v3211
  %3340 = vst [vmem:[%s7 + $0x58] sm:$0xff] %v3212
  %3341 = vst [vmem:[%s7 + $0x60] sm:$0xff] %v3213
  %3342 = vst [vmem:[%s7 + $0x68] sm:$0xff] %v3214
  %3343 = vst [vmem:[%s7 + $0x70] sm:$0xff] %v3215
  %3344 = vst [vmem:[%s7 + $0x78] sm:$0xff] %v3216
  %3345 = vst [vmem:[%s7 + $0x80] sm:$0xff] %v3217
  %3346 = vst [vmem:[%s7 + $0x88] sm:$0xff] %v3218
  %3347 = vst [vmem:[%s7 + $0x90] sm:$0xff] %v3219
  %3348 = vst [vmem:[%s7 + $0x98] sm:$0xff] %v3220
  %3349 = vst [vmem:[%s7 + $0xa0] sm:$0xff] %v3221
  %3350 = vst [vmem:[%s7 + $0xa8] sm:$0xff] %v3222
  %3351 = vst [vmem:[%s7 + $0xb0] sm:$0xff] %v3223
  %3352 = vst [vmem:[%s7 + $0xb8] sm:$0xff] %v3224
  %3353 = vst [vmem:[%s7 + $0xc0] sm:$0xff] %v3225
  %3354 = vst [vmem:[%s7 + $0xc8] sm:$0xff] %v3226
  %3355 = vst [vmem:[%s7 + $0xd0] sm:$0xff] %v3227
  %3356 = vst [vmem:[%s7 + $0xd8] sm:$0xff] %v3228
  %3357 = vst [vmem:[%s7 + $0xe0] sm:$0xff] %v3229
  %3358 = vst [vmem:[%s7 + $0xe8] sm:$0xff] %v3230
  %3359 = vst [vmem:[%s7 + $0xf0] sm:$0xff] %v3231
  %3360 = vst [vmem:[%s7 + $0xf8] sm:$0xff] %v3232
  %3361 = vst [vmem:[%s7 + $0x100] sm:$0xff] %v3233
  %3362 = vst [vmem:[%s7 + $0x108] sm:$0xff] %v3234
  %3363 = vst [vmem:[%s7 + $0x110] sm:$0xff] %v3235
  %3364 = vst [vmem:[%s7 + $0x118] sm:$0xff] %v3236
  %3365 = vst [vmem:[%s7 + $0x120] sm:$0xff] %v3237
  %3366 = vst [vmem:[%s7 + $0x128] sm:$0xff] %v3238
  %3367 = vst [vmem:[%s7 + $0x130] sm:$0xff] %v3239
  %3368 = vst [vmem:[%s7 + $0x138] sm:$0xff] %v3240
  %3369 = vst [vmem:[%s7 + $0x140] sm:$0xff] %v3241
  %3370 = vst [vmem:[%s7 + $0x148] sm:$0xff] %v3242
  %3371 = vst [vmem:[%s7 + $0x150] sm:$0xff] %v3243
  %3372 = vst [vmem:[%s7 + $0x158] sm:$0xff] %v3244
  %3373 = vst [vmem:[%s7 + $0x160] sm:$0xff] %v3245
  %3374 = vst [vmem:[%s7 + $0x168] sm:$0xff] %v3246
  %3375 = vst [vmem:[%s7 + $0x170] sm:$0xff] %v3247
  %3376 = vst [vmem:[%s7 + $0x178] sm:$0xff] %v3248
  %3377 = vst [vmem:[%s7 + $0x180] sm:$0xff] %v3249
  %3378 = vst [vmem:[%s7 + $0x188] sm:$0xff] %v3250
  %3379 = vst [vmem:[%s7 + $0x190] sm:$0xff] %v3251
  %3380 = vst [vmem:[%s7 + $0x198] sm:$0xff] %v3252
  %3381 = vst [vmem:[%s7 + $0x1a0] sm:$0xff] %v3253
  %3382 = vst [vmem:[%s7 + $0x1a8] sm:$0xff] %v3254
  %3383 = vst [vmem:[%s7 + $0x1b0] sm:$0xff] %v3255
  %3384 = vst [vmem:[%s7 + $0x1b8] sm:$0xff] %v3256
  %3385 = vst [vmem:[%s7 + $0x1c0] sm:$0x3f] %v3257
  %3386 = vst [vmem:[%s7 + $0x1c8] sm:$0x3f] %v3258
  %3387 = vst [vmem:[%s7 + $0x1d0] sm:$0x3f] %v3259
  %3388 = vst [vmem:[%s7 + $0x1d8] sm:$0x3f] %v3260
  %3389 = vst [vmem:[%s7 + $0x1e0] sm:$0x3f] %v3261
  %3390 = vst [vmem:[%s7 + $0x1e8] sm:$0x3f] %v3262
  %3391 = vst [vmem:[%s7 + $0x1f0] sm:$0x3f] %v3263
  %3392 = vst [vmem:[%s7 + $0x1f8] sm:$0x3f] %v3264
  %3393 = vst [vmem:[%s7 + $0x200] sm:$0xff] %v3265
  %3394 = vst [vmem:[%s7 + $0x208] sm:$0xff] %v3266
  %3395 = vst [vmem:[%s7 + $0x210] sm:$0xff] %v3267
  %3396 = vst [vmem:[%s7 + $0x218] sm:$0xff] %v3268
  %3397 = vst [vmem:[%s7 + $0x220] sm:$0xff] %v3269
  %3398 = vst [vmem:[%s7 + $0x228] sm:$0xff] %v3270
  %3399 = vst [vmem:[%s7 + $0x230] sm:$0xff] %v3271
  %3400 = vst [vmem:[%s7 + $0x238] sm:$0xff] %v3272
  %3401 = vst [vmem:[%s7 + $0x240] sm:$0xff] %v3273
  %3402 = vst [vmem:[%s7 + $0x248] sm:$0xff] %v3274
  %3403 = vst [vmem:[%s7 + $0x250] sm:$0xff] %v3275
  %3404 = vst [vmem:[%s7 + $0x258] sm:$0xff] %v3276
  %3405 = vst [vmem:[%s7 + $0x260] sm:$0xff] %v3277
  %3406 = vst [vmem:[%s7 + $0x268] sm:$0xff] %v3278
  %3407 = vst [vmem:[%s7 + $0x270] sm:$0xff] %v3279
  %3408 = vst [vmem:[%s7 + $0x278] sm:$0xff] %v3280
  %3409 = vst [vmem:[%s7 + $0x280] sm:$0xff] %v3281
  %3410 = vst [vmem:[%s7 + $0x288] sm:$0xff] %v3282
  %3411 = vst [vmem:[%s7 + $0x290] sm:$0xff] %v3283
  %3412 = vst [vmem:[%s7 + $0x298] sm:$0xff] %v3284
  %3413 = vst [vmem:[%s7 + $0x2a0] sm:$0xff] %v3285
  %3414 = vst [vmem:[%s7 + $0x2a8] sm:$0xff] %v3286
  %3415 = vst [vmem:[%s7 + $0x2b0] sm:$0xff] %v3287
  %3416 = vst [vmem:[%s7 + $0x2b8] sm:$0xff] %v3288
  %3417 = vst [vmem:[%s7 + $0x2c0] sm:$0xff] %v3289
  %3418 = vst [vmem:[%s7 + $0x2c8] sm:$0xff] %v3290
  %3419 = vst [vmem:[%s7 + $0x2d0] sm:$0xff] %v3291
  %3420 = vst [vmem:[%s7 + $0x2d8] sm:$0xff] %v3292
  %3421 = vst [vmem:[%s7 + $0x2e0] sm:$0xff] %v3293
  %3422 = vst [vmem:[%s7 + $0x2e8] sm:$0xff] %v3294
  %3423 = vst [vmem:[%s7 + $0x2f0] sm:$0xff] %v3295
  %3424 = vst [vmem:[%s7 + $0x2f8] sm:$0xff] %v3296
  %3425 = vst [vmem:[%s7 + $0x300] sm:$0xff] %v3297
  %3426 = vst [vmem:[%s7 + $0x308] sm:$0xff] %v3298
  %3427 = vst [vmem:[%s7 + $0x310] sm:$0xff] %v3299
  %3428 = vst [vmem:[%s7 + $0x318] sm:$0xff] %v3300
  %3429 = vst [vmem:[%s7 + $0x320] sm:$0xff] %v3301
  %3430 = vst [vmem:[%s7 + $0x328] sm:$0xff] %v3302
  %3431 = vst [vmem:[%s7 + $0x330] sm:$0xff] %v3303
  %3432 = vst [vmem:[%s7 + $0x338] sm:$0xff] %v3304
  %3433 = vst [vmem:[%s7 + $0x340] sm:$0xff] %v3305
  %3434 = vst [vmem:[%s7 + $0x348] sm:$0xff] %v3306
  %3435 = vst [vmem:[%s7 + $0x350] sm:$0xff] %v3307
  %3436 = vst [vmem:[%s7 + $0x358] sm:$0xff] %v3308
  %3437 = vst [vmem:[%s7 + $0x360] sm:$0xff] %v3309
  %3438 = vst [vmem:[%s7 + $0x368] sm:$0xff] %v3310
  %3439 = vst [vmem:[%s7 + $0x370] sm:$0xff] %v3311
  %3440 = vst [vmem:[%s7 + $0x378] sm:$0xff] %v3312
  %3441 = vst [vmem:[%s7 + $0x380] sm:$0xff] %v3313
  %3442 = vst [vmem:[%s7 + $0x388] sm:$0xff] %v3314
  %3443 = vst [vmem:[%s7 + $0x390] sm:$0xff] %v3315
  %3444 = vst [vmem:[%s7 + $0x398] sm:$0xff] %v3316
  %3445 = vst [vmem:[%s7 + $0x3a0] sm:$0xff] %v3317
  %3446 = vst [vmem:[%s7 + $0x3a8] sm:$0xff] %v3318
  %3447 = vst [vmem:[%s7 + $0x3b0] sm:$0xff] %v3319
  %3448 = vst [vmem:[%s7 + $0x3b8] sm:$0xff] %v3320
  %3449 = vst [vmem:[%s7 + $0x3c0] sm:$0x3f] %v3321
  %3450 = vst [vmem:[%s7 + $0x3c8] sm:$0x3f] %v3322
  %3451 = vst [vmem:[%s7 + $0x3d0] sm:$0x3f] %v3323
  %3452 = vst [vmem:[%s7 + $0x3d8] sm:$0x3f] %v3324
  %3453 = vst [vmem:[%s7 + $0x3e0] sm:$0x3f] %v3325
  %3454 = vst [vmem:[%s7 + $0x3e8] sm:$0x3f] %v3326
  %3455 = vst [vmem:[%s7 + $0x3f0] sm:$0x3f] %v3327
  %3456 = vst [vmem:[%s7 + $0x3f8] sm:$0x3f] %v3328
  // Predicated region
  $region30: #{downsampling_block1.1} parent=0 // pred_check
    _
  $region31: #{downsampling_block1.1} parent=0 // pred_check_branch
    %3458 = sbr.rel (0) target = $region33
  $region32: #{downsampling_block1.1} parent=0 // pred_region
    _
  $region33: #{downsampling_block1.1} parent=0 // pred_fallthru
    _
  // Predicated region
  $region34: #{downsampling_block1.1} parent=0 // pred_check
    _
  $region35: #{downsampling_block1.1} parent=0 // pred_check_branch
    %3460 = sbr.rel (0) target = $region37
  $region36: #{downsampling_block1.1} parent=0 // pred_region
    _
  $region37: #{downsampling_block1.1} parent=0 // pred_fallthru
    _

</llo_original>
